<compile_context>
chip_gen: v7x
topology: tpu7x:2x2x1
jax: 0.10.0
libtpu: 0.0.40
codegen_flags: <defaults>
</compile_context>

<pallas_src>
import functools

import numpy as np
import jax
import jax.numpy as jnp
from jax import lax
from jax.experimental import pallas as pl
from jax.experimental.pallas import tpu as pltpu


def _swap_leading(a):
    """(d0, d1, c) -> (d1, d0, c), minor (lane) dim kept in place."""
    if hasattr(pltpu, "einshape"):
        return pltpu.einshape("abc->bac", a)
    return jnp.transpose(a, (1, 0, 2))


def _st_gcn_kernel(x_ref, w1_ref, b1_ref, wt_ref, wr_ref, btr_ref, out_ref,
                   *, T, V, C_out, kt):
    """One row tile (whole T-sequences) of the fused ST-GCN block.

    x_ref  : (Mt, V*C_in)        bf16  row = n*T + t (tile local), lane = v*C_in + ci
    w1_ref : (V*C_in, V*C_out)   bf16  adjacency + 1x1 conv + BN1 folded
    b1_ref : (1, V*C_out)        f32
    wt_ref : (kt, C_out, C_out)  bf16  temporal-conv taps, BN2 scale folded
    wr_ref : (V*C_in, V*C_out)   bf16  block-diagonal residual 1x1 conv, BNr folded
    btr_ref: (1, V*C_out)        f32   temporal + residual biases (BN folded)
    out_ref: (Mt, V*C_out)             lane-dense output tile
    """
    Mt = x_ref.shape[0]
    VR = V * Mt
    pad = (kt - 1) // 2
    x = x_ref[...]

    # (1) graph conv (adjacency + 1x1 conv + BN1 folded) + ReLU, time-major.
    g = jnp.dot(x, w1_ref[...], preferred_element_type=jnp.float32)
    g = jnp.maximum(g + b1_ref[...], 0.0)                        # (Mt, V*C_out) f32

    # (2) single layout-aware transpose to node-major rows (row = v*Mt + m).
    g_nodes = _swap_leading(g.reshape(Mt, V, C_out)).reshape(VR, C_out)

    # (3) temporal conv: kt taps via XLU roll + (rows, 1) boundary-mask column,
    #     accumulated as kt small MXU dots into one f32 accumulator.
    acc = jnp.dot(g_nodes.astype(jnp.bfloat16), wt_ref[pad],
                  preferred_element_type=jnp.float32)            # center tap (d = 0)
    if kt > 1:
        t_idx = lax.broadcasted_iota(jnp.int32, (VR, 1), 0) % T
        for dt in range(kt):
            d = dt - pad
            if d == 0:
                continue
            tap = pltpu.roll(g_nodes, shift=(-d) % VR, axis=0)   # tap[j] = h[j + d]
            mask = (t_idx < T - d) if d > 0 else (t_idx >= -d)   # zero across seq edges
            tap = tap * mask.astype(jnp.float32)
            acc = acc + jnp.dot(tap.astype(jnp.bfloat16), wt_ref[dt],
                                preferred_element_type=jnp.float32)

    # (4) back to time-major (lane-dense), add residual (block-diagonal 1x1 conv
    #     on the SAME input tile) + folded biases, final ReLU, store.
    y = _swap_leading(acc.reshape(V, Mt, C_out)).reshape(Mt, V * C_out)
    r = jnp.dot(x, wr_ref[...], preferred_element_type=jnp.float32)
    out_ref[...] = jnp.maximum(y + r + btr_ref[...], 0.0).astype(out_ref.dtype)


def _bn_scale_shift(bn, eps=1e-5):
    gamma, beta, rmean, rvar = bn
    scale = gamma / jnp.sqrt(rvar + eps)
    shift = beta - rmean * scale
    return scale, shift


def _pick_m_tile(N, T, target_rows=512):
    """Largest whole-sequence row tile dividing N*T, sublane aligned, and
    <= target_rows so the first matmul sees a healthy row count while the
    working set stays well inside v7x's 64 MiB VMEM."""
    M = N * T
    best = None
    for k in range(1, N + 1):
        if N % k:
            continue
        mt = k * T
        if mt > max(target_rows, T):
            break
        if mt % 8 == 0 or mt == M:
            best = mt
    return best if best is not None else M


def st_gcn_forward(x, A, params, kernel_size, *, m_tile=None, out_dtype=jnp.float32):
    """x: (N, C_in, T, V) f32, A: (K, V, V) f32 -> ((N, C_out, T, V), A)."""
    kt, K = kernel_size
    N, C_in, T, V = x.shape
    C_out = params["bt"].shape[0]
    VCi, VCo = V * C_in, V * C_out
    M = N * T

    if m_tile is None:
        m_tile = _pick_m_tile(N, T)
    assert M % m_tile == 0 and m_tile % T == 0, "row tiles must hold whole sequences"
    assert m_tile % 8 == 0 or m_tile == M, "row tile must be sublane (8) aligned"

    # ---------------- parameter folding (tiny, XLA-side glue) ----------------
    bn1s, bn1b = _bn_scale_shift(params["bn1"])
    bn2s, bn2b = _bn_scale_shift(params["bn2"])
    bnrs, bnrb = _bn_scale_shift(params["bnr"])

    # gcn: adjacency A + 1x1 conv weight + BN1 folded into one dense matmul.
    wg = params["wg_conv"][:, :, 0, 0].reshape(K, C_out, C_in)               # [k, co, ci]
    weff = jnp.einsum("kvw,koc->vcwo", A, wg).reshape(VCi, VCo)
    beff = jnp.einsum("kw,ko->wo", A.sum(axis=1),
                      params["bg"].reshape(K, C_out)).reshape(1, VCo)
    bn1s_t = jnp.tile(bn1s, V)[None, :]                                      # col w*C_out+co -> bn1s[co]
    bn1b_t = jnp.tile(bn1b, V)[None, :]
    w1 = (weff * bn1s_t).astype(jnp.bfloat16)                                # (VCi, VCo)
    b1 = beff * bn1s_t + bn1b_t                                              # (1, VCo) f32

    # temporal conv: kt small per-node taps (ci, co), BN2 scale folded into columns.
    wt = jnp.transpose(params["wt_conv"][:, :, :, 0], (2, 1, 0))             # [dt, ci, co]
    wt_f = (wt * bn2s[None, None, :]).astype(jnp.bfloat16)                   # (kt, C_out, C_out)

    # residual 1x1 conv: block-diagonal over nodes so it runs on the SAME
    # time-major input tile as the graph conv (no duplicate node-major input).
    wr = params["wr_conv"][:, :, 0, 0].T * bnrs[None, :]                     # (C_in, C_out)
    wr_block = jnp.kron(jnp.eye(V, dtype=wr.dtype), wr).astype(jnp.bfloat16) # (VCi, VCo)

    # temporal-conv (BN2) + residual (BNr) biases, tiled over nodes.
    b2 = params["bt"] * bn2s + bn2b
    br = params["br"] * bnrs + bnrb
    btr = jnp.tile(b2 + br, V)[None, :]                                      # (1, VCo) f32

    # activation: batch folded into rows, one lane-dense layout, bf16 in HBM.
    x_gcn = jnp.transpose(x, (0, 2, 3, 1)).reshape(M, VCi).astype(jnp.bfloat16)

    kernel = functools.partial(_st_gcn_kernel, T=T, V=V, C_out=C_out, kt=kt)
    grid = (M // m_tile,)

    # VMEM budget: double-buffered x/out tiles + resident folded weights +
    # in-kernel temporaries, clamped under v7x's 64 MiB physical VMEM.
    bytes_w = 2 * (2 * VCi * VCo * 2 + kt * C_out * C_out * 2 + 2 * VCo * 4)
    bytes_io = 2 * (m_tile * VCi * 2) + 2 * (m_tile * VCo * 4)
    bytes_tmp = 12 * m_tile * VCo * 4
    vmem_limit = int(min(max(2 * (bytes_w + bytes_io + bytes_tmp), 8 << 20), 48 << 20))

    out_flat = pl.pallas_call(
        kernel,
        out_shape=jax.ShapeDtypeStruct((M, VCo), out_dtype),
        grid=grid,
        in_specs=[
            pl.BlockSpec((m_tile, VCi), lambda i: (i, 0)),           # x tile (streamed)
            pl.BlockSpec((VCi, VCo), lambda i: (0, 0)),              # w1 (VMEM resident)
            pl.BlockSpec((1, VCo), lambda i: (0, 0)),                # b1
            pl.BlockSpec((kt, C_out, C_out), lambda i: (0, 0, 0)),   # temporal taps
            pl.BlockSpec((VCi, VCo), lambda i: (0, 0)),              # residual block-diag
            pl.BlockSpec((1, VCo), lambda i: (0, 0)),                # btr
        ],
        out_specs=pl.BlockSpec((m_tile, VCo), lambda i: (i, 0)),
        compiler_params=pltpu.CompilerParams(
            dimension_semantics=("parallel",),                       # 2 TCs on v7x
            vmem_limit_bytes=vmem_limit,
        ),
    )(x_gcn, w1, b1, wt_f, wr_block, btr)

    # Restore PyTorch's (N, C_out, T, V) contract; an NTVC consumer could use
    # out_flat (lane-dense (N*T, V*C_out)) directly and skip this transpose.
    out = out_flat.reshape(N, T, V, C_out).transpose(0, 3, 1, 2)
    return out, A


# ------------------------- deterministic parameter init -------------------------
def init_params(key, in_channels, out_channels, kernel_size):
    kt, K = kernel_size
    ks = jax.random.split(key, 9)
    p = {}
    p["wg_conv"] = 0.1 * jax.random.normal(ks[0], (out_channels * K, in_channels, 1, 1), jnp.float32)
    p["bg"] = 0.1 * jax.random.normal(ks[1], (out_channels * K,), jnp.float32)
    p["wt_conv"] = 0.1 * jax.random.normal(ks[2], (out_channels, out_channels, kt, 1), jnp.float32)
    p["bt"] = 0.1 * jax.random.normal(ks[3], (out_channels,), jnp.float32)
    p["wr_conv"] = 0.1 * jax.random.normal(ks[4], (out_channels, in_channels, 1, 1), jnp.float32)
    p["br"] = 0.1 * jax.random.normal(ks[5], (out_channels,), jnp.float32)

    def bn_params(k):
        k1, k2, k3, k4 = jax.random.split(k, 4)
        gamma = 1.0 + 0.1 * jax.random.normal(k1, (out_channels,), jnp.float32)
        beta = 0.1 * jax.random.normal(k2, (out_channels,), jnp.float32)
        rmean = 0.1 * jax.random.normal(k3, (out_channels,), jnp.float32)
        rvar = 0.5 + jax.random.uniform(k4, (out_channels,), jnp.float32)
        return gamma, beta, rmean, rvar

    p["bn1"] = bn_params(ks[6])
    p["bn2"] = bn_params(ks[7])
    p["bnr"] = bn_params(ks[8])
    return p


# ------------------------- pure-JAX reference (for checking) -------------------------
def reference_forward(x, A, params, kernel_size):
    kt, K = kernel_size
    N, C_in, T, V = x.shape
    C_out = params["bt"].shape[0]
    pad = (kt - 1) // 2
    eps = 1e-5

    def bn(z, bnp):
        gamma, beta, rm, rv = bnp
        inv = gamma / jnp.sqrt(rv + eps)
        return (z - rm[None, :, None, None]) * inv[None, :, None, None] + beta[None, :, None, None]

    wg = params["wg_conv"][:, :, 0, 0]
    y = jnp.einsum("oc,nctv->notv", wg, x) + params["bg"][None, :, None, None]
    y = y.reshape(N, K, C_out, T, V)
    g = jnp.einsum("nkctv,kvw->nctw", y, A)

    h = jax.nn.relu(bn(g, params["bn1"]))
    hp = jnp.pad(h, ((0, 0), (0, 0), (pad, pad), (0, 0)))
    wt = params["wt_conv"][:, :, :, 0]
    tc = sum(jnp.einsum("oc,nctv->notv", wt[:, :, dt], hp[:, :, dt:dt + T, :]) for dt in range(kt))
    tc = bn(tc + params["bt"][None, :, None, None], params["bn2"])

    wr = params["wr_conv"][:, :, 0, 0]
    r = jnp.einsum("oc,nctv->notv", wr, x) + params["br"][None, :, None, None]
    r = bn(r, params["bnr"])
    return jax.nn.relu(tc + r), A


if __name__ == "__main__":
    N, C_in, C_out, T, V = 2, 4, 32, 16, 16
    kernel_size = (3, 3)  # (temporal kt, spatial K)

    key = jax.random.PRNGKey(0)
    k_x, k_a, k_p = jax.random.split(key, 3)
    x = jax.random.normal(k_x, (N, C_in, T, V), jnp.float32)
    A = jax.random.uniform(k_a, (kernel_size[1], V, V), jnp.float32)
    A = A / A.sum(axis=1, keepdims=True)
    params = init_params(k_p, C_in, C_out, kernel_size)

    # m_tile = T -> one whole sequence per grid step, grid=(N,)=(2,): exercises
    # the row-tiled double-buffered pipeline and the per-sequence boundary masks.
    out, A_out = st_gcn_forward(x, A, params, kernel_size, m_tile=T)
    out = jax.block_until_ready(out)

    ref, _ = reference_forward(x, A, params, kernel_size)
    err = float(jnp.max(jnp.abs(out - ref)))
    # Matmuls use bf16 operands on the MXU (f32 accumulation), so allow
    # bf16-level rounding relative to the f32 reference.
    if not np.isfinite(err) or err > 3e-2:
        raise AssertionError(f"kernel/reference mismatch: max abs err = {err}")
    print("KERNEL_OK")
</pallas_src>

<mosaic_0001>
module attributes {stable_mosaic.version = 11 : i64} {
  func.func @_st_gcn_kernel(%arg0: i32, %arg1: memref<16x64xbf16, #tpu.memory_space<vmem>>, %arg2: memref<64x512xbf16, #tpu.memory_space<vmem>>, %arg3: memref<1x512xf32, #tpu.memory_space<vmem>>, %arg4: memref<3x32x32xbf16, #tpu.memory_space<vmem>>, %arg5: memref<64x512xbf16, #tpu.memory_space<vmem>>, %arg6: memref<1x512xf32, #tpu.memory_space<vmem>>, %arg7: memref<16x512xf32, #tpu.memory_space<vmem>>) attributes {dimension_semantics = [#tpu.dimension_semantics<parallel>], iteration_bounds = array<i64: 2>, scalar_prefetch = 0 : i64, scratch_operands = 0 : i64, tpu.core_type = #tpu.core_type<tc>, window_params = [{transform_indices = @transform_0, window_bounds = array<i64: 16, 64>}, {pipeline_mode = #tpu.pipeline_mode<synchronous>, transform_indices = @transform_1, window_bounds = array<i64: 64, 512>}, {pipeline_mode = #tpu.pipeline_mode<synchronous>, transform_indices = @transform_2, window_bounds = array<i64: 1, 512>}, {pipeline_mode = #tpu.pipeline_mode<synchronous>, transform_indices = @transform_3, window_bounds = array<i64: 3, 32, 32>}, {pipeline_mode = #tpu.pipeline_mode<synchronous>, transform_indices = @transform_4, window_bounds = array<i64: 64, 512>}, {pipeline_mode = #tpu.pipeline_mode<synchronous>, transform_indices = @transform_5, window_bounds = array<i64: 1, 512>}, {transform_indices = @transform_6, window_bounds = array<i64: 16, 512>}]} {
    %c0 = arith.constant 0 : index
    %c0_0 = arith.constant 0 : index
    %0 = vector.load %arg1[%c0, %c0_0] : memref<16x64xbf16, #tpu.memory_space<vmem>>, vector<16x64xbf16>
    %c0_1 = arith.constant 0 : index
    %c0_2 = arith.constant 0 : index
    %1 = vector.load %arg2[%c0_1, %c0_2] : memref<64x512xbf16, #tpu.memory_space<vmem>>, vector<64x512xbf16>
    %cst = arith.constant dense<0.000000e+00> : vector<16x512xf32>
    %2 = tpu.matmul %0, %1, %cst {dimension_numbers = #tpu.dot_dimension_numbers<[1], [0], [0], [1], [0, 0, 1, 1], [], []>} : vector<16x64xbf16>, vector<64x512xbf16>, vector<16x512xf32> -> vector<16x512xf32>
    %c0_3 = arith.constant 0 : index
    %c0_4 = arith.constant 0 : index
    %3 = vector.load %arg3[%c0_3, %c0_4] : memref<1x512xf32, #tpu.memory_space<vmem>>, vector<1x512xf32>
    %4 = vector.broadcast %3 : vector<1x512xf32> to vector<16x512xf32>
    %5 = arith.addf %2, %4 : vector<16x512xf32>
    %cst_5 = arith.constant 0.000000e+00 : f32
    %6 = vector.broadcast %cst_5 : f32 to vector<16x512xf32>
    %7 = arith.maximumf %5, %6 : vector<16x512xf32>
    %8 = vector.shape_cast %7 : vector<16x512xf32> to vector<16x16x32xf32>
    %9 = tpu.transpose %8, [1, 0, 2] : vector<16x16x32xf32> -> vector<16x16x32xf32>
    %10 = vector.shape_cast %9 : vector<16x16x32xf32> to vector<256x32xf32>
    %11 = arith.truncf %10 : vector<256x32xf32> to vector<256x32xbf16>
    %c1 = arith.constant 1 : index
    %c0_6 = arith.constant 0 : index
    %c0_7 = arith.constant 0 : index
    %12 = vector.load %arg4[%c1, %c0_6, %c0_7] : memref<3x32x32xbf16, #tpu.memory_space<vmem>>, vector<1x32x32xbf16>
    %13 = vector.shape_cast %12 : vector<1x32x32xbf16> to vector<32x32xbf16>
    %cst_8 = arith.constant dense<0.000000e+00> : vector<256x32xf32>
    %14 = tpu.matmul %11, %13, %cst_8 {dimension_numbers = #tpu.dot_dimension_numbers<[1], [0], [0], [1], [0, 0, 1, 1], [], []>} : vector<256x32xbf16>, vector<32x32xbf16>, vector<256x32xf32> -> vector<256x32xf32>
    %15 = tpu.iota {dimensions = array<i32: 0>} : vector<256x1xi32>
    %c16_i32 = arith.constant 16 : i32
    %c0_i32 = arith.constant 0 : i32
    %16 = arith.cmpi eq, %c16_i32, %c0_i32 : i32
    %c1_i32 = arith.constant 1 : i32
    %17 = arith.select %16, %c1_i32, %c16_i32 : i32
    %18 = vector.broadcast %17 : i32 to vector<256x1xi32>
    %19 = arith.remsi %15, %18 : vector<256x1xi32>
    %c0_i32_9 = arith.constant 0 : i32
    %20 = vector.broadcast %c0_i32_9 : i32 to vector<256x1xi32>
    %21 = arith.cmpi ne, %19, %20 : vector<256x1xi32>
    %c0_i32_10 = arith.constant 0 : i32
    %22 = vector.broadcast %c0_i32_10 : i32 to vector<256x1xi32>
    %23 = arith.cmpi slt, %19, %22 : vector<256x1xi32>
    %c0_i32_11 = arith.constant 0 : i32
    %24 = arith.cmpi slt, %17, %c0_i32_11 : i32
    %25 = vector.broadcast %24 : i1 to vector<256x1xi1>
    %26 = vector.broadcast %25 : vector<256x1xi1> to vector<256x1xi1>
    %27 = arith.xori %23, %26 : vector<256x1xi1>
    %28 = arith.andi %27, %21 : vector<256x1xi1>
    %29 = vector.broadcast %17 : i32 to vector<256x1xi32>
    %30 = arith.addi %19, %29 : vector<256x1xi32>
    %31 = arith.select %28, %30, %19 : vector<256x1xi1>, vector<256x1xi32>
    %c1_i32_12 = arith.constant 1 : i32
    %32 = tpu.dynamic_rotate %10 by %c1_i32_12 dim 0 : vector<256x32xf32>, i32 -> vector<256x32xf32>
    %c1_i32_13 = arith.constant 1 : i32
    %33 = vector.broadcast %c1_i32_13 : i32 to vector<256x1xi32>
    %34 = arith.cmpi sge, %31, %33 : vector<256x1xi32>
    %35 = arith.extui %34 : vector<256x1xi1> to vector<256x1xi32>
    %36 = arith.sitofp %35 : vector<256x1xi32> to vector<256x1xf32>
    %37 = vector.broadcast %36 : vector<256x1xf32> to vector<256x32xf32>
    %38 = arith.mulf %32, %37 : vector<256x32xf32>
    %39 = arith.truncf %38 : vector<256x32xf32> to vector<256x32xbf16>
    %c0_14 = arith.constant 0 : index
    %c0_15 = arith.constant 0 : index
    %c0_16 = arith.constant 0 : index
    %40 = vector.load %arg4[%c0_14, %c0_15, %c0_16] : memref<3x32x32xbf16, #tpu.memory_space<vmem>>, vector<1x32x32xbf16>
    %41 = vector.shape_cast %40 : vector<1x32x32xbf16> to vector<32x32xbf16>
    %cst_17 = arith.constant dense<0.000000e+00> : vector<256x32xf32>
    %42 = tpu.matmul %39, %41, %cst_17 {dimension_numbers = #tpu.dot_dimension_numbers<[1], [0], [0], [1], [0, 0, 1, 1], [], []>} : vector<256x32xbf16>, vector<32x32xbf16>, vector<256x32xf32> -> vector<256x32xf32>
    %43 = arith.addf %14, %42 : vector<256x32xf32>
    %c255_i32 = arith.constant 255 : i32
    %44 = tpu.dynamic_rotate %10 by %c255_i32 dim 0 : vector<256x32xf32>, i32 -> vector<256x32xf32>
    %c15_i32 = arith.constant 15 : i32
    %45 = vector.broadcast %c15_i32 : i32 to vector<256x1xi32>
    %46 = arith.cmpi slt, %31, %45 : vector<256x1xi32>
    %47 = arith.extui %46 : vector<256x1xi1> to vector<256x1xi32>
    %48 = arith.sitofp %47 : vector<256x1xi32> to vector<256x1xf32>
    %49 = vector.broadcast %48 : vector<256x1xf32> to vector<256x32xf32>
    %50 = arith.mulf %44, %49 : vector<256x32xf32>
    %51 = arith.truncf %50 : vector<256x32xf32> to vector<256x32xbf16>
    %c2 = arith.constant 2 : index
    %c0_18 = arith.constant 0 : index
    %c0_19 = arith.constant 0 : index
    %52 = vector.load %arg4[%c2, %c0_18, %c0_19] : memref<3x32x32xbf16, #tpu.memory_space<vmem>>, vector<1x32x32xbf16>
    %53 = vector.shape_cast %52 : vector<1x32x32xbf16> to vector<32x32xbf16>
    %cst_20 = arith.constant dense<0.000000e+00> : vector<256x32xf32>
    %54 = tpu.matmul %51, %53, %cst_20 {dimension_numbers = #tpu.dot_dimension_numbers<[1], [0], [0], [1], [0, 0, 1, 1], [], []>} : vector<256x32xbf16>, vector<32x32xbf16>, vector<256x32xf32> -> vector<256x32xf32>
    %55 = arith.addf %43, %54 : vector<256x32xf32>
    %56 = vector.shape_cast %55 : vector<256x32xf32> to vector<16x16x32xf32>
    %57 = tpu.transpose %56, [1, 0, 2] : vector<16x16x32xf32> -> vector<16x16x32xf32>
    %58 = vector.shape_cast %57 : vector<16x16x32xf32> to vector<16x512xf32>
    %c0_21 = arith.constant 0 : index
    %c0_22 = arith.constant 0 : index
    %59 = vector.load %arg5[%c0_21, %c0_22] : memref<64x512xbf16, #tpu.memory_space<vmem>>, vector<64x512xbf16>
    %cst_23 = arith.constant dense<0.000000e+00> : vector<16x512xf32>
    %60 = tpu.matmul %0, %59, %cst_23 {dimension_numbers = #tpu.dot_dimension_numbers<[1], [0], [0], [1], [0, 0, 1, 1], [], []>} : vector<16x64xbf16>, vector<64x512xbf16>, vector<16x512xf32> -> vector<16x512xf32>
    %61 = arith.addf %58, %60 : vector<16x512xf32>
    %c0_24 = arith.constant 0 : index
    %c0_25 = arith.constant 0 : index
    %62 = vector.load %arg6[%c0_24, %c0_25] : memref<1x512xf32, #tpu.memory_space<vmem>>, vector<1x512xf32>
    %63 = vector.broadcast %62 : vector<1x512xf32> to vector<16x512xf32>
    %64 = arith.addf %61, %63 : vector<16x512xf32>
    %cst_26 = arith.constant 0.000000e+00 : f32
    %65 = vector.broadcast %cst_26 : f32 to vector<16x512xf32>
    %66 = arith.maximumf %64, %65 : vector<16x512xf32>
    %c0_27 = arith.constant 0 : index
    %c0_28 = arith.constant 0 : index
    %67 = vector.load %arg7[%c0_27, %c0_28] : memref<16x512xf32, #tpu.memory_space<vmem>>, vector<16x512xf32>
    tpu.vector_store %arg7[%c0_27, %c0_28], %66 {strides = array<i32>} : memref<16x512xf32, #tpu.memory_space<vmem>>, vector<16x512xf32>,
    return
  }
  func.func @transform_0(%arg0: i32) -> (i32, i32) {
    %c0_i32 = arith.constant 0 : i32
    %c0_i32_0 = arith.constant 0 : i32
    return %arg0, %c0_i32 : i32, i32
  }
  func.func @transform_1(%arg0: i32) -> (i32, i32) {
    %c0_i32 = arith.constant 0 : i32
    %c0_i32_0 = arith.constant 0 : i32
    %c0_i32_1 = arith.constant 0 : i32
    return %c0_i32, %c0_i32_0 : i32, i32
  }
  func.func @transform_2(%arg0: i32) -> (i32, i32) {
    %c0_i32 = arith.constant 0 : i32
    %c0_i32_0 = arith.constant 0 : i32
    %c0_i32_1 = arith.constant 0 : i32
    return %c0_i32, %c0_i32_0 : i32, i32
  }
  func.func @transform_3(%arg0: i32) -> (i32, i32, i32) {
    %c0_i32 = arith.constant 0 : i32
    %c0_i32_0 = arith.constant 0 : i32
    %c0_i32_1 = arith.constant 0 : i32
    %c0_i32_2 = arith.constant 0 : i32
    return %c0_i32, %c0_i32_0, %c0_i32_1 : i32, i32, i32
  }
  func.func @transform_4(%arg0: i32) -> (i32, i32) {
    %c0_i32 = arith.constant 0 : i32
    %c0_i32_0 = arith.constant 0 : i32
    %c0_i32_1 = arith.constant 0 : i32
    return %c0_i32, %c0_i32_0 : i32, i32
  }
  func.func @transform_5(%arg0: i32) -> (i32, i32) {
    %c0_i32 = arith.constant 0 : i32
    %c0_i32_0 = arith.constant 0 : i32
    %c0_i32_1 = arith.constant 0 : i32
    return %c0_i32, %c0_i32_0 : i32, i32
  }
  func.func @transform_6(%arg0: i32) -> (i32, i32) {
    %c0_i32 = arith.constant 0 : i32
    %c0_i32_0 = arith.constant 0 : i32
    return %arg0, %c0_i32 : i32, i32
  }
}

</mosaic_0001>

<llo_original>
// kernel: tpu_custom_call.1
$region0: #{tpu_custom_call.1}
  #allocation0 [shape = 'u32[]', space=smem, size = 0x4, offset = 0x4, fixed_abs, tag = 'smem constant byte address 0x4 - core index']
  #allocation1 [shape = 'u32[144,128]{1,0:T(1,128)}', space=vmem, size = 0x12000, scoped, tag = 'internal scratch']
  %s0 = inlined_call_operand.hbm [shape: bf16[32,64], index: 0, kind: input, shape index: {}]
  %s1 = inlined_call_operand.hbm [shape: bf16[64,512], index: 1, kind: input, shape index: {}]
  %s2 = inlined_call_operand.vmem [shape: f32[1,512], index: 2, kind: input, shape index: {}]
  %s3 = inlined_call_operand.hbm [shape: bf16[3,32,32], index: 3, kind: input, shape index: {}]
  %s4 = inlined_call_operand.hbm [shape: bf16[64,512], index: 4, kind: input, shape index: {}]
  %s5 = inlined_call_operand.vmem [shape: f32[1,512], index: 5, kind: input, shape index: {}]
  %s6 = inlined_call_operand.hbm [shape: f32[32,512], index: 6, kind: output, shape index: {}]
  %s7 = sld [smem:[#allocation0]]
  $region73: #{tpu_custom_call.1} parent=0
    _
  %s9 = ssub.s32 1, %s7
  %s10 = scalar_select 0, %s9, %s7
  $region1: #{tpu_custom_call.1} parent=0
    #allocation2 [shape = 'u8[8192]{0}', space=vmem, size = 0x2000, scoped, tag = 'input window, operand 0']
    #allocation3 [shape = 's32[2]{0}', space=sflag, size = 0x8, scoped, tag = 'scoped memory for tpu_custom_call.1']
    #allocation4 [shape = 's32[2]{0}', space=sflag, size = 0x8, scoped, tag = 'scoped memory for tpu_custom_call.1']
    #allocation5 [shape = 'u8[65536]{0}', space=vmem, size = 0x10000, scoped, tag = 'input window, operand 1, single buffered']
    #allocation6 [shape = 's32[1]{0}', space=sflag, size = 0x4, scoped, tag = 'scoped memory for tpu_custom_call.1']
    #allocation7 [shape = 'u8[24576]{0}', space=vmem, size = 0x6000, scoped, tag = 'input window, operand 3, single buffered']
    #allocation8 [shape = 'u8[65536]{0}', space=vmem, size = 0x10000, scoped, tag = 'input window, operand 4, single buffered']
    #allocation9 [shape = 's32[1]{0}', space=sflag, size = 0x4, scoped, tag = 'scoped memory for tpu_custom_call.1']
    #allocation10 [shape = 'u8[65536]{0}', space=vmem, size = 0x10000, scoped, tag = 'output window, operand 0']
    %11 = vsyncpa [#allocation3], 0
    %s12 = scalar_lea.sflag [#allocation3], 1
    %13 = vsyncpa %s12, 0
    %14 = vsyncpa [#allocation6], 0
    %15 = vsyncpa [#allocation9], 0
    %16 = vsyncpa [#allocation4], 0
    %s17 = scalar_lea.sflag [#allocation4], 1
    %18 = vsyncpa %s17, 0
    loop: start=0, step=1, limit=4
    $region2: #{tpu_custom_call.1} parent=1 // loop_pre_header
      _
    $region3: #{tpu_custom_call.1} parent=1 // loop_header
      %s20 = sphi 0, %s24
      %p21 = scmp.ge.s32.totalorder %s20, 4
      %s30 = sphi 0, %s32
      %s33 = sphi 0, %s30
      %s34 = sphi 0, %s33
      %s50 = sphi 0, %s34
      %s54 = sphi 0, %s54
      %s56 = sphi 0, %s54
      %s57 = sphi 0, %s56
      %s71 = sphi 0, %s57
      %s75 = sphi 0, %s75
      %s77 = sphi 0, %s75
      %s78 = sphi 0, %s77
      %s92 = sphi 0, %s78
      %s96 = sphi 0, %s96
      %s98 = sphi 0, %s96
      %s99 = sphi 0, %s98
      %s113 = sphi 0, %s99
      %s117 = sphi 0, %s117
      %s119 = sphi 0, %s117
      %s120 = sphi 0, %s119
      %s134 = sphi 0, %s120
      %s138 = sphi 0, %s138
      %s140 = sphi 0, %s138
      %s141 = sphi 0, %s140
      %s155 = sphi 0, %s141
      %s161 = sphi 0, %s163
      %s164 = sphi 0, %s161
      %s165 = sphi 0, %s164
      %s181 = sphi 0, %s165
    $region4: #{tpu_custom_call.1} parent=1 // loop_header_branch
      %23 = sbr.rel (%p21) target = $region8
    $region5: #{tpu_custom_call.1} parent=1 // loop_body
      %s25 = ssub.s32 %s20, 1
      %s26 = ssub.s32 %s20, 2
      %s27 = sadd.s32 %s20, 1
      %s28 = ssub.s32 %s20, %s27
      %p29 = scmp.eq.s32.totalorder %s28, 0
      %s31 = sadd.s32 %s30, 1
      %s32 = scalar_select %p29, %s30, %s31
      %p35 = pneg %p29
      %p36 = scmp.eq.s32.totalorder %s20, 1
      %p37 = por %p35, %p36
      %p38 = scmp.ne.s32.totalorder %s30, %s33
      %p39 = scmp.eq.s32.totalorder %s20, 0
      %p40 = por %p38, %p39
      %p41 = scmp.ne.s32.totalorder %s30, %s33
      %p42 = scmp.eq.s32.totalorder %s25, 1
      %p43 = por %p41, %p42
      %p44 = scmp.ne.s32.totalorder %s33, %s34
      %p45 = scmp.eq.s32.totalorder %s25, 0
      %p46 = por %p44, %p45
      %p47 = scmp.ne.s32.totalorder %s33, %s34
      %p48 = scmp.eq.s32.totalorder %s26, 1
      %p49 = por %p47, %p48
      %p51 = scmp.ne.s32.totalorder %s34, %s50
      %p52 = scmp.eq.s32.totalorder %s26, 0
      %p53 = por %p51, %p52
      %s55 = sadd.s32 %s54, 1
      %p58 = scmp.eq.s32.totalorder %s20, 1
      %p59 = scmp.ne.s32.totalorder %s54, %s56
      %p60 = scmp.eq.s32.totalorder %s20, 0
      %p61 = por %p59, %p60
      %p62 = scmp.ne.s32.totalorder %s54, %s56
      %p63 = scmp.eq.s32.totalorder %s25, 1
      %p64 = por %p62, %p63
      %p65 = scmp.ne.s32.totalorder %s56, %s57
      %p66 = scmp.eq.s32.totalorder %s25, 0
      %p67 = por %p65, %p66
      %p68 = scmp.ne.s32.totalorder %s56, %s57
      %p69 = scmp.eq.s32.totalorder %s26, 1
      %p70 = por %p68, %p69
      %p72 = scmp.ne.s32.totalorder %s57, %s71
      %p73 = scmp.eq.s32.totalorder %s26, 0
      %p74 = por %p72, %p73
      %s76 = sadd.s32 %s75, 1
      %p79 = scmp.eq.s32.totalorder %s20, 1
      %p80 = scmp.ne.s32.totalorder %s75, %s77
      %p81 = scmp.eq.s32.totalorder %s20, 0
      %p82 = por %p80, %p81
      %p83 = scmp.ne.s32.totalorder %s75, %s77
      %p84 = scmp.eq.s32.totalorder %s25, 1
      %p85 = por %p83, %p84
      %p86 = scmp.ne.s32.totalorder %s77, %s78
      %p87 = scmp.eq.s32.totalorder %s25, 0
      %p88 = por %p86, %p87
      %p89 = scmp.ne.s32.totalorder %s77, %s78
      %p90 = scmp.eq.s32.totalorder %s26, 1
      %p91 = por %p89, %p90
      %p93 = scmp.ne.s32.totalorder %s78, %s92
      %p94 = scmp.eq.s32.totalorder %s26, 0
      %p95 = por %p93, %p94
      %s97 = sadd.s32 %s96, 1
      %p100 = scmp.eq.s32.totalorder %s20, 1
      %p101 = scmp.ne.s32.totalorder %s96, %s98
      %p102 = scmp.eq.s32.totalorder %s20, 0
      %p103 = por %p101, %p102
      %p104 = scmp.ne.s32.totalorder %s96, %s98
      %p105 = scmp.eq.s32.totalorder %s25, 1
      %p106 = por %p104, %p105
      %p107 = scmp.ne.s32.totalorder %s98, %s99
      %p108 = scmp.eq.s32.totalorder %s25, 0
      %p109 = por %p107, %p108
      %p110 = scmp.ne.s32.totalorder %s98, %s99
      %p111 = scmp.eq.s32.totalorder %s26, 1
      %p112 = por %p110, %p111
      %p114 = scmp.ne.s32.totalorder %s99, %s113
      %p115 = scmp.eq.s32.totalorder %s26, 0
      %p116 = por %p114, %p115
      %s118 = sadd.s32 %s117, 1
      %p121 = scmp.eq.s32.totalorder %s20, 1
      %p122 = scmp.ne.s32.totalorder %s117, %s119
      %p123 = scmp.eq.s32.totalorder %s20, 0
      %p124 = por %p122, %p123
      %p125 = scmp.ne.s32.totalorder %s117, %s119
      %p126 = scmp.eq.s32.totalorder %s25, 1
      %p127 = por %p125, %p126
      %p128 = scmp.ne.s32.totalorder %s119, %s120
      %p129 = scmp.eq.s32.totalorder %s25, 0
      %p130 = por %p128, %p129
      %p131 = scmp.ne.s32.totalorder %s119, %s120
      %p132 = scmp.eq.s32.totalorder %s26, 1
      %p133 = por %p131, %p132
      %p135 = scmp.ne.s32.totalorder %s120, %s134
      %p136 = scmp.eq.s32.totalorder %s26, 0
      %p137 = por %p135, %p136
      %s139 = sadd.s32 %s138, 1
      %p142 = scmp.eq.s32.totalorder %s20, 1
      %p143 = scmp.ne.s32.totalorder %s138, %s140
      %p144 = scmp.eq.s32.totalorder %s20, 0
      %p145 = por %p143, %p144
      %p146 = scmp.ne.s32.totalorder %s138, %s140
      %p147 = scmp.eq.s32.totalorder %s25, 1
      %p148 = por %p146, %p147
      %p149 = scmp.ne.s32.totalorder %s140, %s141
      %p150 = scmp.eq.s32.totalorder %s25, 0
      %p151 = por %p149, %p150
      %p152 = scmp.ne.s32.totalorder %s140, %s141
      %p153 = scmp.eq.s32.totalorder %s26, 1
      %p154 = por %p152, %p153
      %p156 = scmp.ne.s32.totalorder %s141, %s155
      %p157 = scmp.eq.s32.totalorder %s26, 0
      %p158 = por %p156, %p157
      %s159 = ssub.s32 %s20, %s27
      %p160 = scmp.eq.s32.totalorder %s159, 0
      %s162 = sadd.s32 %s161, 1
      %s163 = scalar_select %p160, %s161, %s162
      %p166 = pneg %p160
      %p167 = scmp.eq.s32.totalorder %s20, 1
      %p168 = por %p166, %p167
      %p169 = scmp.ne.s32.totalorder %s161, %s164
      %p170 = scmp.eq.s32.totalorder %s20, 0
      %p171 = por %p169, %p170
      %p172 = scmp.ne.s32.totalorder %s161, %s164
      %p173 = scmp.eq.s32.totalorder %s25, 1
      %p174 = por %p172, %p173
      %p175 = scmp.ne.s32.totalorder %s164, %s165
      %p176 = scmp.eq.s32.totalorder %s25, 0
      %p177 = por %p175, %p176
      %p178 = scmp.ne.s32.totalorder %s164, %s165
      %p179 = scmp.eq.s32.totalorder %s26, 1
      %p180 = por %p178, %p179
      %p182 = scmp.ne.s32.totalorder %s165, %s181
      %p183 = scmp.eq.s32.totalorder %s26, 0
      %p184 = por %p182, %p183
      %p185 = scmp.le.s32.totalorder 1, %s20
      %p186 = scmp.lt.s32.totalorder %s20, 3
      %p187 = pnand %p185, %p186
      %p188 = pneg %p187
      // Predicated region
      $region9: #{tpu_custom_call.1} parent=5 // pred_check
        _
      $region10: #{tpu_custom_call.1} parent=5 // pred_check_branch
        %190 = sbr.rel (%p187) target = $region12
      $region11: #{tpu_custom_call.1} parent=5 // pred_region
        %s191 = ssub.s32 %s20, 1
        // Predicated region
        $region13: #{tpu_custom_call.1} parent=11 // pred_check
          %p192 = pneg %p67
        $region14: #{tpu_custom_call.1} parent=11 // pred_check_branch
          %194 = sbr.rel (%p192) target = $region16
        $region15: #{tpu_custom_call.1} parent=11 // pred_region
          %s196 = ssub.s32 2048, 2048
          %197 = vsyncadd [#allocation6], %s196
          %s198 = sshll.u32 [#allocation5], 4
          %s199 = int_to_ptr.vmem [resolvable:$true] %s198
          %204 = dma.hbm_to_vmem [thread:$0]  %s1, 2048, %s199, [#allocation6], 256, 256, 16
        $region16: #{tpu_custom_call.1} parent=11 // pred_fallthru
          _
        // Predicated region
        $region17: #{tpu_custom_call.1} parent=11 // pred_check
          %p205 = pneg %p88
        $region18: #{tpu_custom_call.1} parent=11 // pred_check_branch
          %207 = sbr.rel (%p205) target = $region20
        $region19: #{tpu_custom_call.1} parent=11 // pred_region
          _
        $region20: #{tpu_custom_call.1} parent=11 // pred_fallthru
          _
        // Predicated region
        $region21: #{tpu_custom_call.1} parent=11 // pred_check
          %p208 = pneg %p109
        $region22: #{tpu_custom_call.1} parent=11 // pred_check_branch
          %210 = sbr.rel (%p208) target = $region24
        $region23: #{tpu_custom_call.1} parent=11 // pred_region
          %s212 = ssub.s32 768, 768
          %213 = vsyncadd [#allocation6], %s212
          %s214 = sshll.u32 [#allocation7], 4
          %s215 = int_to_ptr.vmem [resolvable:$true] %s214
          %220 = dma.hbm_to_vmem [thread:$0]  %s3, 768, %s215, [#allocation6], 64, 64, 4
        $region24: #{tpu_custom_call.1} parent=11 // pred_fallthru
          _
        // Predicated region
        $region25: #{tpu_custom_call.1} parent=11 // pred_check
          %p221 = pneg %p130
        $region26: #{tpu_custom_call.1} parent=11 // pred_check_branch
          %223 = sbr.rel (%p221) target = $region28
        $region27: #{tpu_custom_call.1} parent=11 // pred_region
          %s225 = ssub.s32 2048, 2048
          %226 = vsyncadd [#allocation9], %s225
          %s227 = sshll.u32 [#allocation8], 4
          %s228 = int_to_ptr.vmem [resolvable:$true] %s227
          %233 = dma.hbm_to_vmem [thread:$0]  %s4, 2048, %s228, [#allocation9], 256, 256, 16
        $region28: #{tpu_custom_call.1} parent=11 // pred_fallthru
          _
        // Predicated region
        $region29: #{tpu_custom_call.1} parent=11 // pred_check
          %p234 = pneg %p151
        $region30: #{tpu_custom_call.1} parent=11 // pred_check_branch
          %236 = sbr.rel (%p234) target = $region32
        $region31: #{tpu_custom_call.1} parent=11 // pred_region
          _
        $region32: #{tpu_custom_call.1} parent=11 // pred_fallthru
          _
      $region12: #{tpu_custom_call.1} parent=5 // pred_fallthru
        _
      %p237 = scmp.lt.s32.totalorder %s20, 2
      // Predicated region
      $region33: #{tpu_custom_call.1} parent=5 // pred_check
        %p238 = pneg %p237
      $region34: #{tpu_custom_call.1} parent=5 // pred_check_branch
        %240 = sbr.rel (%p238) target = $region36
      $region35: #{tpu_custom_call.1} parent=5 // pred_region
        // Predicated region
        $region37: #{tpu_custom_call.1} parent=35 // pred_check
          %p241 = pneg %p40
        $region38: #{tpu_custom_call.1} parent=35 // pred_check_branch
          %243 = sbr.rel (%p241) target = $region40
        $region39: #{tpu_custom_call.1} parent=35 // pred_region
          %s244 = sand.u32 %s30, 1
          %s245 = scalar_lea.sflag [#allocation3], %s244
          %s246 = sand.u32 %s30, 1
          %s247 = smul.addr %s246, 8
          %s248 = scalar_lea.vmem [#allocation2], %s247
          %s249 = smul.u32 2, %s20
          %s251 = ssub.s32 128, 128
          %252 = vsyncadd %s245, %s251
          %s253 = smul.addr %s249, 64
          %s254 = scalar_lea.hbm %s0, %s253
          %s255 = sshll.u32 %s248, 4
          %s256 = int_to_ptr.vmem [resolvable:$true] %s255
          %261 = dma.hbm_to_vmem [thread:$0]  %s254, 128, %s256, %s245, 64, 64, 4
        $region40: #{tpu_custom_call.1} parent=35 // pred_fallthru
          _
      $region36: #{tpu_custom_call.1} parent=5 // pred_fallthru
        _
      %p262 = scmp.le.s32.totalorder 1, %s20
      %p263 = scmp.lt.s32.totalorder %s20, 3
      %p264 = pnand %p262, %p263
      %p265 = pneg %p264
      // Predicated region
      $region41: #{tpu_custom_call.1} parent=5 // pred_check
        _
      $region42: #{tpu_custom_call.1} parent=5 // pred_check_branch
        %267 = sbr.rel (%p264) target = $region44
      $region43: #{tpu_custom_call.1} parent=5 // pred_region
        %s268 = ssub.s32 %s20, 1
        %s269 = sand.u32 %s33, 1
        %s270 = scalar_lea.sflag [#allocation3], %s269
        %s271 = sand.u32 %s33, 1
        %s272 = smul.addr %s271, 8
        %s273 = scalar_lea.vmem [#allocation2], %s272
        // Predicated region
        $region45: #{tpu_custom_call.1} parent=43 // pred_check
          %p274 = pneg %p46
        $region46: #{tpu_custom_call.1} parent=43 // pred_check_branch
          %276 = sbr.rel (%p274) target = $region48
        $region47: #{tpu_custom_call.1} parent=43 // pred_region
          %277 = dma.done %s270, 128
        $region48: #{tpu_custom_call.1} parent=43 // pred_fallthru
          _
        // Predicated region
        $region49: #{tpu_custom_call.1} parent=43 // pred_check
          %p278 = pneg %p67
        $region50: #{tpu_custom_call.1} parent=43 // pred_check_branch
          %280 = sbr.rel (%p278) target = $region52
        $region51: #{tpu_custom_call.1} parent=43 // pred_region
          %281 = dma.done [#allocation6], 2048
        $region52: #{tpu_custom_call.1} parent=43 // pred_fallthru
          _
        // Predicated region
        $region53: #{tpu_custom_call.1} parent=43 // pred_check
          %p282 = pneg %p109
        $region54: #{tpu_custom_call.1} parent=43 // pred_check_branch
          %284 = sbr.rel (%p282) target = $region56
        $region55: #{tpu_custom_call.1} parent=43 // pred_region
          %285 = dma.done [#allocation6], 768
        $region56: #{tpu_custom_call.1} parent=43 // pred_fallthru
          _
        // Predicated region
        $region57: #{tpu_custom_call.1} parent=43 // pred_check
          %p286 = pneg %p130
        $region58: #{tpu_custom_call.1} parent=43 // pred_check_branch
          %288 = sbr.rel (%p286) target = $region60
        $region59: #{tpu_custom_call.1} parent=43 // pred_region
          %289 = dma.done [#allocation9], 2048
        $region60: #{tpu_custom_call.1} parent=43 // pred_fallthru
          _
        %s290 = sand.u32 %s33, 1
        %s291 = scalar_lea.sflag [#allocation3], %s290
        %s292 = sand.u32 %s33, 1
        %s293 = smul.addr %s292, 8
        %s294 = scalar_lea.vmem [#allocation2], %s293
        %p295 = pneg %p46
        %p296 = pneg %p43
        %p297 = pneg %p67
        %p298 = pneg %p64
        %p299 = pneg %p88
        %p300 = pneg %p85
        %p301 = pneg %p109
        %p302 = pneg %p106
        %p303 = pneg %p130
        %p304 = pneg %p127
        %p305 = pneg %p151
        %p306 = pneg %p148
        %p307 = pneg %p177
        %p308 = pneg %p174
        %s309 = sand.u32 %s164, 1
        %s310 = scalar_lea.sflag [#allocation4], %s309
        %s311 = sand.u32 %s164, 1
        %s312 = smul.addr %s311, 64
        %s313 = scalar_lea.vmem [#allocation10], %s312
        %s314 = smul.u32 2, %s25
        %s315 = smul.u32 2, %s25
        %v317 = vld [vmem:[%s273] sm:$0xf]
        %v318 = vld [vmem:[%s273 + $0x4] sm:$0xf]
        %v319 = vld [vmem:[#allocation5] sm:$0xff]
        %v320 = vld [vmem:[#allocation5 + $0x8] sm:$0xff]
        %v321 = vld [vmem:[#allocation5 + $0x10] sm:$0xff]
        %v322 = vld [vmem:[#allocation5 + $0x18] sm:$0xff]
        %v323 = vld [vmem:[#allocation5 + $0x20] sm:$0xff]
        %v324 = vld [vmem:[#allocation5 + $0x28] sm:$0xff]
        %v325 = vld [vmem:[#allocation5 + $0x30] sm:$0xff]
        %v326 = vld [vmem:[#allocation5 + $0x38] sm:$0xff]
        %v327 = vld [vmem:[#allocation5 + $0x40] sm:$0xff]
        %v328 = vld [vmem:[#allocation5 + $0x48] sm:$0xff]
        %v329 = vld [vmem:[#allocation5 + $0x50] sm:$0xff]
        %v330 = vld [vmem:[#allocation5 + $0x58] sm:$0xff]
        %v331 = vld [vmem:[#allocation5 + $0x60] sm:$0xff]
        %v332 = vld [vmem:[#allocation5 + $0x68] sm:$0xff]
        %v333 = vld [vmem:[#allocation5 + $0x70] sm:$0xff]
        %v334 = vld [vmem:[#allocation5 + $0x78] sm:$0xff]
        %v335 = vld [vmem:[%s2] sm:$0xf]
        %v337 = vlaneseq
        %v338 = vshrl.u32 %v337, 7
        %v339 = vsub.s32 0, %v338
        %v340 = vrot.slane %v335, %v339
        %v341 = vlaneseq
        %v342 = vshrl.u32 %v341, 7
        %v343 = vsub.s32 1, %v342
        %v344 = vrot.slane %v335, %v343
        %v345 = vlaneseq
        %v346 = vshrl.u32 %v345, 7
        %v347 = vsub.s32 2, %v346
        %v348 = vrot.slane %v335, %v347
        %v349 = vlaneseq
        %v350 = vshrl.u32 %v349, 7
        %v351 = vsub.s32 3, %v350
        %v352 = vrot.slane %v335, %v351
        %v359 = vunpack.c.l.b16 %v317
        %v360 = vunpack.c.l.b16 %v318
        %v361 = vpack.c.b16 %v360, %v359
        %v378 = vunpack.c.l.b16 %v319
        %v379 = vunpack.c.h.b16 %v319
        %v380 = vunpack.c.l.b16 %v320
        %v381 = vunpack.c.h.b16 %v320
        %v382 = vunpack.c.l.b16 %v321
        %v383 = vunpack.c.h.b16 %v321
        %v384 = vunpack.c.l.b16 %v322
        %v385 = vunpack.c.h.b16 %v322
        %v386 = vunpack.c.l.b16 %v323
        %v387 = vunpack.c.h.b16 %v323
        %v388 = vunpack.c.l.b16 %v324
        %v389 = vunpack.c.h.b16 %v324
        %v390 = vunpack.c.l.b16 %v325
        %v391 = vunpack.c.h.b16 %v325
        %v392 = vunpack.c.l.b16 %v326
        %v393 = vunpack.c.h.b16 %v326
        %v394 = vunpack.c.l.b16 %v327
        %v395 = vunpack.c.h.b16 %v327
        %v396 = vunpack.c.l.b16 %v328
        %v397 = vunpack.c.h.b16 %v328
        %v398 = vunpack.c.l.b16 %v329
        %v399 = vunpack.c.h.b16 %v329
        %v400 = vunpack.c.l.b16 %v330
        %v401 = vunpack.c.h.b16 %v330
        %v402 = vunpack.c.l.b16 %v331
        %v403 = vunpack.c.h.b16 %v331
        %v404 = vunpack.c.l.b16 %v332
        %v405 = vunpack.c.h.b16 %v332
        %v406 = vunpack.c.l.b16 %v333
        %v407 = vunpack.c.h.b16 %v333
        %v408 = vunpack.c.l.b16 %v334
        %v409 = vunpack.c.h.b16 %v334
        %v410 = vpack.c.b16 %v382, %v378
        %v411 = vpack.c.b16 %v383, %v379
        %v412 = vpack.c.b16 %v384, %v380
        %v413 = vpack.c.b16 %v385, %v381
        %v414 = vpack.c.b16 %v390, %v386
        %v415 = vpack.c.b16 %v391, %v387
        %v416 = vpack.c.b16 %v392, %v388
        %v417 = vpack.c.b16 %v393, %v389
        %v418 = vpack.c.b16 %v398, %v394
        %v419 = vpack.c.b16 %v399, %v395
        %v420 = vpack.c.b16 %v400, %v396
        %v421 = vpack.c.b16 %v401, %v397
        %v422 = vpack.c.b16 %v406, %v402
        %v423 = vpack.c.b16 %v407, %v403
        %v424 = vpack.c.b16 %v408, %v404
        %v425 = vpack.c.b16 %v409, %v405
        %vm442 = vcmask 523264
        %v444 = vsel %vm442, %v361, 0
        %446 = vmatprep.subr.bf16.mxu0 %v411
        %447 = vmatpush1.bf16.msra.mxu0 %v410
        %448 = vmatprep.subr.bf16.mxu0 %v415
        %449 = vmatpush1.bf16.msra.mxu0 %v414
        %450 = vmatprep.subr.bf16.mxu0 %v419
        %451 = vmatpush1.bf16.msra.mxu0 %v418
        %452 = vmatprep.subr.bf16.mxu0 %v423
        %453 = vmatpush1.bf16.msra.mxu0 %v422
        %454 = vmatprep.subr.bf16.mxu0 0
        %455 = vmatpush1.bf16.msra.mxu0 0
        %456 = vmatprep.subr.bf16.mxu0 0
        %457 = vmatpush1.bf16.msra.mxu0 0
        %458 = vmatprep.subr.bf16.mxu0 0
        %459 = vmatpush1.bf16.msra.mxu0 0
        %460 = vmatprep.subr.bf16.mxu0 0
        %461 = vmatpush1.bf16.msra.mxu0 0
        %462 = vmatprep.subr.bf16.mxu0 0
        %463 = vmatpush1.bf16.msra.mxu0 0
        %464 = vmatprep.subr.bf16.mxu0 0
        %465 = vmatpush1.bf16.msra.mxu0 0
        %466 = vmatprep.subr.bf16.mxu0 0
        %467 = vmatpush1.bf16.msra.mxu0 0
        %468 = vmatprep.subr.bf16.mxu0 0
        %469 = vmatpush1.bf16.msra.mxu0 0
        %470 = vmatprep.subr.bf16.mxu0 0
        %471 = vmatpush1.bf16.msra.mxu0 0
        %472 = vmatprep.subr.bf16.mxu0 0
        %473 = vmatpush1.bf16.msra.mxu0 0
        %474 = vmatprep.subr.bf16.mxu0 0
        %475 = vmatpush1.bf16.msra.mxu0 0
        %476 = vmatprep.subr.bf16.mxu0 0
        %477 = vmatpush1.bf16.msra.mxu0 0
        %478 = vmatprep.mubr.bf16.mxu0 0
        %479 = vmatmul.mubr.bf16.gmra.mrb[0].mxu0 %v444
        %v480 = vpop.f32.mrb[0].mxu0
        %v481 = vadd.f32 %v340, %v480
        %v482 = vpop.f32.mrb[0].mxu0
        %v483 = vadd.f32 %v344, %v482
        %v484 = vpop.f32.mrb[0].mxu0
        %v485 = vadd.f32 %v340, %v484
        %v486 = vpop.f32.mrb[0].mxu0
        %v487 = vadd.f32 %v344, %v486
        %488 = vdwg.mxu0
        %489 = vmatprep.subr.bf16.mxu0 %v413
        %490 = vmatpush1.bf16.msra.mxu0 %v412
        %491 = vmatprep.subr.bf16.mxu0 %v417
        %492 = vmatpush1.bf16.msra.mxu0 %v416
        %493 = vmatprep.subr.bf16.mxu0 %v421
        %494 = vmatpush1.bf16.msra.mxu0 %v420
        %495 = vmatprep.subr.bf16.mxu0 %v425
        %496 = vmatpush1.bf16.msra.mxu0 %v424
        %497 = vmatprep.subr.bf16.mxu0 0
        %498 = vmatpush1.bf16.msra.mxu0 0
        %499 = vmatprep.subr.bf16.mxu0 0
        %500 = vmatpush1.bf16.msra.mxu0 0
        %501 = vmatprep.subr.bf16.mxu0 0
        %502 = vmatpush1.bf16.msra.mxu0 0
        %503 = vmatprep.subr.bf16.mxu0 0
        %504 = vmatpush1.bf16.msra.mxu0 0
        %505 = vmatprep.subr.bf16.mxu0 0
        %506 = vmatpush1.bf16.msra.mxu0 0
        %507 = vmatprep.subr.bf16.mxu0 0
        %508 = vmatpush1.bf16.msra.mxu0 0
        %509 = vmatprep.subr.bf16.mxu0 0
        %510 = vmatpush1.bf16.msra.mxu0 0
        %511 = vmatprep.subr.bf16.mxu0 0
        %512 = vmatpush1.bf16.msra.mxu0 0
        %513 = vmatprep.subr.bf16.mxu0 0
        %514 = vmatpush1.bf16.msra.mxu0 0
        %515 = vmatprep.subr.bf16.mxu0 0
        %516 = vmatpush1.bf16.msra.mxu0 0
        %517 = vmatprep.subr.bf16.mxu0 0
        %518 = vmatpush1.bf16.msra.mxu0 0
        %519 = vmatprep.subr.bf16.mxu0 0
        %520 = vmatpush1.bf16.msra.mxu0 0
        %521 = vmatprep.mubr.bf16.mxu0 0
        %522 = vmatmul.mubr.bf16.gmra.mrb[0].mxu0 %v444
        %v523 = vpop.f32.mrb[0].mxu0
        %v524 = vadd.f32 %v348, %v523
        %v525 = vpop.f32.mrb[0].mxu0
        %v526 = vadd.f32 %v352, %v525
        %v527 = vpop.f32.mrb[0].mxu0
        %v528 = vadd.f32 %v348, %v527
        %v529 = vpop.f32.mrb[0].mxu0
        %v530 = vadd.f32 %v352, %v529
        %531 = vdwg.mxu0
        %v532 = vmax.f32 %v481, 0.0
        %v533 = vmax.f32 %v483, 0.0
        %v534 = vmax.f32 %v524, 0.0
        %v535 = vmax.f32 %v526, 0.0
        %v536 = vmax.f32 %v485, 0.0
        %v537 = vmax.f32 %v487, 0.0
        %v538 = vmax.f32 %v528, 0.0
        %v539 = vmax.f32 %v530, 0.0
        %542 = vrot.lane.b32.xlu0 %v532, 96
        %v543 = vpop.permute.xlu0 %542
        %544 = vrot.lane.b32.xlu0 %v536, 96
        %v545 = vpop.permute.xlu0 %544
        %548 = vrot.lane.b32.xlu0 %v532, 64
        %v549 = vpop.permute.xlu0 %548
        %550 = vrot.lane.b32.xlu0 %v536, 64
        %v551 = vpop.permute.xlu0 %550
        %554 = vrot.lane.b32.xlu0 %v532, 32
        %v555 = vpop.permute.xlu0 %554
        %556 = vrot.lane.b32.xlu0 %v536, 32
        %v557 = vpop.permute.xlu0 %556
        %562 = vrot.lane.b32.xlu0 %v533, 96
        %v563 = vpop.permute.xlu0 %562
        %564 = vrot.lane.b32.xlu0 %v537, 96
        %v565 = vpop.permute.xlu0 %564
        %568 = vrot.lane.b32.xlu0 %v533, 64
        %v569 = vpop.permute.xlu0 %568
        %570 = vrot.lane.b32.xlu0 %v537, 64
        %v571 = vpop.permute.xlu0 %570
        %574 = vrot.lane.b32.xlu0 %v533, 32
        %v575 = vpop.permute.xlu0 %574
        %576 = vrot.lane.b32.xlu0 %v537, 32
        %v577 = vpop.permute.xlu0 %576
        %582 = vrot.lane.b32.xlu0 %v534, 96
        %v583 = vpop.permute.xlu0 %582
        %584 = vrot.lane.b32.xlu0 %v538, 96
        %v585 = vpop.permute.xlu0 %584
        %588 = vrot.lane.b32.xlu0 %v534, 64
        %v589 = vpop.permute.xlu0 %588
        %590 = vrot.lane.b32.xlu0 %v538, 64
        %v591 = vpop.permute.xlu0 %590
        %594 = vrot.lane.b32.xlu0 %v534, 32
        %v595 = vpop.permute.xlu0 %594
        %596 = vrot.lane.b32.xlu0 %v538, 32
        %v597 = vpop.permute.xlu0 %596
        %602 = vrot.lane.b32.xlu0 %v535, 96
        %v603 = vpop.permute.xlu0 %602
        %604 = vrot.lane.b32.xlu0 %v539, 96
        %v605 = vpop.permute.xlu0 %604
        %608 = vrot.lane.b32.xlu0 %v535, 64
        %v609 = vpop.permute.xlu0 %608
        %610 = vrot.lane.b32.xlu0 %v539, 64
        %v611 = vpop.permute.xlu0 %610
        %614 = vrot.lane.b32.xlu0 %v535, 32
        %v615 = vpop.permute.xlu0 %614
        %616 = vrot.lane.b32.xlu0 %v539, 32
        %v617 = vpop.permute.xlu0 %616
        %v620 = vcombine.low %v532, %v549
        %v621 = vcombine.high %v532, %v549
        %v623 = vunpack.c.l.s4 1983009808
        %v624 = vunpack.c.0.s8 %v623
        %v625 = vlaneseq
        %v626 = vshrl.u32 %v625, 7
        %v627 = vsub.s32 %v624, %v626
        %v628 = vrot.slane %v620, %v627
        %v630 = vunpack.c.l.s4 1983009808
        %v631 = vunpack.c.0.s8 %v630
        %v632 = vlaneseq
        %v633 = vshrl.u32 %v632, 7
        %v634 = vsub.s32 %v631, %v633
        %v635 = vrot.slane %v621, %v634
        %v636 = vcombine.low %v543, %v555
        %v637 = vcombine.high %v543, %v555
        %v639 = vunpack.c.l.s4 1983009808
        %v640 = vunpack.c.0.s8 %v639
        %v641 = vlaneseq
        %v642 = vshrl.u32 %v641, 7
        %v643 = vsub.s32 %v640, %v642
        %v644 = vrot.slane %v636, %v643
        %v646 = vunpack.c.l.s4 1983009808
        %v647 = vunpack.c.0.s8 %v646
        %v648 = vlaneseq
        %v649 = vshrl.u32 %v648, 7
        %v650 = vsub.s32 %v647, %v649
        %v651 = vrot.slane %v637, %v650
        %v652 = vcombine.low %v533, %v569
        %v653 = vcombine.high %v533, %v569
        %v655 = vunpack.c.l.s4 1983009808
        %v656 = vunpack.c.0.s8 %v655
        %v657 = vlaneseq
        %v658 = vshrl.u32 %v657, 7
        %v659 = vsub.s32 %v656, %v658
        %v660 = vrot.slane %v652, %v659
        %v662 = vunpack.c.l.s4 1983009808
        %v663 = vunpack.c.0.s8 %v662
        %v664 = vlaneseq
        %v665 = vshrl.u32 %v664, 7
        %v666 = vsub.s32 %v663, %v665
        %v667 = vrot.slane %v653, %v666
        %v668 = vcombine.low %v563, %v575
        %v669 = vcombine.high %v563, %v575
        %v671 = vunpack.c.l.s4 1983009808
        %v672 = vunpack.c.0.s8 %v671
        %v673 = vlaneseq
        %v674 = vshrl.u32 %v673, 7
        %v675 = vsub.s32 %v672, %v674
        %v676 = vrot.slane %v668, %v675
        %v678 = vunpack.c.l.s4 1983009808
        %v679 = vunpack.c.0.s8 %v678
        %v680 = vlaneseq
        %v681 = vshrl.u32 %v680, 7
        %v682 = vsub.s32 %v679, %v681
        %v683 = vrot.slane %v669, %v682
        %v684 = vcombine.low %v628, %v644
        %v685 = vcombine.high %v628, %v644
        %v687 = vunpack.c.l.s4 1934713408
        %v688 = vunpack.c.0.s8 %v687
        %v689 = vlaneseq
        %v690 = vshrl.u32 %v689, 7
        %v691 = vsub.s32 %v688, %v690
        %v692 = vrot.slane %v684, %v691
        %v694 = vunpack.c.l.s4 1934713408
        %v695 = vunpack.c.0.s8 %v694
        %v696 = vlaneseq
        %v697 = vshrl.u32 %v696, 7
        %v698 = vsub.s32 %v695, %v697
        %v699 = vrot.slane %v685, %v698
        %v700 = vcombine.low %v635, %v651
        %v701 = vcombine.high %v635, %v651
        %v703 = vunpack.c.l.s4 1934713408
        %v704 = vunpack.c.0.s8 %v703
        %v705 = vlaneseq
        %v706 = vshrl.u32 %v705, 7
        %v707 = vsub.s32 %v704, %v706
        %v708 = vrot.slane %v700, %v707
        %v710 = vunpack.c.l.s4 1934713408
        %v711 = vunpack.c.0.s8 %v710
        %v712 = vlaneseq
        %v713 = vshrl.u32 %v712, 7
        %v714 = vsub.s32 %v711, %v713
        %v715 = vrot.slane %v701, %v714
        %v716 = vcombine.low %v660, %v676
        %v717 = vcombine.high %v660, %v676
        %v719 = vunpack.c.l.s4 1934713408
        %v720 = vunpack.c.0.s8 %v719
        %v721 = vlaneseq
        %v722 = vshrl.u32 %v721, 7
        %v723 = vsub.s32 %v720, %v722
        %v724 = vrot.slane %v716, %v723
        %v726 = vunpack.c.l.s4 1934713408
        %v727 = vunpack.c.0.s8 %v726
        %v728 = vlaneseq
        %v729 = vshrl.u32 %v728, 7
        %v730 = vsub.s32 %v727, %v729
        %v731 = vrot.slane %v717, %v730
        %v732 = vcombine.low %v667, %v683
        %v733 = vcombine.high %v667, %v683
        %v735 = vunpack.c.l.s4 1934713408
        %v736 = vunpack.c.0.s8 %v735
        %v737 = vlaneseq
        %v738 = vshrl.u32 %v737, 7
        %v739 = vsub.s32 %v736, %v738
        %v740 = vrot.slane %v732, %v739
        %v742 = vunpack.c.l.s4 1934713408
        %v743 = vunpack.c.0.s8 %v742
        %v744 = vlaneseq
        %v745 = vshrl.u32 %v744, 7
        %v746 = vsub.s32 %v743, %v745
        %v747 = vrot.slane %v733, %v746
        %v748 = vcombine.low %v692, %v724
        %v749 = vcombine.high %v692, %v724
        %v750 = vcombine.low %v699, %v731
        %v751 = vcombine.high %v699, %v731
        %v752 = vcombine.low %v708, %v740
        %v753 = vcombine.high %v708, %v740
        %v754 = vcombine.low %v715, %v747
        %v755 = vcombine.high %v715, %v747
        %v756 = vcombine.low %v534, %v589
        %v757 = vcombine.high %v534, %v589
        %v759 = vunpack.c.l.s4 1983009808
        %v760 = vunpack.c.0.s8 %v759
        %v761 = vlaneseq
        %v762 = vshrl.u32 %v761, 7
        %v763 = vsub.s32 %v760, %v762
        %v764 = vrot.slane %v756, %v763
        %v766 = vunpack.c.l.s4 1983009808
        %v767 = vunpack.c.0.s8 %v766
        %v768 = vlaneseq
        %v769 = vshrl.u32 %v768, 7
        %v770 = vsub.s32 %v767, %v769
        %v771 = vrot.slane %v757, %v770
        %v772 = vcombine.low %v583, %v595
        %v773 = vcombine.high %v583, %v595
        %v775 = vunpack.c.l.s4 1983009808
        %v776 = vunpack.c.0.s8 %v775
        %v777 = vlaneseq
        %v778 = vshrl.u32 %v777, 7
        %v779 = vsub.s32 %v776, %v778
        %v780 = vrot.slane %v772, %v779
        %v782 = vunpack.c.l.s4 1983009808
        %v783 = vunpack.c.0.s8 %v782
        %v784 = vlaneseq
        %v785 = vshrl.u32 %v784, 7
        %v786 = vsub.s32 %v783, %v785
        %v787 = vrot.slane %v773, %v786
        %v788 = vcombine.low %v535, %v609
        %v789 = vcombine.high %v535, %v609
        %v791 = vunpack.c.l.s4 1983009808
        %v792 = vunpack.c.0.s8 %v791
        %v793 = vlaneseq
        %v794 = vshrl.u32 %v793, 7
        %v795 = vsub.s32 %v792, %v794
        %v796 = vrot.slane %v788, %v795
        %v798 = vunpack.c.l.s4 1983009808
        %v799 = vunpack.c.0.s8 %v798
        %v800 = vlaneseq
        %v801 = vshrl.u32 %v800, 7
        %v802 = vsub.s32 %v799, %v801
        %v803 = vrot.slane %v789, %v802
        %v804 = vcombine.low %v603, %v615
        %v805 = vcombine.high %v603, %v615
        %v807 = vunpack.c.l.s4 1983009808
        %v808 = vunpack.c.0.s8 %v807
        %v809 = vlaneseq
        %v810 = vshrl.u32 %v809, 7
        %v811 = vsub.s32 %v808, %v810
        %v812 = vrot.slane %v804, %v811
        %v814 = vunpack.c.l.s4 1983009808
        %v815 = vunpack.c.0.s8 %v814
        %v816 = vlaneseq
        %v817 = vshrl.u32 %v816, 7
        %v818 = vsub.s32 %v815, %v817
        %v819 = vrot.slane %v805, %v818
        %v820 = vcombine.low %v764, %v780
        %v821 = vcombine.high %v764, %v780
        %v823 = vunpack.c.l.s4 1934713408
        %v824 = vunpack.c.0.s8 %v823
        %v825 = vlaneseq
        %v826 = vshrl.u32 %v825, 7
        %v827 = vsub.s32 %v824, %v826
        %v828 = vrot.slane %v820, %v827
        %v830 = vunpack.c.l.s4 1934713408
        %v831 = vunpack.c.0.s8 %v830
        %v832 = vlaneseq
        %v833 = vshrl.u32 %v832, 7
        %v834 = vsub.s32 %v831, %v833
        %v835 = vrot.slane %v821, %v834
        %v836 = vcombine.low %v771, %v787
        %v837 = vcombine.high %v771, %v787
        %v839 = vunpack.c.l.s4 1934713408
        %v840 = vunpack.c.0.s8 %v839
        %v841 = vlaneseq
        %v842 = vshrl.u32 %v841, 7
        %v843 = vsub.s32 %v840, %v842
        %v844 = vrot.slane %v836, %v843
        %v846 = vunpack.c.l.s4 1934713408
        %v847 = vunpack.c.0.s8 %v846
        %v848 = vlaneseq
        %v849 = vshrl.u32 %v848, 7
        %v850 = vsub.s32 %v847, %v849
        %v851 = vrot.slane %v837, %v850
        %v852 = vcombine.low %v796, %v812
        %v853 = vcombine.high %v796, %v812
        %v855 = vunpack.c.l.s4 1934713408
        %v856 = vunpack.c.0.s8 %v855
        %v857 = vlaneseq
        %v858 = vshrl.u32 %v857, 7
        %v859 = vsub.s32 %v856, %v858
        %v860 = vrot.slane %v852, %v859
        %v862 = vunpack.c.l.s4 1934713408
        %v863 = vunpack.c.0.s8 %v862
        %v864 = vlaneseq
        %v865 = vshrl.u32 %v864, 7
        %v866 = vsub.s32 %v863, %v865
        %v867 = vrot.slane %v853, %v866
        %v868 = vcombine.low %v803, %v819
        %v869 = vcombine.high %v803, %v819
        %v871 = vunpack.c.l.s4 1934713408
        %v872 = vunpack.c.0.s8 %v871
        %v873 = vlaneseq
        %v874 = vshrl.u32 %v873, 7
        %v875 = vsub.s32 %v872, %v874
        %v876 = vrot.slane %v868, %v875
        %v878 = vunpack.c.l.s4 1934713408
        %v879 = vunpack.c.0.s8 %v878
        %v880 = vlaneseq
        %v881 = vshrl.u32 %v880, 7
        %v882 = vsub.s32 %v879, %v881
        %v883 = vrot.slane %v869, %v882
        %v884 = vcombine.low %v828, %v860
        %v885 = vcombine.high %v828, %v860
        %v886 = vcombine.low %v835, %v867
        %v887 = vcombine.high %v835, %v867
        %v888 = vcombine.low %v844, %v876
        %v889 = vcombine.high %v844, %v876
        %v890 = vcombine.low %v851, %v883
        %v891 = vcombine.high %v851, %v883
        %v892 = vcombine.low %v536, %v551
        %v893 = vcombine.high %v536, %v551
        %v895 = vunpack.c.l.s4 1983009808
        %v896 = vunpack.c.0.s8 %v895
        %v897 = vlaneseq
        %v898 = vshrl.u32 %v897, 7
        %v899 = vsub.s32 %v896, %v898
        %v900 = vrot.slane %v892, %v899
        %v902 = vunpack.c.l.s4 1983009808
        %v903 = vunpack.c.0.s8 %v902
        %v904 = vlaneseq
        %v905 = vshrl.u32 %v904, 7
        %v906 = vsub.s32 %v903, %v905
        %v907 = vrot.slane %v893, %v906
        %v908 = vcombine.low %v545, %v557
        %v909 = vcombine.high %v545, %v557
        %v911 = vunpack.c.l.s4 1983009808
        %v912 = vunpack.c.0.s8 %v911
        %v913 = vlaneseq
        %v914 = vshrl.u32 %v913, 7
        %v915 = vsub.s32 %v912, %v914
        %v916 = vrot.slane %v908, %v915
        %v918 = vunpack.c.l.s4 1983009808
        %v919 = vunpack.c.0.s8 %v918
        %v920 = vlaneseq
        %v921 = vshrl.u32 %v920, 7
        %v922 = vsub.s32 %v919, %v921
        %v923 = vrot.slane %v909, %v922
        %v924 = vcombine.low %v537, %v571
        %v925 = vcombine.high %v537, %v571
        %v927 = vunpack.c.l.s4 1983009808
        %v928 = vunpack.c.0.s8 %v927
        %v929 = vlaneseq
        %v930 = vshrl.u32 %v929, 7
        %v931 = vsub.s32 %v928, %v930
        %v932 = vrot.slane %v924, %v931
        %v934 = vunpack.c.l.s4 1983009808
        %v935 = vunpack.c.0.s8 %v934
        %v936 = vlaneseq
        %v937 = vshrl.u32 %v936, 7
        %v938 = vsub.s32 %v935, %v937
        %v939 = vrot.slane %v925, %v938
        %v940 = vcombine.low %v565, %v577
        %v941 = vcombine.high %v565, %v577
        %v943 = vunpack.c.l.s4 1983009808
        %v944 = vunpack.c.0.s8 %v943
        %v945 = vlaneseq
        %v946 = vshrl.u32 %v945, 7
        %v947 = vsub.s32 %v944, %v946
        %v948 = vrot.slane %v940, %v947
        %v950 = vunpack.c.l.s4 1983009808
        %v951 = vunpack.c.0.s8 %v950
        %v952 = vlaneseq
        %v953 = vshrl.u32 %v952, 7
        %v954 = vsub.s32 %v951, %v953
        %v955 = vrot.slane %v941, %v954
        %v956 = vcombine.low %v900, %v916
        %v957 = vcombine.high %v900, %v916
        %v959 = vunpack.c.l.s4 1934713408
        %v960 = vunpack.c.0.s8 %v959
        %v961 = vlaneseq
        %v962 = vshrl.u32 %v961, 7
        %v963 = vsub.s32 %v960, %v962
        %v964 = vrot.slane %v956, %v963
        %v966 = vunpack.c.l.s4 1934713408
        %v967 = vunpack.c.0.s8 %v966
        %v968 = vlaneseq
        %v969 = vshrl.u32 %v968, 7
        %v970 = vsub.s32 %v967, %v969
        %v971 = vrot.slane %v957, %v970
        %v972 = vcombine.low %v907, %v923
        %v973 = vcombine.high %v907, %v923
        %v975 = vunpack.c.l.s4 1934713408
        %v976 = vunpack.c.0.s8 %v975
        %v977 = vlaneseq
        %v978 = vshrl.u32 %v977, 7
        %v979 = vsub.s32 %v976, %v978
        %v980 = vrot.slane %v972, %v979
        %v982 = vunpack.c.l.s4 1934713408
        %v983 = vunpack.c.0.s8 %v982
        %v984 = vlaneseq
        %v985 = vshrl.u32 %v984, 7
        %v986 = vsub.s32 %v983, %v985
        %v987 = vrot.slane %v973, %v986
        %v988 = vcombine.low %v932, %v948
        %v989 = vcombine.high %v932, %v948
        %v991 = vunpack.c.l.s4 1934713408
        %v992 = vunpack.c.0.s8 %v991
        %v993 = vlaneseq
        %v994 = vshrl.u32 %v993, 7
        %v995 = vsub.s32 %v992, %v994
        %v996 = vrot.slane %v988, %v995
        %v998 = vunpack.c.l.s4 1934713408
        %v999 = vunpack.c.0.s8 %v998
        %v1000 = vlaneseq
        %v1001 = vshrl.u32 %v1000, 7
        %v1002 = vsub.s32 %v999, %v1001
        %v1003 = vrot.slane %v989, %v1002
        %v1004 = vcombine.low %v939, %v955
        %v1005 = vcombine.high %v939, %v955
        %v1007 = vunpack.c.l.s4 1934713408
        %v1008 = vunpack.c.0.s8 %v1007
        %v1009 = vlaneseq
        %v1010 = vshrl.u32 %v1009, 7
        %v1011 = vsub.s32 %v1008, %v1010
        %v1012 = vrot.slane %v1004, %v1011
        %v1014 = vunpack.c.l.s4 1934713408
        %v1015 = vunpack.c.0.s8 %v1014
        %v1016 = vlaneseq
        %v1017 = vshrl.u32 %v1016, 7
        %v1018 = vsub.s32 %v1015, %v1017
        %v1019 = vrot.slane %v1005, %v1018
        %v1020 = vcombine.low %v964, %v996
        %v1021 = vcombine.high %v964, %v996
        %v1022 = vcombine.low %v971, %v1003
        %v1023 = vcombine.high %v971, %v1003
        %v1024 = vcombine.low %v980, %v1012
        %v1025 = vcombine.high %v980, %v1012
        %v1026 = vcombine.low %v987, %v1019
        %v1027 = vcombine.high %v987, %v1019
        %v1028 = vcombine.low %v538, %v591
        %v1029 = vcombine.high %v538, %v591
        %v1031 = vunpack.c.l.s4 1983009808
        %v1032 = vunpack.c.0.s8 %v1031
        %v1033 = vlaneseq
        %v1034 = vshrl.u32 %v1033, 7
        %v1035 = vsub.s32 %v1032, %v1034
        %v1036 = vrot.slane %v1028, %v1035
        %v1038 = vunpack.c.l.s4 1983009808
        %v1039 = vunpack.c.0.s8 %v1038
        %v1040 = vlaneseq
        %v1041 = vshrl.u32 %v1040, 7
        %v1042 = vsub.s32 %v1039, %v1041
        %v1043 = vrot.slane %v1029, %v1042
        %v1044 = vcombine.low %v585, %v597
        %v1045 = vcombine.high %v585, %v597
        %v1047 = vunpack.c.l.s4 1983009808
        %v1048 = vunpack.c.0.s8 %v1047
        %v1049 = vlaneseq
        %v1050 = vshrl.u32 %v1049, 7
        %v1051 = vsub.s32 %v1048, %v1050
        %v1052 = vrot.slane %v1044, %v1051
        %v1054 = vunpack.c.l.s4 1983009808
        %v1055 = vunpack.c.0.s8 %v1054
        %v1056 = vlaneseq
        %v1057 = vshrl.u32 %v1056, 7
        %v1058 = vsub.s32 %v1055, %v1057
        %v1059 = vrot.slane %v1045, %v1058
        %v1060 = vcombine.low %v539, %v611
        %v1061 = vcombine.high %v539, %v611
        %v1063 = vunpack.c.l.s4 1983009808
        %v1064 = vunpack.c.0.s8 %v1063
        %v1065 = vlaneseq
        %v1066 = vshrl.u32 %v1065, 7
        %v1067 = vsub.s32 %v1064, %v1066
        %v1068 = vrot.slane %v1060, %v1067
        %v1070 = vunpack.c.l.s4 1983009808
        %v1071 = vunpack.c.0.s8 %v1070
        %v1072 = vlaneseq
        %v1073 = vshrl.u32 %v1072, 7
        %v1074 = vsub.s32 %v1071, %v1073
        %v1075 = vrot.slane %v1061, %v1074
        %v1076 = vcombine.low %v605, %v617
        %v1077 = vcombine.high %v605, %v617
        %v1079 = vunpack.c.l.s4 1983009808
        %v1080 = vunpack.c.0.s8 %v1079
        %v1081 = vlaneseq
        %v1082 = vshrl.u32 %v1081, 7
        %v1083 = vsub.s32 %v1080, %v1082
        %v1084 = vrot.slane %v1076, %v1083
        %v1086 = vunpack.c.l.s4 1983009808
        %v1087 = vunpack.c.0.s8 %v1086
        %v1088 = vlaneseq
        %v1089 = vshrl.u32 %v1088, 7
        %v1090 = vsub.s32 %v1087, %v1089
        %v1091 = vrot.slane %v1077, %v1090
        %v1092 = vcombine.low %v1036, %v1052
        %v1093 = vcombine.high %v1036, %v1052
        %v1095 = vunpack.c.l.s4 1934713408
        %v1096 = vunpack.c.0.s8 %v1095
        %v1097 = vlaneseq
        %v1098 = vshrl.u32 %v1097, 7
        %v1099 = vsub.s32 %v1096, %v1098
        %v1100 = vrot.slane %v1092, %v1099
        %v1102 = vunpack.c.l.s4 1934713408
        %v1103 = vunpack.c.0.s8 %v1102
        %v1104 = vlaneseq
        %v1105 = vshrl.u32 %v1104, 7
        %v1106 = vsub.s32 %v1103, %v1105
        %v1107 = vrot.slane %v1093, %v1106
        %v1108 = vcombine.low %v1043, %v1059
        %v1109 = vcombine.high %v1043, %v1059
        %v1111 = vunpack.c.l.s4 1934713408
        %v1112 = vunpack.c.0.s8 %v1111
        %v1113 = vlaneseq
        %v1114 = vshrl.u32 %v1113, 7
        %v1115 = vsub.s32 %v1112, %v1114
        %v1116 = vrot.slane %v1108, %v1115
        %v1118 = vunpack.c.l.s4 1934713408
        %v1119 = vunpack.c.0.s8 %v1118
        %v1120 = vlaneseq
        %v1121 = vshrl.u32 %v1120, 7
        %v1122 = vsub.s32 %v1119, %v1121
        %v1123 = vrot.slane %v1109, %v1122
        %v1124 = vcombine.low %v1068, %v1084
        %v1125 = vcombine.high %v1068, %v1084
        %v1127 = vunpack.c.l.s4 1934713408
        %v1128 = vunpack.c.0.s8 %v1127
        %v1129 = vlaneseq
        %v1130 = vshrl.u32 %v1129, 7
        %v1131 = vsub.s32 %v1128, %v1130
        %v1132 = vrot.slane %v1124, %v1131
        %v1134 = vunpack.c.l.s4 1934713408
        %v1135 = vunpack.c.0.s8 %v1134
        %v1136 = vlaneseq
        %v1137 = vshrl.u32 %v1136, 7
        %v1138 = vsub.s32 %v1135, %v1137
        %v1139 = vrot.slane %v1125, %v1138
        %v1140 = vcombine.low %v1075, %v1091
        %v1141 = vcombine.high %v1075, %v1091
        %v1143 = vunpack.c.l.s4 1934713408
        %v1144 = vunpack.c.0.s8 %v1143
        %v1145 = vlaneseq
        %v1146 = vshrl.u32 %v1145, 7
        %v1147 = vsub.s32 %v1144, %v1146
        %v1148 = vrot.slane %v1140, %v1147
        %v1150 = vunpack.c.l.s4 1934713408
        %v1151 = vunpack.c.0.s8 %v1150
        %v1152 = vlaneseq
        %v1153 = vshrl.u32 %v1152, 7
        %v1154 = vsub.s32 %v1151, %v1153
        %v1155 = vrot.slane %v1141, %v1154
        %v1156 = vcombine.low %v1100, %v1132
        %v1157 = vcombine.high %v1100, %v1132
        %v1158 = vcombine.low %v1107, %v1139
        %v1159 = vcombine.high %v1107, %v1139
        %v1160 = vcombine.low %v1116, %v1148
        %v1161 = vcombine.high %v1116, %v1148
        %v1162 = vcombine.low %v1123, %v1155
        %v1163 = vcombine.high %v1123, %v1155
        %v1164 = vcombine.low %v748, %v750
        %v1165 = vcombine.high %v748, %v750
        %v1167 = vunpack.c.l.s4 1983009808
        %v1168 = vunpack.c.0.s8 %v1167
        %v1169 = vlaneseq
        %v1170 = vshrl.u32 %v1169, 7
        %v1171 = vsub.s32 %v1168, %v1170
        %v1172 = vrot.slane %v1164, %v1171
        %v1174 = vunpack.c.l.s4 1983009808
        %v1175 = vunpack.c.0.s8 %v1174
        %v1176 = vlaneseq
        %v1177 = vshrl.u32 %v1176, 7
        %v1178 = vsub.s32 %v1175, %v1177
        %v1179 = vrot.slane %v1165, %v1178
        %v1180 = vcombine.low %v749, %v751
        %v1181 = vcombine.high %v749, %v751
        %v1183 = vunpack.c.l.s4 1983009808
        %v1184 = vunpack.c.0.s8 %v1183
        %v1185 = vlaneseq
        %v1186 = vshrl.u32 %v1185, 7
        %v1187 = vsub.s32 %v1184, %v1186
        %v1188 = vrot.slane %v1180, %v1187
        %v1190 = vunpack.c.l.s4 1983009808
        %v1191 = vunpack.c.0.s8 %v1190
        %v1192 = vlaneseq
        %v1193 = vshrl.u32 %v1192, 7
        %v1194 = vsub.s32 %v1191, %v1193
        %v1195 = vrot.slane %v1181, %v1194
        %v1196 = vcombine.low %v752, %v754
        %v1197 = vcombine.high %v752, %v754
        %v1199 = vunpack.c.l.s4 1983009808
        %v1200 = vunpack.c.0.s8 %v1199
        %v1201 = vlaneseq
        %v1202 = vshrl.u32 %v1201, 7
        %v1203 = vsub.s32 %v1200, %v1202
        %v1204 = vrot.slane %v1196, %v1203
        %v1206 = vunpack.c.l.s4 1983009808
        %v1207 = vunpack.c.0.s8 %v1206
        %v1208 = vlaneseq
        %v1209 = vshrl.u32 %v1208, 7
        %v1210 = vsub.s32 %v1207, %v1209
        %v1211 = vrot.slane %v1197, %v1210
        %v1212 = vcombine.low %v753, %v755
        %v1213 = vcombine.high %v753, %v755
        %v1215 = vunpack.c.l.s4 1983009808
        %v1216 = vunpack.c.0.s8 %v1215
        %v1217 = vlaneseq
        %v1218 = vshrl.u32 %v1217, 7
        %v1219 = vsub.s32 %v1216, %v1218
        %v1220 = vrot.slane %v1212, %v1219
        %v1222 = vunpack.c.l.s4 1983009808
        %v1223 = vunpack.c.0.s8 %v1222
        %v1224 = vlaneseq
        %v1225 = vshrl.u32 %v1224, 7
        %v1226 = vsub.s32 %v1223, %v1225
        %v1227 = vrot.slane %v1213, %v1226
        %v1228 = vcombine.low %v1172, %v1188
        %v1229 = vcombine.high %v1172, %v1188
        %v1231 = vunpack.c.l.s4 1934713408
        %v1232 = vunpack.c.0.s8 %v1231
        %v1233 = vlaneseq
        %v1234 = vshrl.u32 %v1233, 7
        %v1235 = vsub.s32 %v1232, %v1234
        %v1236 = vrot.slane %v1228, %v1235
        %v1238 = vunpack.c.l.s4 1934713408
        %v1239 = vunpack.c.0.s8 %v1238
        %v1240 = vlaneseq
        %v1241 = vshrl.u32 %v1240, 7
        %v1242 = vsub.s32 %v1239, %v1241
        %v1243 = vrot.slane %v1229, %v1242
        %v1244 = vcombine.low %v1179, %v1195
        %v1245 = vcombine.high %v1179, %v1195
        %v1247 = vunpack.c.l.s4 1934713408
        %v1248 = vunpack.c.0.s8 %v1247
        %v1249 = vlaneseq
        %v1250 = vshrl.u32 %v1249, 7
        %v1251 = vsub.s32 %v1248, %v1250
        %v1252 = vrot.slane %v1244, %v1251
        %v1254 = vunpack.c.l.s4 1934713408
        %v1255 = vunpack.c.0.s8 %v1254
        %v1256 = vlaneseq
        %v1257 = vshrl.u32 %v1256, 7
        %v1258 = vsub.s32 %v1255, %v1257
        %v1259 = vrot.slane %v1245, %v1258
        %v1260 = vcombine.low %v1204, %v1220
        %v1261 = vcombine.high %v1204, %v1220
        %v1263 = vunpack.c.l.s4 1934713408
        %v1264 = vunpack.c.0.s8 %v1263
        %v1265 = vlaneseq
        %v1266 = vshrl.u32 %v1265, 7
        %v1267 = vsub.s32 %v1264, %v1266
        %v1268 = vrot.slane %v1260, %v1267
        %v1270 = vunpack.c.l.s4 1934713408
        %v1271 = vunpack.c.0.s8 %v1270
        %v1272 = vlaneseq
        %v1273 = vshrl.u32 %v1272, 7
        %v1274 = vsub.s32 %v1271, %v1273
        %v1275 = vrot.slane %v1261, %v1274
        %v1276 = vcombine.low %v1211, %v1227
        %v1277 = vcombine.high %v1211, %v1227
        %v1279 = vunpack.c.l.s4 1934713408
        %v1280 = vunpack.c.0.s8 %v1279
        %v1281 = vlaneseq
        %v1282 = vshrl.u32 %v1281, 7
        %v1283 = vsub.s32 %v1280, %v1282
        %v1284 = vrot.slane %v1276, %v1283
        %v1286 = vunpack.c.l.s4 1934713408
        %v1287 = vunpack.c.0.s8 %v1286
        %v1288 = vlaneseq
        %v1289 = vshrl.u32 %v1288, 7
        %v1290 = vsub.s32 %v1287, %v1289
        %v1291 = vrot.slane %v1277, %v1290
        %v1292 = vcombine.low %v1236, %v1268
        %v1293 = vcombine.high %v1236, %v1268
        %v1294 = vcombine.low %v1243, %v1275
        %v1295 = vcombine.high %v1243, %v1275
        %v1296 = vcombine.low %v1252, %v1284
        %v1297 = vcombine.high %v1252, %v1284
        %v1298 = vcombine.low %v1259, %v1291
        %v1299 = vcombine.high %v1259, %v1291
        %v1300 = vcombine.low %v1020, %v1022
        %v1301 = vcombine.high %v1020, %v1022
        %v1303 = vunpack.c.l.s4 1983009808
        %v1304 = vunpack.c.0.s8 %v1303
        %v1305 = vlaneseq
        %v1306 = vshrl.u32 %v1305, 7
        %v1307 = vsub.s32 %v1304, %v1306
        %v1308 = vrot.slane %v1300, %v1307
        %v1310 = vunpack.c.l.s4 1983009808
        %v1311 = vunpack.c.0.s8 %v1310
        %v1312 = vlaneseq
        %v1313 = vshrl.u32 %v1312, 7
        %v1314 = vsub.s32 %v1311, %v1313
        %v1315 = vrot.slane %v1301, %v1314
        %v1316 = vcombine.low %v1021, %v1023
        %v1317 = vcombine.high %v1021, %v1023
        %v1319 = vunpack.c.l.s4 1983009808
        %v1320 = vunpack.c.0.s8 %v1319
        %v1321 = vlaneseq
        %v1322 = vshrl.u32 %v1321, 7
        %v1323 = vsub.s32 %v1320, %v1322
        %v1324 = vrot.slane %v1316, %v1323
        %v1326 = vunpack.c.l.s4 1983009808
        %v1327 = vunpack.c.0.s8 %v1326
        %v1328 = vlaneseq
        %v1329 = vshrl.u32 %v1328, 7
        %v1330 = vsub.s32 %v1327, %v1329
        %v1331 = vrot.slane %v1317, %v1330
        %v1332 = vcombine.low %v1024, %v1026
        %v1333 = vcombine.high %v1024, %v1026
        %v1335 = vunpack.c.l.s4 1983009808
        %v1336 = vunpack.c.0.s8 %v1335
        %v1337 = vlaneseq
        %v1338 = vshrl.u32 %v1337, 7
        %v1339 = vsub.s32 %v1336, %v1338
        %v1340 = vrot.slane %v1332, %v1339
        %v1342 = vunpack.c.l.s4 1983009808
        %v1343 = vunpack.c.0.s8 %v1342
        %v1344 = vlaneseq
        %v1345 = vshrl.u32 %v1344, 7
        %v1346 = vsub.s32 %v1343, %v1345
        %v1347 = vrot.slane %v1333, %v1346
        %v1348 = vcombine.low %v1025, %v1027
        %v1349 = vcombine.high %v1025, %v1027
        %v1351 = vunpack.c.l.s4 1983009808
        %v1352 = vunpack.c.0.s8 %v1351
        %v1353 = vlaneseq
        %v1354 = vshrl.u32 %v1353, 7
        %v1355 = vsub.s32 %v1352, %v1354
        %v1356 = vrot.slane %v1348, %v1355
        %v1358 = vunpack.c.l.s4 1983009808
        %v1359 = vunpack.c.0.s8 %v1358
        %v1360 = vlaneseq
        %v1361 = vshrl.u32 %v1360, 7
        %v1362 = vsub.s32 %v1359, %v1361
        %v1363 = vrot.slane %v1349, %v1362
        %v1364 = vcombine.low %v1308, %v1324
        %v1365 = vcombine.high %v1308, %v1324
        %v1367 = vunpack.c.l.s4 1934713408
        %v1368 = vunpack.c.0.s8 %v1367
        %v1369 = vlaneseq
        %v1370 = vshrl.u32 %v1369, 7
        %v1371 = vsub.s32 %v1368, %v1370
        %v1372 = vrot.slane %v1364, %v1371
        %v1374 = vunpack.c.l.s4 1934713408
        %v1375 = vunpack.c.0.s8 %v1374
        %v1376 = vlaneseq
        %v1377 = vshrl.u32 %v1376, 7
        %v1378 = vsub.s32 %v1375, %v1377
        %v1379 = vrot.slane %v1365, %v1378
        %v1380 = vcombine.low %v1315, %v1331
        %v1381 = vcombine.high %v1315, %v1331
        %v1383 = vunpack.c.l.s4 1934713408
        %v1384 = vunpack.c.0.s8 %v1383
        %v1385 = vlaneseq
        %v1386 = vshrl.u32 %v1385, 7
        %v1387 = vsub.s32 %v1384, %v1386
        %v1388 = vrot.slane %v1380, %v1387
        %v1390 = vunpack.c.l.s4 1934713408
        %v1391 = vunpack.c.0.s8 %v1390
        %v1392 = vlaneseq
        %v1393 = vshrl.u32 %v1392, 7
        %v1394 = vsub.s32 %v1391, %v1393
        %v1395 = vrot.slane %v1381, %v1394
        %v1396 = vcombine.low %v1340, %v1356
        %v1397 = vcombine.high %v1340, %v1356
        %v1399 = vunpack.c.l.s4 1934713408
        %v1400 = vunpack.c.0.s8 %v1399
        %v1401 = vlaneseq
        %v1402 = vshrl.u32 %v1401, 7
        %v1403 = vsub.s32 %v1400, %v1402
        %v1404 = vrot.slane %v1396, %v1403
        %v1406 = vunpack.c.l.s4 1934713408
        %v1407 = vunpack.c.0.s8 %v1406
        %v1408 = vlaneseq
        %v1409 = vshrl.u32 %v1408, 7
        %v1410 = vsub.s32 %v1407, %v1409
        %v1411 = vrot.slane %v1397, %v1410
        %v1412 = vcombine.low %v1347, %v1363
        %v1413 = vcombine.high %v1347, %v1363
        %v1415 = vunpack.c.l.s4 1934713408
        %v1416 = vunpack.c.0.s8 %v1415
        %v1417 = vlaneseq
        %v1418 = vshrl.u32 %v1417, 7
        %v1419 = vsub.s32 %v1416, %v1418
        %v1420 = vrot.slane %v1412, %v1419
        %v1422 = vunpack.c.l.s4 1934713408
        %v1423 = vunpack.c.0.s8 %v1422
        %v1424 = vlaneseq
        %v1425 = vshrl.u32 %v1424, 7
        %v1426 = vsub.s32 %v1423, %v1425
        %v1427 = vrot.slane %v1413, %v1426
        %v1428 = vcombine.low %v1372, %v1404
        %v1429 = vcombine.high %v1372, %v1404
        %v1430 = vcombine.low %v1379, %v1411
        %v1431 = vcombine.high %v1379, %v1411
        %v1432 = vcombine.low %v1388, %v1420
        %v1433 = vcombine.high %v1388, %v1420
        %v1434 = vcombine.low %v1395, %v1427
        %v1435 = vcombine.high %v1395, %v1427
        %v1436 = vcombine.low %v884, %v886
        %v1437 = vcombine.high %v884, %v886
        %v1439 = vunpack.c.l.s4 1983009808
        %v1440 = vunpack.c.0.s8 %v1439
        %v1441 = vlaneseq
        %v1442 = vshrl.u32 %v1441, 7
        %v1443 = vsub.s32 %v1440, %v1442
        %v1444 = vrot.slane %v1436, %v1443
        %v1446 = vunpack.c.l.s4 1983009808
        %v1447 = vunpack.c.0.s8 %v1446
        %v1448 = vlaneseq
        %v1449 = vshrl.u32 %v1448, 7
        %v1450 = vsub.s32 %v1447, %v1449
        %v1451 = vrot.slane %v1437, %v1450
        %v1452 = vcombine.low %v885, %v887
        %v1453 = vcombine.high %v885, %v887
        %v1455 = vunpack.c.l.s4 1983009808
        %v1456 = vunpack.c.0.s8 %v1455
        %v1457 = vlaneseq
        %v1458 = vshrl.u32 %v1457, 7
        %v1459 = vsub.s32 %v1456, %v1458
        %v1460 = vrot.slane %v1452, %v1459
        %v1462 = vunpack.c.l.s4 1983009808
        %v1463 = vunpack.c.0.s8 %v1462
        %v1464 = vlaneseq
        %v1465 = vshrl.u32 %v1464, 7
        %v1466 = vsub.s32 %v1463, %v1465
        %v1467 = vrot.slane %v1453, %v1466
        %v1468 = vcombine.low %v888, %v890
        %v1469 = vcombine.high %v888, %v890
        %v1471 = vunpack.c.l.s4 1983009808
        %v1472 = vunpack.c.0.s8 %v1471
        %v1473 = vlaneseq
        %v1474 = vshrl.u32 %v1473, 7
        %v1475 = vsub.s32 %v1472, %v1474
        %v1476 = vrot.slane %v1468, %v1475
        %v1478 = vunpack.c.l.s4 1983009808
        %v1479 = vunpack.c.0.s8 %v1478
        %v1480 = vlaneseq
        %v1481 = vshrl.u32 %v1480, 7
        %v1482 = vsub.s32 %v1479, %v1481
        %v1483 = vrot.slane %v1469, %v1482
        %v1484 = vcombine.low %v889, %v891
        %v1485 = vcombine.high %v889, %v891
        %v1487 = vunpack.c.l.s4 1983009808
        %v1488 = vunpack.c.0.s8 %v1487
        %v1489 = vlaneseq
        %v1490 = vshrl.u32 %v1489, 7
        %v1491 = vsub.s32 %v1488, %v1490
        %v1492 = vrot.slane %v1484, %v1491
        %v1494 = vunpack.c.l.s4 1983009808
        %v1495 = vunpack.c.0.s8 %v1494
        %v1496 = vlaneseq
        %v1497 = vshrl.u32 %v1496, 7
        %v1498 = vsub.s32 %v1495, %v1497
        %v1499 = vrot.slane %v1485, %v1498
        %v1500 = vcombine.low %v1444, %v1460
        %v1501 = vcombine.high %v1444, %v1460
        %v1503 = vunpack.c.l.s4 1934713408
        %v1504 = vunpack.c.0.s8 %v1503
        %v1505 = vlaneseq
        %v1506 = vshrl.u32 %v1505, 7
        %v1507 = vsub.s32 %v1504, %v1506
        %v1508 = vrot.slane %v1500, %v1507
        %v1510 = vunpack.c.l.s4 1934713408
        %v1511 = vunpack.c.0.s8 %v1510
        %v1512 = vlaneseq
        %v1513 = vshrl.u32 %v1512, 7
        %v1514 = vsub.s32 %v1511, %v1513
        %v1515 = vrot.slane %v1501, %v1514
        %v1516 = vcombine.low %v1451, %v1467
        %v1517 = vcombine.high %v1451, %v1467
        %v1519 = vunpack.c.l.s4 1934713408
        %v1520 = vunpack.c.0.s8 %v1519
        %v1521 = vlaneseq
        %v1522 = vshrl.u32 %v1521, 7
        %v1523 = vsub.s32 %v1520, %v1522
        %v1524 = vrot.slane %v1516, %v1523
        %v1526 = vunpack.c.l.s4 1934713408
        %v1527 = vunpack.c.0.s8 %v1526
        %v1528 = vlaneseq
        %v1529 = vshrl.u32 %v1528, 7
        %v1530 = vsub.s32 %v1527, %v1529
        %v1531 = vrot.slane %v1517, %v1530
        %v1532 = vcombine.low %v1476, %v1492
        %v1533 = vcombine.high %v1476, %v1492
        %v1535 = vunpack.c.l.s4 1934713408
        %v1536 = vunpack.c.0.s8 %v1535
        %v1537 = vlaneseq
        %v1538 = vshrl.u32 %v1537, 7
        %v1539 = vsub.s32 %v1536, %v1538
        %v1540 = vrot.slane %v1532, %v1539
        %v1542 = vunpack.c.l.s4 1934713408
        %v1543 = vunpack.c.0.s8 %v1542
        %v1544 = vlaneseq
        %v1545 = vshrl.u32 %v1544, 7
        %v1546 = vsub.s32 %v1543, %v1545
        %v1547 = vrot.slane %v1533, %v1546
        %v1548 = vcombine.low %v1483, %v1499
        %v1549 = vcombine.high %v1483, %v1499
        %v1551 = vunpack.c.l.s4 1934713408
        %v1552 = vunpack.c.0.s8 %v1551
        %v1553 = vlaneseq
        %v1554 = vshrl.u32 %v1553, 7
        %v1555 = vsub.s32 %v1552, %v1554
        %v1556 = vrot.slane %v1548, %v1555
        %v1558 = vunpack.c.l.s4 1934713408
        %v1559 = vunpack.c.0.s8 %v1558
        %v1560 = vlaneseq
        %v1561 = vshrl.u32 %v1560, 7
        %v1562 = vsub.s32 %v1559, %v1561
        %v1563 = vrot.slane %v1549, %v1562
        %v1564 = vcombine.low %v1508, %v1540
        %v1565 = vcombine.high %v1508, %v1540
        %v1566 = vcombine.low %v1515, %v1547
        %v1567 = vcombine.high %v1515, %v1547
        %v1568 = vcombine.low %v1524, %v1556
        %v1569 = vcombine.high %v1524, %v1556
        %v1570 = vcombine.low %v1531, %v1563
        %v1571 = vcombine.high %v1531, %v1563
        %v1572 = vcombine.low %v1156, %v1158
        %v1573 = vcombine.high %v1156, %v1158
        %v1575 = vunpack.c.l.s4 1983009808
        %v1576 = vunpack.c.0.s8 %v1575
        %v1577 = vlaneseq
        %v1578 = vshrl.u32 %v1577, 7
        %v1579 = vsub.s32 %v1576, %v1578
        %v1580 = vrot.slane %v1572, %v1579
        %v1582 = vunpack.c.l.s4 1983009808
        %v1583 = vunpack.c.0.s8 %v1582
        %v1584 = vlaneseq
        %v1585 = vshrl.u32 %v1584, 7
        %v1586 = vsub.s32 %v1583, %v1585
        %v1587 = vrot.slane %v1573, %v1586
        %v1588 = vcombine.low %v1157, %v1159
        %v1589 = vcombine.high %v1157, %v1159
        %v1591 = vunpack.c.l.s4 1983009808
        %v1592 = vunpack.c.0.s8 %v1591
        %v1593 = vlaneseq
        %v1594 = vshrl.u32 %v1593, 7
        %v1595 = vsub.s32 %v1592, %v1594
        %v1596 = vrot.slane %v1588, %v1595
        %v1598 = vunpack.c.l.s4 1983009808
        %v1599 = vunpack.c.0.s8 %v1598
        %v1600 = vlaneseq
        %v1601 = vshrl.u32 %v1600, 7
        %v1602 = vsub.s32 %v1599, %v1601
        %v1603 = vrot.slane %v1589, %v1602
        %v1604 = vcombine.low %v1160, %v1162
        %v1605 = vcombine.high %v1160, %v1162
        %v1607 = vunpack.c.l.s4 1983009808
        %v1608 = vunpack.c.0.s8 %v1607
        %v1609 = vlaneseq
        %v1610 = vshrl.u32 %v1609, 7
        %v1611 = vsub.s32 %v1608, %v1610
        %v1612 = vrot.slane %v1604, %v1611
        %v1614 = vunpack.c.l.s4 1983009808
        %v1615 = vunpack.c.0.s8 %v1614
        %v1616 = vlaneseq
        %v1617 = vshrl.u32 %v1616, 7
        %v1618 = vsub.s32 %v1615, %v1617
        %v1619 = vrot.slane %v1605, %v1618
        %v1620 = vcombine.low %v1161, %v1163
        %v1621 = vcombine.high %v1161, %v1163
        %v1623 = vunpack.c.l.s4 1983009808
        %v1624 = vunpack.c.0.s8 %v1623
        %v1625 = vlaneseq
        %v1626 = vshrl.u32 %v1625, 7
        %v1627 = vsub.s32 %v1624, %v1626
        %v1628 = vrot.slane %v1620, %v1627
        %v1630 = vunpack.c.l.s4 1983009808
        %v1631 = vunpack.c.0.s8 %v1630
        %v1632 = vlaneseq
        %v1633 = vshrl.u32 %v1632, 7
        %v1634 = vsub.s32 %v1631, %v1633
        %v1635 = vrot.slane %v1621, %v1634
        %v1636 = vcombine.low %v1580, %v1596
        %v1637 = vcombine.high %v1580, %v1596
        %v1639 = vunpack.c.l.s4 1934713408
        %v1640 = vunpack.c.0.s8 %v1639
        %v1641 = vlaneseq
        %v1642 = vshrl.u32 %v1641, 7
        %v1643 = vsub.s32 %v1640, %v1642
        %v1644 = vrot.slane %v1636, %v1643
        %v1646 = vunpack.c.l.s4 1934713408
        %v1647 = vunpack.c.0.s8 %v1646
        %v1648 = vlaneseq
        %v1649 = vshrl.u32 %v1648, 7
        %v1650 = vsub.s32 %v1647, %v1649
        %v1651 = vrot.slane %v1637, %v1650
        %v1652 = vcombine.low %v1587, %v1603
        %v1653 = vcombine.high %v1587, %v1603
        %v1655 = vunpack.c.l.s4 1934713408
        %v1656 = vunpack.c.0.s8 %v1655
        %v1657 = vlaneseq
        %v1658 = vshrl.u32 %v1657, 7
        %v1659 = vsub.s32 %v1656, %v1658
        %v1660 = vrot.slane %v1652, %v1659
        %v1662 = vunpack.c.l.s4 1934713408
        %v1663 = vunpack.c.0.s8 %v1662
        %v1664 = vlaneseq
        %v1665 = vshrl.u32 %v1664, 7
        %v1666 = vsub.s32 %v1663, %v1665
        %v1667 = vrot.slane %v1653, %v1666
        %v1668 = vcombine.low %v1612, %v1628
        %v1669 = vcombine.high %v1612, %v1628
        %v1671 = vunpack.c.l.s4 1934713408
        %v1672 = vunpack.c.0.s8 %v1671
        %v1673 = vlaneseq
        %v1674 = vshrl.u32 %v1673, 7
        %v1675 = vsub.s32 %v1672, %v1674
        %v1676 = vrot.slane %v1668, %v1675
        %v1678 = vunpack.c.l.s4 1934713408
        %v1679 = vunpack.c.0.s8 %v1678
        %v1680 = vlaneseq
        %v1681 = vshrl.u32 %v1680, 7
        %v1682 = vsub.s32 %v1679, %v1681
        %v1683 = vrot.slane %v1669, %v1682
        %v1684 = vcombine.low %v1619, %v1635
        %v1685 = vcombine.high %v1619, %v1635
        %v1687 = vunpack.c.l.s4 1934713408
        %v1688 = vunpack.c.0.s8 %v1687
        %v1689 = vlaneseq
        %v1690 = vshrl.u32 %v1689, 7
        %v1691 = vsub.s32 %v1688, %v1690
        %v1692 = vrot.slane %v1684, %v1691
        %v1694 = vunpack.c.l.s4 1934713408
        %v1695 = vunpack.c.0.s8 %v1694
        %v1696 = vlaneseq
        %v1697 = vshrl.u32 %v1696, 7
        %v1698 = vsub.s32 %v1695, %v1697
        %v1699 = vrot.slane %v1685, %v1698
        %v1700 = vcombine.low %v1644, %v1676
        %v1701 = vcombine.high %v1644, %v1676
        %v1702 = vcombine.low %v1651, %v1683
        %v1703 = vcombine.high %v1651, %v1683
        %v1704 = vcombine.low %v1660, %v1692
        %v1705 = vcombine.high %v1660, %v1692
        %v1706 = vcombine.low %v1667, %v1699
        %v1707 = vcombine.high %v1667, %v1699
        %v1708 = vpack.c.bf16 %v1428, %v1292
        %v1709 = vpack.c.bf16 %v1429, %v1293
        %v1710 = vpack.c.bf16 %v1430, %v1294
        %v1711 = vpack.c.bf16 %v1431, %v1295
        %v1712 = vpack.c.bf16 %v1432, %v1296
        %v1713 = vpack.c.bf16 %v1433, %v1297
        %v1714 = vpack.c.bf16 %v1434, %v1298
        %v1715 = vpack.c.bf16 %v1435, %v1299
        %v1716 = vpack.c.bf16 %v1700, %v1564
        %v1717 = vpack.c.bf16 %v1701, %v1565
        %v1718 = vpack.c.bf16 %v1702, %v1566
        %v1719 = vpack.c.bf16 %v1703, %v1567
        %v1720 = vpack.c.bf16 %v1704, %v1568
        %v1721 = vpack.c.bf16 %v1705, %v1569
        %v1722 = vpack.c.bf16 %v1706, %v1570
        %v1723 = vpack.c.bf16 %v1707, %v1571
        %s1724 = scalar_lea.vmem [#allocation7], 16
        %v1725 = vld [vmem:[%s1724] sm:$0xf]
        %v1726 = vld [vmem:[%s1724 + $0x4] sm:$0xf]
        %v1727 = vld [vmem:[%s1724 + $0x8] sm:$0xf]
        %v1728 = vld [vmem:[%s1724 + $0xc] sm:$0xf]
        %v1729 = vlaneseq
        %v1730 = vshrl.u32 %v1729, 7
        %v1731 = vadd.s32 %v1730, 8
        %v1732 = vadd.s32 %v1730, 16
        %v1733 = vadd.s32 %v1730, 24
        %v1734 = vadd.s32 %v1730, 32
        %v1735 = vadd.s32 %v1730, 40
        %v1736 = vadd.s32 %v1730, 48
        %v1737 = vadd.s32 %v1730, 56
        %v1738 = vadd.s32 %v1730, 64
        %v1739 = vadd.s32 %v1730, 72
        %v1740 = vadd.s32 %v1730, 80
        %v1741 = vadd.s32 %v1730, 88
        %v1742 = vadd.s32 %v1730, 96
        %v1743 = vadd.s32 %v1730, 104
        %v1744 = vadd.s32 %v1730, 112
        %v1745 = vadd.s32 %v1730, 120
        %v1746 = vadd.s32 %v1730, 128
        %v1747 = vadd.s32 %v1730, 136
        %v1748 = vadd.s32 %v1730, 144
        %v1749 = vadd.s32 %v1730, 152
        %v1750 = vadd.s32 %v1730, 160
        %v1751 = vadd.s32 %v1730, 168
        %v1752 = vadd.s32 %v1730, 176
        %v1753 = vadd.s32 %v1730, 184
        %v1754 = vadd.s32 %v1730, 192
        %v1755 = vadd.s32 %v1730, 200
        %v1756 = vadd.s32 %v1730, 208
        %v1757 = vadd.s32 %v1730, 216
        %v1758 = vadd.s32 %v1730, 224
        %v1759 = vadd.s32 %v1730, 232
        %v1760 = vadd.s32 %v1730, 240
        %v1761 = vadd.s32 %v1730, 248
        %vm1762 = vcmp.lt.s32.totalorder %v1730, 0
        %v1763 = vsub.s32 0, %v1730
        %v1764 = vsel %vm1762, %v1763, %v1730
        %v1765 = vshrl.u32 %v1764, 4
        %v1766 = vand.u32 %v1764, 15
        %v1767 = vsub.s32 0, %v1766
        %v1768 = vsel %vm1762, %v1767, %v1766
        %vm1769 = vcmp.lt.s32.totalorder %v1731, 0
        %v1770 = vsub.s32 0, %v1731
        %v1771 = vsel %vm1769, %v1770, %v1731
        %v1772 = vshrl.u32 %v1771, 4
        %v1773 = vand.u32 %v1771, 15
        %v1774 = vsub.s32 0, %v1773
        %v1775 = vsel %vm1769, %v1774, %v1773
        %vm1776 = vcmp.lt.s32.totalorder %v1732, 0
        %v1777 = vsub.s32 0, %v1732
        %v1778 = vsel %vm1776, %v1777, %v1732
        %v1779 = vshrl.u32 %v1778, 4
        %v1780 = vand.u32 %v1778, 15
        %v1781 = vsub.s32 0, %v1780
        %v1782 = vsel %vm1776, %v1781, %v1780
        %vm1783 = vcmp.lt.s32.totalorder %v1733, 0
        %v1784 = vsub.s32 0, %v1733
        %v1785 = vsel %vm1783, %v1784, %v1733
        %v1786 = vshrl.u32 %v1785, 4
        %v1787 = vand.u32 %v1785, 15
        %v1788 = vsub.s32 0, %v1787
        %v1789 = vsel %vm1783, %v1788, %v1787
        %vm1790 = vcmp.lt.s32.totalorder %v1734, 0
        %v1791 = vsub.s32 0, %v1734
        %v1792 = vsel %vm1790, %v1791, %v1734
        %v1793 = vshrl.u32 %v1792, 4
        %v1794 = vand.u32 %v1792, 15
        %v1795 = vsub.s32 0, %v1794
        %v1796 = vsel %vm1790, %v1795, %v1794
        %vm1797 = vcmp.lt.s32.totalorder %v1735, 0
        %v1798 = vsub.s32 0, %v1735
        %v1799 = vsel %vm1797, %v1798, %v1735
        %v1800 = vshrl.u32 %v1799, 4
        %v1801 = vand.u32 %v1799, 15
        %v1802 = vsub.s32 0, %v1801
        %v1803 = vsel %vm1797, %v1802, %v1801
        %vm1804 = vcmp.lt.s32.totalorder %v1736, 0
        %v1805 = vsub.s32 0, %v1736
        %v1806 = vsel %vm1804, %v1805, %v1736
        %v1807 = vshrl.u32 %v1806, 4
        %v1808 = vand.u32 %v1806, 15
        %v1809 = vsub.s32 0, %v1808
        %v1810 = vsel %vm1804, %v1809, %v1808
        %vm1811 = vcmp.lt.s32.totalorder %v1737, 0
        %v1812 = vsub.s32 0, %v1737
        %v1813 = vsel %vm1811, %v1812, %v1737
        %v1814 = vshrl.u32 %v1813, 4
        %v1815 = vand.u32 %v1813, 15
        %v1816 = vsub.s32 0, %v1815
        %v1817 = vsel %vm1811, %v1816, %v1815
        %vm1818 = vcmp.lt.s32.totalorder %v1738, 0
        %v1819 = vsub.s32 0, %v1738
        %v1820 = vsel %vm1818, %v1819, %v1738
        %v1821 = vshrl.u32 %v1820, 4
        %v1822 = vand.u32 %v1820, 15
        %v1823 = vsub.s32 0, %v1822
        %v1824 = vsel %vm1818, %v1823, %v1822
        %vm1825 = vcmp.lt.s32.totalorder %v1739, 0
        %v1826 = vsub.s32 0, %v1739
        %v1827 = vsel %vm1825, %v1826, %v1739
        %v1828 = vshrl.u32 %v1827, 4
        %v1829 = vand.u32 %v1827, 15
        %v1830 = vsub.s32 0, %v1829
        %v1831 = vsel %vm1825, %v1830, %v1829
        %vm1832 = vcmp.lt.s32.totalorder %v1740, 0
        %v1833 = vsub.s32 0, %v1740
        %v1834 = vsel %vm1832, %v1833, %v1740
        %v1835 = vshrl.u32 %v1834, 4
        %v1836 = vand.u32 %v1834, 15
        %v1837 = vsub.s32 0, %v1836
        %v1838 = vsel %vm1832, %v1837, %v1836
        %vm1839 = vcmp.lt.s32.totalorder %v1741, 0
        %v1840 = vsub.s32 0, %v1741
        %v1841 = vsel %vm1839, %v1840, %v1741
        %v1842 = vshrl.u32 %v1841, 4
        %v1843 = vand.u32 %v1841, 15
        %v1844 = vsub.s32 0, %v1843
        %v1845 = vsel %vm1839, %v1844, %v1843
        %vm1846 = vcmp.lt.s32.totalorder %v1742, 0
        %v1847 = vsub.s32 0, %v1742
        %v1848 = vsel %vm1846, %v1847, %v1742
        %v1849 = vshrl.u32 %v1848, 4
        %v1850 = vand.u32 %v1848, 15
        %v1851 = vsub.s32 0, %v1850
        %v1852 = vsel %vm1846, %v1851, %v1850
        %vm1853 = vcmp.lt.s32.totalorder %v1743, 0
        %v1854 = vsub.s32 0, %v1743
        %v1855 = vsel %vm1853, %v1854, %v1743
        %v1856 = vshrl.u32 %v1855, 4
        %v1857 = vand.u32 %v1855, 15
        %v1858 = vsub.s32 0, %v1857
        %v1859 = vsel %vm1853, %v1858, %v1857
        %vm1860 = vcmp.lt.s32.totalorder %v1744, 0
        %v1861 = vsub.s32 0, %v1744
        %v1862 = vsel %vm1860, %v1861, %v1744
        %v1863 = vshrl.u32 %v1862, 4
        %v1864 = vand.u32 %v1862, 15
        %v1865 = vsub.s32 0, %v1864
        %v1866 = vsel %vm1860, %v1865, %v1864
        %vm1867 = vcmp.lt.s32.totalorder %v1745, 0
        %v1868 = vsub.s32 0, %v1745
        %v1869 = vsel %vm1867, %v1868, %v1745
        %v1870 = vshrl.u32 %v1869, 4
        %v1871 = vand.u32 %v1869, 15
        %v1872 = vsub.s32 0, %v1871
        %v1873 = vsel %vm1867, %v1872, %v1871
        %vm1874 = vcmp.lt.s32.totalorder %v1746, 0
        %v1875 = vsub.s32 0, %v1746
        %v1876 = vsel %vm1874, %v1875, %v1746
        %v1877 = vshrl.u32 %v1876, 4
        %v1878 = vand.u32 %v1876, 15
        %v1879 = vsub.s32 0, %v1878
        %v1880 = vsel %vm1874, %v1879, %v1878
        %vm1881 = vcmp.lt.s32.totalorder %v1747, 0
        %v1882 = vsub.s32 0, %v1747
        %v1883 = vsel %vm1881, %v1882, %v1747
        %v1884 = vshrl.u32 %v1883, 4
        %v1885 = vand.u32 %v1883, 15
        %v1886 = vsub.s32 0, %v1885
        %v1887 = vsel %vm1881, %v1886, %v1885
        %vm1888 = vcmp.lt.s32.totalorder %v1748, 0
        %v1889 = vsub.s32 0, %v1748
        %v1890 = vsel %vm1888, %v1889, %v1748
        %v1891 = vshrl.u32 %v1890, 4
        %v1892 = vand.u32 %v1890, 15
        %v1893 = vsub.s32 0, %v1892
        %v1894 = vsel %vm1888, %v1893, %v1892
        %vm1895 = vcmp.lt.s32.totalorder %v1749, 0
        %v1896 = vsub.s32 0, %v1749
        %v1897 = vsel %vm1895, %v1896, %v1749
        %v1898 = vshrl.u32 %v1897, 4
        %v1899 = vand.u32 %v1897, 15
        %v1900 = vsub.s32 0, %v1899
        %v1901 = vsel %vm1895, %v1900, %v1899
        %vm1902 = vcmp.lt.s32.totalorder %v1750, 0
        %v1903 = vsub.s32 0, %v1750
        %v1904 = vsel %vm1902, %v1903, %v1750
        %v1905 = vshrl.u32 %v1904, 4
        %v1906 = vand.u32 %v1904, 15
        %v1907 = vsub.s32 0, %v1906
        %v1908 = vsel %vm1902, %v1907, %v1906
        %vm1909 = vcmp.lt.s32.totalorder %v1751, 0
        %v1910 = vsub.s32 0, %v1751
        %v1911 = vsel %vm1909, %v1910, %v1751
        %v1912 = vshrl.u32 %v1911, 4
        %v1913 = vand.u32 %v1911, 15
        %v1914 = vsub.s32 0, %v1913
        %v1915 = vsel %vm1909, %v1914, %v1913
        %vm1916 = vcmp.lt.s32.totalorder %v1752, 0
        %v1917 = vsub.s32 0, %v1752
        %v1918 = vsel %vm1916, %v1917, %v1752
        %v1919 = vshrl.u32 %v1918, 4
        %v1920 = vand.u32 %v1918, 15
        %v1921 = vsub.s32 0, %v1920
        %v1922 = vsel %vm1916, %v1921, %v1920
        %vm1923 = vcmp.lt.s32.totalorder %v1753, 0
        %v1924 = vsub.s32 0, %v1753
        %v1925 = vsel %vm1923, %v1924, %v1753
        %v1926 = vshrl.u32 %v1925, 4
        %v1927 = vand.u32 %v1925, 15
        %v1928 = vsub.s32 0, %v1927
        %v1929 = vsel %vm1923, %v1928, %v1927
        %vm1930 = vcmp.lt.s32.totalorder %v1754, 0
        %v1931 = vsub.s32 0, %v1754
        %v1932 = vsel %vm1930, %v1931, %v1754
        %v1933 = vshrl.u32 %v1932, 4
        %v1934 = vand.u32 %v1932, 15
        %v1935 = vsub.s32 0, %v1934
        %v1936 = vsel %vm1930, %v1935, %v1934
        %vm1937 = vcmp.lt.s32.totalorder %v1755, 0
        %v1938 = vsub.s32 0, %v1755
        %v1939 = vsel %vm1937, %v1938, %v1755
        %v1940 = vshrl.u32 %v1939, 4
        %v1941 = vand.u32 %v1939, 15
        %v1942 = vsub.s32 0, %v1941
        %v1943 = vsel %vm1937, %v1942, %v1941
        %vm1944 = vcmp.lt.s32.totalorder %v1756, 0
        %v1945 = vsub.s32 0, %v1756
        %v1946 = vsel %vm1944, %v1945, %v1756
        %v1947 = vshrl.u32 %v1946, 4
        %v1948 = vand.u32 %v1946, 15
        %v1949 = vsub.s32 0, %v1948
        %v1950 = vsel %vm1944, %v1949, %v1948
        %vm1951 = vcmp.lt.s32.totalorder %v1757, 0
        %v1952 = vsub.s32 0, %v1757
        %v1953 = vsel %vm1951, %v1952, %v1757
        %v1954 = vshrl.u32 %v1953, 4
        %v1955 = vand.u32 %v1953, 15
        %v1956 = vsub.s32 0, %v1955
        %v1957 = vsel %vm1951, %v1956, %v1955
        %vm1958 = vcmp.lt.s32.totalorder %v1758, 0
        %v1959 = vsub.s32 0, %v1758
        %v1960 = vsel %vm1958, %v1959, %v1758
        %v1961 = vshrl.u32 %v1960, 4
        %v1962 = vand.u32 %v1960, 15
        %v1963 = vsub.s32 0, %v1962
        %v1964 = vsel %vm1958, %v1963, %v1962
        %vm1965 = vcmp.lt.s32.totalorder %v1759, 0
        %v1966 = vsub.s32 0, %v1759
        %v1967 = vsel %vm1965, %v1966, %v1759
        %v1968 = vshrl.u32 %v1967, 4
        %v1969 = vand.u32 %v1967, 15
        %v1970 = vsub.s32 0, %v1969
        %v1971 = vsel %vm1965, %v1970, %v1969
        %vm1972 = vcmp.lt.s32.totalorder %v1760, 0
        %v1973 = vsub.s32 0, %v1760
        %v1974 = vsel %vm1972, %v1973, %v1760
        %v1975 = vshrl.u32 %v1974, 4
        %v1976 = vand.u32 %v1974, 15
        %v1977 = vsub.s32 0, %v1976
        %v1978 = vsel %vm1972, %v1977, %v1976
        %vm1979 = vcmp.lt.s32.totalorder %v1761, 0
        %v1980 = vsub.s32 0, %v1761
        %v1981 = vsel %vm1979, %v1980, %v1761
        %v1982 = vshrl.u32 %v1981, 4
        %v1983 = vand.u32 %v1981, 15
        %v1984 = vsub.s32 0, %v1983
        %v1985 = vsel %vm1979, %v1984, %v1983
        %vm1986 = vcmp.ne.s32.totalorder %v1768, 0
        %vm1987 = vcmp.ne.s32.totalorder %v1775, 0
        %vm1988 = vcmp.ne.s32.totalorder %v1782, 0
        %vm1989 = vcmp.ne.s32.totalorder %v1789, 0
        %vm1990 = vcmp.ne.s32.totalorder %v1796, 0
        %vm1991 = vcmp.ne.s32.totalorder %v1803, 0
        %vm1992 = vcmp.ne.s32.totalorder %v1810, 0
        %vm1993 = vcmp.ne.s32.totalorder %v1817, 0
        %vm1994 = vcmp.ne.s32.totalorder %v1824, 0
        %vm1995 = vcmp.ne.s32.totalorder %v1831, 0
        %vm1996 = vcmp.ne.s32.totalorder %v1838, 0
        %vm1997 = vcmp.ne.s32.totalorder %v1845, 0
        %vm1998 = vcmp.ne.s32.totalorder %v1852, 0
        %vm1999 = vcmp.ne.s32.totalorder %v1859, 0
        %vm2000 = vcmp.ne.s32.totalorder %v1866, 0
        %vm2001 = vcmp.ne.s32.totalorder %v1873, 0
        %vm2002 = vcmp.ne.s32.totalorder %v1880, 0
        %vm2003 = vcmp.ne.s32.totalorder %v1887, 0
        %vm2004 = vcmp.ne.s32.totalorder %v1894, 0
        %vm2005 = vcmp.ne.s32.totalorder %v1901, 0
        %vm2006 = vcmp.ne.s32.totalorder %v1908, 0
        %vm2007 = vcmp.ne.s32.totalorder %v1915, 0
        %vm2008 = vcmp.ne.s32.totalorder %v1922, 0
        %vm2009 = vcmp.ne.s32.totalorder %v1929, 0
        %vm2010 = vcmp.ne.s32.totalorder %v1936, 0
        %vm2011 = vcmp.ne.s32.totalorder %v1943, 0
        %vm2012 = vcmp.ne.s32.totalorder %v1950, 0
        %vm2013 = vcmp.ne.s32.totalorder %v1957, 0
        %vm2014 = vcmp.ne.s32.totalorder %v1964, 0
        %vm2015 = vcmp.ne.s32.totalorder %v1971, 0
        %vm2016 = vcmp.ne.s32.totalorder %v1978, 0
        %vm2017 = vcmp.ne.s32.totalorder %v1985, 0
        %vm2018 = vcmp.lt.s32.totalorder %v1768, 0
        %vm2019 = vcmp.lt.s32.totalorder %v1775, 0
        %vm2020 = vcmp.lt.s32.totalorder %v1782, 0
        %vm2021 = vcmp.lt.s32.totalorder %v1789, 0
        %vm2022 = vcmp.lt.s32.totalorder %v1796, 0
        %vm2023 = vcmp.lt.s32.totalorder %v1803, 0
        %vm2024 = vcmp.lt.s32.totalorder %v1810, 0
        %vm2025 = vcmp.lt.s32.totalorder %v1817, 0
        %vm2026 = vcmp.lt.s32.totalorder %v1824, 0
        %vm2027 = vcmp.lt.s32.totalorder %v1831, 0
        %vm2028 = vcmp.lt.s32.totalorder %v1838, 0
        %vm2029 = vcmp.lt.s32.totalorder %v1845, 0
        %vm2030 = vcmp.lt.s32.totalorder %v1852, 0
        %vm2031 = vcmp.lt.s32.totalorder %v1859, 0
        %vm2032 = vcmp.lt.s32.totalorder %v1866, 0
        %vm2033 = vcmp.lt.s32.totalorder %v1873, 0
        %vm2034 = vcmp.lt.s32.totalorder %v1880, 0
        %vm2035 = vcmp.lt.s32.totalorder %v1887, 0
        %vm2036 = vcmp.lt.s32.totalorder %v1894, 0
        %vm2037 = vcmp.lt.s32.totalorder %v1901, 0
        %vm2038 = vcmp.lt.s32.totalorder %v1908, 0
        %vm2039 = vcmp.lt.s32.totalorder %v1915, 0
        %vm2040 = vcmp.lt.s32.totalorder %v1922, 0
        %vm2041 = vcmp.lt.s32.totalorder %v1929, 0
        %vm2042 = vcmp.lt.s32.totalorder %v1936, 0
        %vm2043 = vcmp.lt.s32.totalorder %v1943, 0
        %vm2044 = vcmp.lt.s32.totalorder %v1950, 0
        %vm2045 = vcmp.lt.s32.totalorder %v1957, 0
        %vm2046 = vcmp.lt.s32.totalorder %v1964, 0
        %vm2047 = vcmp.lt.s32.totalorder %v1971, 0
        %vm2048 = vcmp.lt.s32.totalorder %v1978, 0
        %vm2049 = vcmp.lt.s32.totalorder %v1985, 0
        %vm2050 = vmand %vm2018, %vm1986
        %vm2051 = vmand %vm2019, %vm1987
        %vm2052 = vmand %vm2020, %vm1988
        %vm2053 = vmand %vm2021, %vm1989
        %vm2054 = vmand %vm2022, %vm1990
        %vm2055 = vmand %vm2023, %vm1991
        %vm2056 = vmand %vm2024, %vm1992
        %vm2057 = vmand %vm2025, %vm1993
        %vm2058 = vmand %vm2026, %vm1994
        %vm2059 = vmand %vm2027, %vm1995
        %vm2060 = vmand %vm2028, %vm1996
        %vm2061 = vmand %vm2029, %vm1997
        %vm2062 = vmand %vm2030, %vm1998
        %vm2063 = vmand %vm2031, %vm1999
        %vm2064 = vmand %vm2032, %vm2000
        %vm2065 = vmand %vm2033, %vm2001
        %vm2066 = vmand %vm2034, %vm2002
        %vm2067 = vmand %vm2035, %vm2003
        %vm2068 = vmand %vm2036, %vm2004
        %vm2069 = vmand %vm2037, %vm2005
        %vm2070 = vmand %vm2038, %vm2006
        %vm2071 = vmand %vm2039, %vm2007
        %vm2072 = vmand %vm2040, %vm2008
        %vm2073 = vmand %vm2041, %vm2009
        %vm2074 = vmand %vm2042, %vm2010
        %vm2075 = vmand %vm2043, %vm2011
        %vm2076 = vmand %vm2044, %vm2012
        %vm2077 = vmand %vm2045, %vm2013
        %vm2078 = vmand %vm2046, %vm2014
        %vm2079 = vmand %vm2047, %vm2015
        %vm2080 = vmand %vm2048, %vm2016
        %vm2081 = vmand %vm2049, %vm2017
        %v2082 = vadd.s32 %v1768, 16
        %v2083 = vadd.s32 %v1775, 16
        %v2084 = vadd.s32 %v1782, 16
        %v2085 = vadd.s32 %v1789, 16
        %v2086 = vadd.s32 %v1796, 16
        %v2087 = vadd.s32 %v1803, 16
        %v2088 = vadd.s32 %v1810, 16
        %v2089 = vadd.s32 %v1817, 16
        %v2090 = vadd.s32 %v1824, 16
        %v2091 = vadd.s32 %v1831, 16
        %v2092 = vadd.s32 %v1838, 16
        %v2093 = vadd.s32 %v1845, 16
        %v2094 = vadd.s32 %v1852, 16
        %v2095 = vadd.s32 %v1859, 16
        %v2096 = vadd.s32 %v1866, 16
        %v2097 = vadd.s32 %v1873, 16
        %v2098 = vadd.s32 %v1880, 16
        %v2099 = vadd.s32 %v1887, 16
        %v2100 = vadd.s32 %v1894, 16
        %v2101 = vadd.s32 %v1901, 16
        %v2102 = vadd.s32 %v1908, 16
        %v2103 = vadd.s32 %v1915, 16
        %v2104 = vadd.s32 %v1922, 16
        %v2105 = vadd.s32 %v1929, 16
        %v2106 = vadd.s32 %v1936, 16
        %v2107 = vadd.s32 %v1943, 16
        %v2108 = vadd.s32 %v1950, 16
        %v2109 = vadd.s32 %v1957, 16
        %v2110 = vadd.s32 %v1964, 16
        %v2111 = vadd.s32 %v1971, 16
        %v2112 = vadd.s32 %v1978, 16
        %v2113 = vadd.s32 %v1985, 16
        %v2114 = vsel %vm2050, %v2082, %v1768
        %v2115 = vsel %vm2051, %v2083, %v1775
        %v2116 = vsel %vm2052, %v2084, %v1782
        %v2117 = vsel %vm2053, %v2085, %v1789
        %v2118 = vsel %vm2054, %v2086, %v1796
        %v2119 = vsel %vm2055, %v2087, %v1803
        %v2120 = vsel %vm2056, %v2088, %v1810
        %v2121 = vsel %vm2057, %v2089, %v1817
        %v2122 = vsel %vm2058, %v2090, %v1824
        %v2123 = vsel %vm2059, %v2091, %v1831
        %v2124 = vsel %vm2060, %v2092, %v1838
        %v2125 = vsel %vm2061, %v2093, %v1845
        %v2126 = vsel %vm2062, %v2094, %v1852
        %v2127 = vsel %vm2063, %v2095, %v1859
        %v2128 = vsel %vm2064, %v2096, %v1866
        %v2129 = vsel %vm2065, %v2097, %v1873
        %v2130 = vsel %vm2066, %v2098, %v1880
        %v2131 = vsel %vm2067, %v2099, %v1887
        %v2132 = vsel %vm2068, %v2100, %v1894
        %v2133 = vsel %vm2069, %v2101, %v1901
        %v2134 = vsel %vm2070, %v2102, %v1908
        %v2135 = vsel %vm2071, %v2103, %v1915
        %v2136 = vsel %vm2072, %v2104, %v1922
        %v2137 = vsel %vm2073, %v2105, %v1929
        %v2138 = vsel %vm2074, %v2106, %v1936
        %v2139 = vsel %vm2075, %v2107, %v1943
        %v2140 = vsel %vm2076, %v2108, %v1950
        %v2141 = vsel %vm2077, %v2109, %v1957
        %v2142 = vsel %vm2078, %v2110, %v1964
        %v2143 = vsel %vm2079, %v2111, %v1971
        %v2144 = vsel %vm2080, %v2112, %v1978
        %v2145 = vsel %vm2081, %v2113, %v1985
        %v2146 = vrot.slane %v1292, 7
        %v2147 = vrot.slane %v1428, 7
        %v2148 = vrot.slane %v1293, 7
        %v2149 = vrot.slane %v1429, 7
        %v2150 = vrot.slane %v1294, 7
        %v2151 = vrot.slane %v1430, 7
        %v2152 = vrot.slane %v1295, 7
        %v2153 = vrot.slane %v1431, 7
        %v2154 = vrot.slane %v1296, 7
        %v2155 = vrot.slane %v1432, 7
        %v2156 = vrot.slane %v1297, 7
        %v2157 = vrot.slane %v1433, 7
        %v2158 = vrot.slane %v1298, 7
        %v2159 = vrot.slane %v1434, 7
        %v2160 = vrot.slane %v1299, 7
        %v2161 = vrot.slane %v1435, 7
        %v2162 = vrot.slane %v1564, 7
        %v2163 = vrot.slane %v1700, 7
        %v2164 = vrot.slane %v1565, 7
        %v2165 = vrot.slane %v1701, 7
        %v2166 = vrot.slane %v1566, 7
        %v2167 = vrot.slane %v1702, 7
        %v2168 = vrot.slane %v1567, 7
        %v2169 = vrot.slane %v1703, 7
        %v2170 = vrot.slane %v1568, 7
        %v2171 = vrot.slane %v1704, 7
        %v2172 = vrot.slane %v1569, 7
        %v2173 = vrot.slane %v1705, 7
        %v2174 = vrot.slane %v1570, 7
        %v2175 = vrot.slane %v1706, 7
        %v2176 = vrot.slane %v1571, 7
        %v2177 = vrot.slane %v1707, 7
        %vm2178 = vcmp.lt.s32.totalorder %v1730, 1
        %v2179 = vsel %vm2178, %v2176, %v2177
        %v2180 = vsel %vm2178, %v2175, %v2176
        %v2181 = vsel %vm2178, %v2174, %v2175
        %v2182 = vsel %vm2178, %v2173, %v2174
        %v2183 = vsel %vm2178, %v2172, %v2173
        %v2184 = vsel %vm2178, %v2171, %v2172
        %v2185 = vsel %vm2178, %v2170, %v2171
        %v2186 = vsel %vm2178, %v2169, %v2170
        %v2187 = vsel %vm2178, %v2168, %v2169
        %v2188 = vsel %vm2178, %v2167, %v2168
        %v2189 = vsel %vm2178, %v2166, %v2167
        %v2190 = vsel %vm2178, %v2165, %v2166
        %v2191 = vsel %vm2178, %v2164, %v2165
        %v2192 = vsel %vm2178, %v2163, %v2164
        %v2193 = vsel %vm2178, %v2162, %v2163
        %v2194 = vsel %vm2178, %v2161, %v2162
        %v2195 = vsel %vm2178, %v2160, %v2161
        %v2196 = vsel %vm2178, %v2159, %v2160
        %v2197 = vsel %vm2178, %v2158, %v2159
        %v2198 = vsel %vm2178, %v2157, %v2158
        %v2199 = vsel %vm2178, %v2156, %v2157
        %v2200 = vsel %vm2178, %v2155, %v2156
        %v2201 = vsel %vm2178, %v2154, %v2155
        %v2202 = vsel %vm2178, %v2153, %v2154
        %v2203 = vsel %vm2178, %v2152, %v2153
        %v2204 = vsel %vm2178, %v2151, %v2152
        %v2205 = vsel %vm2178, %v2150, %v2151
        %v2206 = vsel %vm2178, %v2149, %v2150
        %v2207 = vsel %vm2178, %v2148, %v2149
        %v2208 = vsel %vm2178, %v2147, %v2148
        %v2209 = vsel %vm2178, %v2146, %v2147
        %v2210 = vsel %vm2178, %v2177, %v2146
        %vm2211 = vcmp.ge.s32.totalorder %v2114, 1
        %vm2212 = vcmp.ge.s32.totalorder %v2115, 1
        %vm2213 = vcmp.ge.s32.totalorder %v2116, 1
        %vm2214 = vcmp.ge.s32.totalorder %v2117, 1
        %vm2215 = vcmp.ge.s32.totalorder %v2118, 1
        %vm2216 = vcmp.ge.s32.totalorder %v2119, 1
        %vm2217 = vcmp.ge.s32.totalorder %v2120, 1
        %vm2218 = vcmp.ge.s32.totalorder %v2121, 1
        %vm2219 = vcmp.ge.s32.totalorder %v2122, 1
        %vm2220 = vcmp.ge.s32.totalorder %v2123, 1
        %vm2221 = vcmp.ge.s32.totalorder %v2124, 1
        %vm2222 = vcmp.ge.s32.totalorder %v2125, 1
        %vm2223 = vcmp.ge.s32.totalorder %v2126, 1
        %vm2224 = vcmp.ge.s32.totalorder %v2127, 1
        %vm2225 = vcmp.ge.s32.totalorder %v2128, 1
        %vm2226 = vcmp.ge.s32.totalorder %v2129, 1
        %vm2227 = vcmp.ge.s32.totalorder %v2130, 1
        %vm2228 = vcmp.ge.s32.totalorder %v2131, 1
        %vm2229 = vcmp.ge.s32.totalorder %v2132, 1
        %vm2230 = vcmp.ge.s32.totalorder %v2133, 1
        %vm2231 = vcmp.ge.s32.totalorder %v2134, 1
        %vm2232 = vcmp.ge.s32.totalorder %v2135, 1
        %vm2233 = vcmp.ge.s32.totalorder %v2136, 1
        %vm2234 = vcmp.ge.s32.totalorder %v2137, 1
        %vm2235 = vcmp.ge.s32.totalorder %v2138, 1
        %vm2236 = vcmp.ge.s32.totalorder %v2139, 1
        %vm2237 = vcmp.ge.s32.totalorder %v2140, 1
        %vm2238 = vcmp.ge.s32.totalorder %v2141, 1
        %vm2239 = vcmp.ge.s32.totalorder %v2142, 1
        %vm2240 = vcmp.ge.s32.totalorder %v2143, 1
        %vm2241 = vcmp.ge.s32.totalorder %v2144, 1
        %vm2242 = vcmp.ge.s32.totalorder %v2145, 1
        %v2243 = vsel %vm2211, 1, 0
        %v2244 = vsel %vm2212, 1, 0
        %v2245 = vsel %vm2213, 1, 0
        %v2246 = vsel %vm2214, 1, 0
        %v2247 = vsel %vm2215, 1, 0
        %v2248 = vsel %vm2216, 1, 0
        %v2249 = vsel %vm2217, 1, 0
        %v2250 = vsel %vm2218, 1, 0
        %v2251 = vsel %vm2219, 1, 0
        %v2252 = vsel %vm2220, 1, 0
        %v2253 = vsel %vm2221, 1, 0
        %v2254 = vsel %vm2222, 1, 0
        %v2255 = vsel %vm2223, 1, 0
        %v2256 = vsel %vm2224, 1, 0
        %v2257 = vsel %vm2225, 1, 0
        %v2258 = vsel %vm2226, 1, 0
        %v2259 = vsel %vm2227, 1, 0
        %v2260 = vsel %vm2228, 1, 0
        %v2261 = vsel %vm2229, 1, 0
        %v2262 = vsel %vm2230, 1, 0
        %v2263 = vsel %vm2231, 1, 0
        %v2264 = vsel %vm2232, 1, 0
        %v2265 = vsel %vm2233, 1, 0
        %v2266 = vsel %vm2234, 1, 0
        %v2267 = vsel %vm2235, 1, 0
        %v2268 = vsel %vm2236, 1, 0
        %v2269 = vsel %vm2237, 1, 0
        %v2270 = vsel %vm2238, 1, 0
        %v2271 = vsel %vm2239, 1, 0
        %v2272 = vsel %vm2240, 1, 0
        %v2273 = vsel %vm2241, 1, 0
        %v2274 = vsel %vm2242, 1, 0
        %v2275 = vcvt.s32.f32 %v2243
        %v2276 = vcvt.s32.f32 %v2244
        %v2277 = vcvt.s32.f32 %v2245
        %v2278 = vcvt.s32.f32 %v2246
        %v2279 = vcvt.s32.f32 %v2247
        %v2280 = vcvt.s32.f32 %v2248
        %v2281 = vcvt.s32.f32 %v2249
        %v2282 = vcvt.s32.f32 %v2250
        %v2283 = vcvt.s32.f32 %v2251
        %v2284 = vcvt.s32.f32 %v2252
        %v2285 = vcvt.s32.f32 %v2253
        %v2286 = vcvt.s32.f32 %v2254
        %v2287 = vcvt.s32.f32 %v2255
        %v2288 = vcvt.s32.f32 %v2256
        %v2289 = vcvt.s32.f32 %v2257
        %v2290 = vcvt.s32.f32 %v2258
        %v2291 = vcvt.s32.f32 %v2259
        %v2292 = vcvt.s32.f32 %v2260
        %v2293 = vcvt.s32.f32 %v2261
        %v2294 = vcvt.s32.f32 %v2262
        %v2295 = vcvt.s32.f32 %v2263
        %v2296 = vcvt.s32.f32 %v2264
        %v2297 = vcvt.s32.f32 %v2265
        %v2298 = vcvt.s32.f32 %v2266
        %v2299 = vcvt.s32.f32 %v2267
        %v2300 = vcvt.s32.f32 %v2268
        %v2301 = vcvt.s32.f32 %v2269
        %v2302 = vcvt.s32.f32 %v2270
        %v2303 = vcvt.s32.f32 %v2271
        %v2304 = vcvt.s32.f32 %v2272
        %v2305 = vcvt.s32.f32 %v2273
        %v2306 = vcvt.s32.f32 %v2274
        %v2307 = vmul.f32 %v2210, %v2275
        %v2308 = vmul.f32 %v2209, %v2276
        %v2309 = vmul.f32 %v2208, %v2277
        %v2310 = vmul.f32 %v2207, %v2278
        %v2311 = vmul.f32 %v2206, %v2279
        %v2312 = vmul.f32 %v2205, %v2280
        %v2313 = vmul.f32 %v2204, %v2281
        %v2314 = vmul.f32 %v2203, %v2282
        %v2315 = vmul.f32 %v2202, %v2283
        %v2316 = vmul.f32 %v2201, %v2284
        %v2317 = vmul.f32 %v2200, %v2285
        %v2318 = vmul.f32 %v2199, %v2286
        %v2319 = vmul.f32 %v2198, %v2287
        %v2320 = vmul.f32 %v2197, %v2288
        %v2321 = vmul.f32 %v2196, %v2289
        %v2322 = vmul.f32 %v2195, %v2290
        %v2323 = vmul.f32 %v2194, %v2291
        %v2324 = vmul.f32 %v2193, %v2292
        %v2325 = vmul.f32 %v2192, %v2293
        %v2326 = vmul.f32 %v2191, %v2294
        %v2327 = vmul.f32 %v2190, %v2295
        %v2328 = vmul.f32 %v2189, %v2296
        %v2329 = vmul.f32 %v2188, %v2297
        %v2330 = vmul.f32 %v2187, %v2298
        %v2331 = vmul.f32 %v2186, %v2299
        %v2332 = vmul.f32 %v2185, %v2300
        %v2333 = vmul.f32 %v2184, %v2301
        %v2334 = vmul.f32 %v2183, %v2302
        %v2335 = vmul.f32 %v2182, %v2303
        %v2336 = vmul.f32 %v2181, %v2304
        %v2337 = vmul.f32 %v2180, %v2305
        %v2338 = vmul.f32 %v2179, %v2306
        %v2339 = vpack.c.bf16 %v2308, %v2307
        %v2340 = vpack.c.bf16 %v2310, %v2309
        %v2341 = vpack.c.bf16 %v2312, %v2311
        %v2342 = vpack.c.bf16 %v2314, %v2313
        %v2343 = vpack.c.bf16 %v2316, %v2315
        %v2344 = vpack.c.bf16 %v2318, %v2317
        %v2345 = vpack.c.bf16 %v2320, %v2319
        %v2346 = vpack.c.bf16 %v2322, %v2321
        %v2347 = vpack.c.bf16 %v2324, %v2323
        %v2348 = vpack.c.bf16 %v2326, %v2325
        %v2349 = vpack.c.bf16 %v2328, %v2327
        %v2350 = vpack.c.bf16 %v2330, %v2329
        %v2351 = vpack.c.bf16 %v2332, %v2331
        %v2352 = vpack.c.bf16 %v2334, %v2333
        %v2353 = vpack.c.bf16 %v2336, %v2335
        %v2354 = vpack.c.bf16 %v2338, %v2337
        %v2355 = vld [vmem:[#allocation7] sm:$0xf]
        %v2356 = vld [vmem:[#allocation7 + $0x4] sm:$0xf]
        %v2357 = vld [vmem:[#allocation7 + $0x8] sm:$0xf]
        %v2358 = vld [vmem:[#allocation7 + $0xc] sm:$0xf]
        %v2363 = vunpack.c.l.b16 %v2355
        %v2364 = vunpack.c.l.b16 %v2356
        %v2365 = vunpack.c.l.b16 %v2357
        %v2366 = vunpack.c.l.b16 %v2358
        %v2367 = vpack.c.b16 %v2364, %v2363
        %v2368 = vpack.c.b16 %v2366, %v2365
        %vm2371 = vcmask 261120
        %v2373 = vsel %vm2371, %v2339, 0
        %v2376 = vsel %vm2371, %v2340, 0
        %v2379 = vsel %vm2371, %v2341, 0
        %v2382 = vsel %vm2371, %v2342, 0
        %v2385 = vsel %vm2371, %v2343, 0
        %v2388 = vsel %vm2371, %v2344, 0
        %v2391 = vsel %vm2371, %v2345, 0
        %v2394 = vsel %vm2371, %v2346, 0
        %v2397 = vsel %vm2371, %v2347, 0
        %v2400 = vsel %vm2371, %v2348, 0
        %v2403 = vsel %vm2371, %v2349, 0
        %v2406 = vsel %vm2371, %v2350, 0
        %v2409 = vsel %vm2371, %v2351, 0
        %v2412 = vsel %vm2371, %v2352, 0
        %v2415 = vsel %vm2371, %v2353, 0
        %v2418 = vsel %vm2371, %v2354, 0
        %2420 = vmatprep.subr.bf16.mxu0 0
        %2421 = vmatpush1.bf16.msra.mxu0 %v2367
        %2422 = vmatprep.subr.bf16.mxu0 0
        %2423 = vmatpush1.bf16.msra.mxu0 %v2368
        %2424 = vmatprep.subr.bf16.mxu0 0
        %2425 = vmatpush1.bf16.msra.mxu0 0
        %2426 = vmatprep.subr.bf16.mxu0 0
        %2427 = vmatpush1.bf16.msra.mxu0 0
        %2428 = vmatprep.subr.bf16.mxu0 0
        %2429 = vmatpush1.bf16.msra.mxu0 0
        %2430 = vmatprep.subr.bf16.mxu0 0
        %2431 = vmatpush1.bf16.msra.mxu0 0
        %2432 = vmatprep.subr.bf16.mxu0 0
        %2433 = vmatpush1.bf16.msra.mxu0 0
        %2434 = vmatprep.subr.bf16.mxu0 0
        %2435 = vmatpush1.bf16.msra.mxu0 0
        %2436 = vmatprep.subr.bf16.mxu0 0
        %2437 = vmatpush1.bf16.msra.mxu0 0
        %2438 = vmatprep.subr.bf16.mxu0 0
        %2439 = vmatpush1.bf16.msra.mxu0 0
        %2440 = vmatprep.subr.bf16.mxu0 0
        %2441 = vmatpush1.bf16.msra.mxu0 0
        %2442 = vmatprep.subr.bf16.mxu0 0
        %2443 = vmatpush1.bf16.msra.mxu0 0
        %2444 = vmatprep.subr.bf16.mxu0 0
        %2445 = vmatpush1.bf16.msra.mxu0 0
        %2446 = vmatprep.subr.bf16.mxu0 0
        %2447 = vmatpush1.bf16.msra.mxu0 0
        %2448 = vmatprep.subr.bf16.mxu0 0
        %2449 = vmatpush1.bf16.msra.mxu0 0
        %2450 = vmatprep.subr.bf16.mxu0 0
        %2451 = vmatpush1.bf16.msra.mxu0 0
        %2452 = vmatprep.mubr.bf16.mxu0 0
        %2453 = vmatmul.mubr.bf16.gmra.mrb[0].mxu0 %v2373
        %v2454 = vpop.f32.mrb[0].mxu0
        %v2455 = vadd.f32 0.0, %v2454
        %v2456 = vpop.f32.mrb[0].mxu0
        %v2457 = vpop.f32.mrb[0].mxu0
        %v2458 = vadd.f32 0.0, %v2457
        %v2459 = vpop.f32.mrb[0].mxu0
        %2460 = vmatprep.mubr.bf16.mxu0 0
        %2461 = vmatmul.mubr.bf16.gmra.mrb[0].mxu0 %v2376
        %v2462 = vpop.f32.mrb[0].mxu0
        %v2463 = vadd.f32 0.0, %v2462
        %v2464 = vpop.f32.mrb[0].mxu0
        %v2465 = vpop.f32.mrb[0].mxu0
        %v2466 = vadd.f32 0.0, %v2465
        %v2467 = vpop.f32.mrb[0].mxu0
        %2468 = vmatprep.mubr.bf16.mxu0 0
        %2469 = vmatmul.mubr.bf16.gmra.mrb[0].mxu0 %v2379
        %v2470 = vpop.f32.mrb[0].mxu0
        %v2471 = vadd.f32 0.0, %v2470
        %v2472 = vpop.f32.mrb[0].mxu0
        %v2473 = vpop.f32.mrb[0].mxu0
        %v2474 = vadd.f32 0.0, %v2473
        %v2475 = vpop.f32.mrb[0].mxu0
        %2476 = vmatprep.mubr.bf16.mxu0 0
        %2477 = vmatmul.mubr.bf16.gmra.mrb[0].mxu0 %v2382
        %v2478 = vpop.f32.mrb[0].mxu0
        %v2479 = vadd.f32 0.0, %v2478
        %v2480 = vpop.f32.mrb[0].mxu0
        %v2481 = vpop.f32.mrb[0].mxu0
        %v2482 = vadd.f32 0.0, %v2481
        %v2483 = vpop.f32.mrb[0].mxu0
        %2484 = vmatprep.mubr.bf16.mxu0 0
        %2485 = vmatmul.mubr.bf16.gmra.mrb[0].mxu0 %v2385
        %v2486 = vpop.f32.mrb[0].mxu0
        %v2487 = vadd.f32 0.0, %v2486
        %v2488 = vpop.f32.mrb[0].mxu0
        %v2489 = vpop.f32.mrb[0].mxu0
        %v2490 = vadd.f32 0.0, %v2489
        %v2491 = vpop.f32.mrb[0].mxu0
        %2492 = vmatprep.mubr.bf16.mxu0 0
        %2493 = vmatmul.mubr.bf16.gmra.mrb[0].mxu0 %v2388
        %v2494 = vpop.f32.mrb[0].mxu0
        %v2495 = vadd.f32 0.0, %v2494
        %v2496 = vpop.f32.mrb[0].mxu0
        %v2497 = vpop.f32.mrb[0].mxu0
        %v2498 = vadd.f32 0.0, %v2497
        %v2499 = vpop.f32.mrb[0].mxu0
        %2500 = vmatprep.mubr.bf16.mxu0 0
        %2501 = vmatmul.mubr.bf16.gmra.mrb[0].mxu0 %v2391
        %v2502 = vpop.f32.mrb[0].mxu0
        %v2503 = vadd.f32 0.0, %v2502
        %v2504 = vpop.f32.mrb[0].mxu0
        %v2505 = vpop.f32.mrb[0].mxu0
        %v2506 = vadd.f32 0.0, %v2505
        %v2507 = vpop.f32.mrb[0].mxu0
        %2508 = vmatprep.mubr.bf16.mxu0 0
        %2509 = vmatmul.mubr.bf16.gmra.mrb[0].mxu0 %v2394
        %v2510 = vpop.f32.mrb[0].mxu0
        %v2511 = vadd.f32 0.0, %v2510
        %v2512 = vpop.f32.mrb[0].mxu0
        %v2513 = vpop.f32.mrb[0].mxu0
        %v2514 = vadd.f32 0.0, %v2513
        %v2515 = vpop.f32.mrb[0].mxu0
        %2516 = vmatprep.mubr.bf16.mxu0 0
        %2517 = vmatmul.mubr.bf16.gmra.mrb[0].mxu0 %v2397
        %v2518 = vpop.f32.mrb[0].mxu0
        %v2519 = vadd.f32 0.0, %v2518
        %v2520 = vpop.f32.mrb[0].mxu0
        %v2521 = vpop.f32.mrb[0].mxu0
        %v2522 = vadd.f32 0.0, %v2521
        %v2523 = vpop.f32.mrb[0].mxu0
        %2524 = vmatprep.mubr.bf16.mxu0 0
        %2525 = vmatmul.mubr.bf16.gmra.mrb[0].mxu0 %v2400
        %v2526 = vpop.f32.mrb[0].mxu0
        %v2527 = vadd.f32 0.0, %v2526
        %v2528 = vpop.f32.mrb[0].mxu0
        %v2529 = vpop.f32.mrb[0].mxu0
        %v2530 = vadd.f32 0.0, %v2529
        %v2531 = vpop.f32.mrb[0].mxu0
        %2532 = vmatprep.mubr.bf16.mxu0 0
        %2533 = vmatmul.mubr.bf16.gmra.mrb[0].mxu0 %v2403
        %v2534 = vpop.f32.mrb[0].mxu0
        %v2535 = vadd.f32 0.0, %v2534
        %v2536 = vpop.f32.mrb[0].mxu0
        %v2537 = vpop.f32.mrb[0].mxu0
        %v2538 = vadd.f32 0.0, %v2537
        %v2539 = vpop.f32.mrb[0].mxu0
        %2540 = vmatprep.mubr.bf16.mxu0 0
        %2541 = vmatmul.mubr.bf16.gmra.mrb[0].mxu0 %v2406
        %v2542 = vpop.f32.mrb[0].mxu0
        %v2543 = vadd.f32 0.0, %v2542
        %v2544 = vpop.f32.mrb[0].mxu0
        %v2545 = vpop.f32.mrb[0].mxu0
        %v2546 = vadd.f32 0.0, %v2545
        %v2547 = vpop.f32.mrb[0].mxu0
        %2548 = vmatprep.mubr.bf16.mxu0 0
        %2549 = vmatmul.mubr.bf16.gmra.mrb[0].mxu0 %v2409
        %v2550 = vpop.f32.mrb[0].mxu0
        %v2551 = vadd.f32 0.0, %v2550
        %v2552 = vpop.f32.mrb[0].mxu0
        %v2553 = vpop.f32.mrb[0].mxu0
        %v2554 = vadd.f32 0.0, %v2553
        %v2555 = vpop.f32.mrb[0].mxu0
        %2556 = vmatprep.mubr.bf16.mxu0 0
        %2557 = vmatmul.mubr.bf16.gmra.mrb[0].mxu0 %v2412
        %v2558 = vpop.f32.mrb[0].mxu0
        %v2559 = vadd.f32 0.0, %v2558
        %v2560 = vpop.f32.mrb[0].mxu0
        %v2561 = vpop.f32.mrb[0].mxu0
        %v2562 = vadd.f32 0.0, %v2561
        %v2563 = vpop.f32.mrb[0].mxu0
        %2564 = vmatprep.mubr.bf16.mxu0 0
        %2565 = vmatmul.mubr.bf16.gmra.mrb[0].mxu0 %v2415
        %v2566 = vpop.f32.mrb[0].mxu0
        %v2567 = vadd.f32 0.0, %v2566
        %v2568 = vpop.f32.mrb[0].mxu0
        %v2569 = vpop.f32.mrb[0].mxu0
        %v2570 = vadd.f32 0.0, %v2569
        %v2571 = vpop.f32.mrb[0].mxu0
        %2572 = vmatprep.mubr.bf16.mxu0 0
        %2573 = vmatmul.mubr.bf16.gmra.mrb[0].mxu0 %v2418
        %v2574 = vpop.f32.mrb[0].mxu0
        %v2575 = vadd.f32 0.0, %v2574
        %v2576 = vpop.f32.mrb[0].mxu0
        %v2577 = vpop.f32.mrb[0].mxu0
        %v2578 = vadd.f32 0.0, %v2577
        %v2579 = vpop.f32.mrb[0].mxu0
        %2580 = vdwg.mxu0
        %v2585 = vunpack.c.l.b16 %v1725
        %v2586 = vunpack.c.l.b16 %v1726
        %v2587 = vunpack.c.l.b16 %v1727
        %v2588 = vunpack.c.l.b16 %v1728
        %v2589 = vpack.c.b16 %v2586, %v2585
        %v2590 = vpack.c.b16 %v2588, %v2587
        %v2594 = vsel %vm2371, %v1708, 0
        %v2597 = vsel %vm2371, %v1709, 0
        %v2600 = vsel %vm2371, %v1710, 0
        %v2603 = vsel %vm2371, %v1711, 0
        %v2606 = vsel %vm2371, %v1712, 0
        %v2609 = vsel %vm2371, %v1713, 0
        %v2612 = vsel %vm2371, %v1714, 0
        %v2615 = vsel %vm2371, %v1715, 0
        %v2618 = vsel %vm2371, %v1716, 0
        %v2621 = vsel %vm2371, %v1717, 0
        %v2624 = vsel %vm2371, %v1718, 0
        %v2627 = vsel %vm2371, %v1719, 0
        %v2630 = vsel %vm2371, %v1720, 0
        %v2633 = vsel %vm2371, %v1721, 0
        %v2636 = vsel %vm2371, %v1722, 0
        %v2639 = vsel %vm2371, %v1723, 0
        %2641 = vmatprep.subr.bf16.mxu0 0
        %2642 = vmatpush1.bf16.msra.mxu0 %v2589
        %2643 = vmatprep.subr.bf16.mxu0 0
        %2644 = vmatpush1.bf16.msra.mxu0 %v2590
        %2645 = vmatprep.subr.bf16.mxu0 0
        %2646 = vmatpush1.bf16.msra.mxu0 0
        %2647 = vmatprep.subr.bf16.mxu0 0
        %2648 = vmatpush1.bf16.msra.mxu0 0
        %2649 = vmatprep.subr.bf16.mxu0 0
        %2650 = vmatpush1.bf16.msra.mxu0 0
        %2651 = vmatprep.subr.bf16.mxu0 0
        %2652 = vmatpush1.bf16.msra.mxu0 0
        %2653 = vmatprep.subr.bf16.mxu0 0
        %2654 = vmatpush1.bf16.msra.mxu0 0
        %2655 = vmatprep.subr.bf16.mxu0 0
        %2656 = vmatpush1.bf16.msra.mxu0 0
        %2657 = vmatprep.subr.bf16.mxu0 0
        %2658 = vmatpush1.bf16.msra.mxu0 0
        %2659 = vmatprep.subr.bf16.mxu0 0
        %2660 = vmatpush1.bf16.msra.mxu0 0
        %2661 = vmatprep.subr.bf16.mxu0 0
        %2662 = vmatpush1.bf16.msra.mxu0 0
        %2663 = vmatprep.subr.bf16.mxu0 0
        %2664 = vmatpush1.bf16.msra.mxu0 0
        %2665 = vmatprep.subr.bf16.mxu0 0
        %2666 = vmatpush1.bf16.msra.mxu0 0
        %2667 = vmatprep.subr.bf16.mxu0 0
        %2668 = vmatpush1.bf16.msra.mxu0 0
        %2669 = vmatprep.subr.bf16.mxu0 0
        %2670 = vmatpush1.bf16.msra.mxu0 0
        %2671 = vmatprep.subr.bf16.mxu0 0
        %2672 = vmatpush1.bf16.msra.mxu0 0
        %2673 = vmatprep.mubr.bf16.mxu0 0
        %2674 = vmatmul.mubr.bf16.gmra.mrb[0].mxu0 %v2594
        %v2675 = vpop.f32.mrb[0].mxu0
        %v2676 = vadd.f32 %v2455, %v2675
        %v2677 = vpop.f32.mrb[0].mxu0
        %v2678 = vpop.f32.mrb[0].mxu0
        %v2679 = vadd.f32 %v2458, %v2678
        %v2680 = vpop.f32.mrb[0].mxu0
        %2681 = vmatprep.mubr.bf16.mxu0 0
        %2682 = vmatmul.mubr.bf16.gmra.mrb[0].mxu0 %v2597
        %v2683 = vpop.f32.mrb[0].mxu0
        %v2684 = vadd.f32 %v2463, %v2683
        %v2685 = vpop.f32.mrb[0].mxu0
        %v2686 = vpop.f32.mrb[0].mxu0
        %v2687 = vadd.f32 %v2466, %v2686
        %v2688 = vpop.f32.mrb[0].mxu0
        %2689 = vmatprep.mubr.bf16.mxu0 0
        %2690 = vmatmul.mubr.bf16.gmra.mrb[0].mxu0 %v2600
        %v2691 = vpop.f32.mrb[0].mxu0
        %v2692 = vadd.f32 %v2471, %v2691
        %v2693 = vpop.f32.mrb[0].mxu0
        %v2694 = vpop.f32.mrb[0].mxu0
        %v2695 = vadd.f32 %v2474, %v2694
        %v2696 = vpop.f32.mrb[0].mxu0
        %2697 = vmatprep.mubr.bf16.mxu0 0
        %2698 = vmatmul.mubr.bf16.gmra.mrb[0].mxu0 %v2603
        %v2699 = vpop.f32.mrb[0].mxu0
        %v2700 = vadd.f32 %v2479, %v2699
        %v2701 = vpop.f32.mrb[0].mxu0
        %v2702 = vpop.f32.mrb[0].mxu0
        %v2703 = vadd.f32 %v2482, %v2702
        %v2704 = vpop.f32.mrb[0].mxu0
        %2705 = vmatprep.mubr.bf16.mxu0 0
        %2706 = vmatmul.mubr.bf16.gmra.mrb[0].mxu0 %v2606
        %v2707 = vpop.f32.mrb[0].mxu0
        %v2708 = vadd.f32 %v2487, %v2707
        %v2709 = vpop.f32.mrb[0].mxu0
        %v2710 = vpop.f32.mrb[0].mxu0
        %v2711 = vadd.f32 %v2490, %v2710
        %v2712 = vpop.f32.mrb[0].mxu0
        %2713 = vmatprep.mubr.bf16.mxu0 0
        %2714 = vmatmul.mubr.bf16.gmra.mrb[0].mxu0 %v2609
        %v2715 = vpop.f32.mrb[0].mxu0
        %v2716 = vadd.f32 %v2495, %v2715
        %v2717 = vpop.f32.mrb[0].mxu0
        %v2718 = vpop.f32.mrb[0].mxu0
        %v2719 = vadd.f32 %v2498, %v2718
        %v2720 = vpop.f32.mrb[0].mxu0
        %2721 = vmatprep.mubr.bf16.mxu0 0
        %2722 = vmatmul.mubr.bf16.gmra.mrb[0].mxu0 %v2612
        %v2723 = vpop.f32.mrb[0].mxu0
        %v2724 = vadd.f32 %v2503, %v2723
        %v2725 = vpop.f32.mrb[0].mxu0
        %v2726 = vpop.f32.mrb[0].mxu0
        %v2727 = vadd.f32 %v2506, %v2726
        %v2728 = vpop.f32.mrb[0].mxu0
        %2729 = vmatprep.mubr.bf16.mxu0 0
        %2730 = vmatmul.mubr.bf16.gmra.mrb[0].mxu0 %v2615
        %v2731 = vpop.f32.mrb[0].mxu0
        %v2732 = vadd.f32 %v2511, %v2731
        %v2733 = vpop.f32.mrb[0].mxu0
        %v2734 = vpop.f32.mrb[0].mxu0
        %v2735 = vadd.f32 %v2514, %v2734
        %v2736 = vpop.f32.mrb[0].mxu0
        %2737 = vmatprep.mubr.bf16.mxu0 0
        %2738 = vmatmul.mubr.bf16.gmra.mrb[0].mxu0 %v2618
        %v2739 = vpop.f32.mrb[0].mxu0
        %v2740 = vadd.f32 %v2519, %v2739
        %v2741 = vpop.f32.mrb[0].mxu0
        %v2742 = vpop.f32.mrb[0].mxu0
        %v2743 = vadd.f32 %v2522, %v2742
        %v2744 = vpop.f32.mrb[0].mxu0
        %2745 = vmatprep.mubr.bf16.mxu0 0
        %2746 = vmatmul.mubr.bf16.gmra.mrb[0].mxu0 %v2621
        %v2747 = vpop.f32.mrb[0].mxu0
        %v2748 = vadd.f32 %v2527, %v2747
        %v2749 = vpop.f32.mrb[0].mxu0
        %v2750 = vpop.f32.mrb[0].mxu0
        %v2751 = vadd.f32 %v2530, %v2750
        %v2752 = vpop.f32.mrb[0].mxu0
        %2753 = vmatprep.mubr.bf16.mxu0 0
        %2754 = vmatmul.mubr.bf16.gmra.mrb[0].mxu0 %v2624
        %v2755 = vpop.f32.mrb[0].mxu0
        %v2756 = vadd.f32 %v2535, %v2755
        %v2757 = vpop.f32.mrb[0].mxu0
        %v2758 = vpop.f32.mrb[0].mxu0
        %v2759 = vadd.f32 %v2538, %v2758
        %v2760 = vpop.f32.mrb[0].mxu0
        %2761 = vmatprep.mubr.bf16.mxu0 0
        %2762 = vmatmul.mubr.bf16.gmra.mrb[0].mxu0 %v2627
        %v2763 = vpop.f32.mrb[0].mxu0
        %v2764 = vadd.f32 %v2543, %v2763
        %v2765 = vpop.f32.mrb[0].mxu0
        %v2766 = vpop.f32.mrb[0].mxu0
        %v2767 = vadd.f32 %v2546, %v2766
        %v2768 = vpop.f32.mrb[0].mxu0
        %2769 = vmatprep.mubr.bf16.mxu0 0
        %2770 = vmatmul.mubr.bf16.gmra.mrb[0].mxu0 %v2630
        %v2771 = vpop.f32.mrb[0].mxu0
        %v2772 = vadd.f32 %v2551, %v2771
        %v2773 = vpop.f32.mrb[0].mxu0
        %v2774 = vpop.f32.mrb[0].mxu0
        %v2775 = vadd.f32 %v2554, %v2774
        %v2776 = vpop.f32.mrb[0].mxu0
        %2777 = vmatprep.mubr.bf16.mxu0 0
        %2778 = vmatmul.mubr.bf16.gmra.mrb[0].mxu0 %v2633
        %v2779 = vpop.f32.mrb[0].mxu0
        %v2780 = vadd.f32 %v2559, %v2779
        %v2781 = vpop.f32.mrb[0].mxu0
        %v2782 = vpop.f32.mrb[0].mxu0
        %v2783 = vadd.f32 %v2562, %v2782
        %v2784 = vpop.f32.mrb[0].mxu0
        %2785 = vmatprep.mubr.bf16.mxu0 0
        %2786 = vmatmul.mubr.bf16.gmra.mrb[0].mxu0 %v2636
        %v2787 = vpop.f32.mrb[0].mxu0
        %v2788 = vadd.f32 %v2567, %v2787
        %v2789 = vpop.f32.mrb[0].mxu0
        %v2790 = vpop.f32.mrb[0].mxu0
        %v2791 = vadd.f32 %v2570, %v2790
        %v2792 = vpop.f32.mrb[0].mxu0
        %2793 = vmatprep.mubr.bf16.mxu0 0
        %2794 = vmatmul.mubr.bf16.gmra.mrb[0].mxu0 %v2639
        %v2795 = vpop.f32.mrb[0].mxu0
        %v2796 = vadd.f32 %v2575, %v2795
        %v2797 = vpop.f32.mrb[0].mxu0
        %v2798 = vpop.f32.mrb[0].mxu0
        %v2799 = vadd.f32 %v2578, %v2798
        %v2800 = vpop.f32.mrb[0].mxu0
        %2801 = vdwg.mxu0
        %v2802 = vrot.slane %v1292, 1
        %v2803 = vrot.slane %v1428, 1
        %v2804 = vrot.slane %v1293, 1
        %v2805 = vrot.slane %v1429, 1
        %v2806 = vrot.slane %v1294, 1
        %v2807 = vrot.slane %v1430, 1
        %v2808 = vrot.slane %v1295, 1
        %v2809 = vrot.slane %v1431, 1
        %v2810 = vrot.slane %v1296, 1
        %v2811 = vrot.slane %v1432, 1
        %v2812 = vrot.slane %v1297, 1
        %v2813 = vrot.slane %v1433, 1
        %v2814 = vrot.slane %v1298, 1
        %v2815 = vrot.slane %v1434, 1
        %v2816 = vrot.slane %v1299, 1
        %v2817 = vrot.slane %v1435, 1
        %v2818 = vrot.slane %v1564, 1
        %v2819 = vrot.slane %v1700, 1
        %v2820 = vrot.slane %v1565, 1
        %v2821 = vrot.slane %v1701, 1
        %v2822 = vrot.slane %v1566, 1
        %v2823 = vrot.slane %v1702, 1
        %v2824 = vrot.slane %v1567, 1
        %v2825 = vrot.slane %v1703, 1
        %v2826 = vrot.slane %v1568, 1
        %v2827 = vrot.slane %v1704, 1
        %v2828 = vrot.slane %v1569, 1
        %v2829 = vrot.slane %v1705, 1
        %v2830 = vrot.slane %v1570, 1
        %v2831 = vrot.slane %v1706, 1
        %v2832 = vrot.slane %v1571, 1
        %v2833 = vrot.slane %v1707, 1
        %vm2834 = vcmp.lt.s32.totalorder %v1730, 7
        %v2835 = vsel %vm2834, %v2832, %v2833
        %v2836 = vsel %vm2834, %v2831, %v2832
        %v2837 = vsel %vm2834, %v2830, %v2831
        %v2838 = vsel %vm2834, %v2829, %v2830
        %v2839 = vsel %vm2834, %v2828, %v2829
        %v2840 = vsel %vm2834, %v2827, %v2828
        %v2841 = vsel %vm2834, %v2826, %v2827
        %v2842 = vsel %vm2834, %v2825, %v2826
        %v2843 = vsel %vm2834, %v2824, %v2825
        %v2844 = vsel %vm2834, %v2823, %v2824
        %v2845 = vsel %vm2834, %v2822, %v2823
        %v2846 = vsel %vm2834, %v2821, %v2822
        %v2847 = vsel %vm2834, %v2820, %v2821
        %v2848 = vsel %vm2834, %v2819, %v2820
        %v2849 = vsel %vm2834, %v2818, %v2819
        %v2850 = vsel %vm2834, %v2817, %v2818
        %v2851 = vsel %vm2834, %v2816, %v2817
        %v2852 = vsel %vm2834, %v2815, %v2816
        %v2853 = vsel %vm2834, %v2814, %v2815
        %v2854 = vsel %vm2834, %v2813, %v2814
        %v2855 = vsel %vm2834, %v2812, %v2813
        %v2856 = vsel %vm2834, %v2811, %v2812
        %v2857 = vsel %vm2834, %v2810, %v2811
        %v2858 = vsel %vm2834, %v2809, %v2810
        %v2859 = vsel %vm2834, %v2808, %v2809
        %v2860 = vsel %vm2834, %v2807, %v2808
        %v2861 = vsel %vm2834, %v2806, %v2807
        %v2862 = vsel %vm2834, %v2805, %v2806
        %v2863 = vsel %vm2834, %v2804, %v2805
        %v2864 = vsel %vm2834, %v2803, %v2804
        %v2865 = vsel %vm2834, %v2802, %v2803
        %v2866 = vsel %vm2834, %v2833, %v2802
        %vm2867 = vcmp.lt.s32.totalorder %v2114, 15
        %vm2868 = vcmp.lt.s32.totalorder %v2115, 15
        %vm2869 = vcmp.lt.s32.totalorder %v2116, 15
        %vm2870 = vcmp.lt.s32.totalorder %v2117, 15
        %vm2871 = vcmp.lt.s32.totalorder %v2118, 15
        %vm2872 = vcmp.lt.s32.totalorder %v2119, 15
        %vm2873 = vcmp.lt.s32.totalorder %v2120, 15
        %vm2874 = vcmp.lt.s32.totalorder %v2121, 15
        %vm2875 = vcmp.lt.s32.totalorder %v2122, 15
        %vm2876 = vcmp.lt.s32.totalorder %v2123, 15
        %vm2877 = vcmp.lt.s32.totalorder %v2124, 15
        %vm2878 = vcmp.lt.s32.totalorder %v2125, 15
        %vm2879 = vcmp.lt.s32.totalorder %v2126, 15
        %vm2880 = vcmp.lt.s32.totalorder %v2127, 15
        %vm2881 = vcmp.lt.s32.totalorder %v2128, 15
        %vm2882 = vcmp.lt.s32.totalorder %v2129, 15
        %vm2883 = vcmp.lt.s32.totalorder %v2130, 15
        %vm2884 = vcmp.lt.s32.totalorder %v2131, 15
        %vm2885 = vcmp.lt.s32.totalorder %v2132, 15
        %vm2886 = vcmp.lt.s32.totalorder %v2133, 15
        %vm2887 = vcmp.lt.s32.totalorder %v2134, 15
        %vm2888 = vcmp.lt.s32.totalorder %v2135, 15
        %vm2889 = vcmp.lt.s32.totalorder %v2136, 15
        %vm2890 = vcmp.lt.s32.totalorder %v2137, 15
        %vm2891 = vcmp.lt.s32.totalorder %v2138, 15
        %vm2892 = vcmp.lt.s32.totalorder %v2139, 15
        %vm2893 = vcmp.lt.s32.totalorder %v2140, 15
        %vm2894 = vcmp.lt.s32.totalorder %v2141, 15
        %vm2895 = vcmp.lt.s32.totalorder %v2142, 15
        %vm2896 = vcmp.lt.s32.totalorder %v2143, 15
        %vm2897 = vcmp.lt.s32.totalorder %v2144, 15
        %vm2898 = vcmp.lt.s32.totalorder %v2145, 15
        %v2899 = vsel %vm2867, 1, 0
        %v2900 = vsel %vm2868, 1, 0
        %v2901 = vsel %vm2869, 1, 0
        %v2902 = vsel %vm2870, 1, 0
        %v2903 = vsel %vm2871, 1, 0
        %v2904 = vsel %vm2872, 1, 0
        %v2905 = vsel %vm2873, 1, 0
        %v2906 = vsel %vm2874, 1, 0
        %v2907 = vsel %vm2875, 1, 0
        %v2908 = vsel %vm2876, 1, 0
        %v2909 = vsel %vm2877, 1, 0
        %v2910 = vsel %vm2878, 1, 0
        %v2911 = vsel %vm2879, 1, 0
        %v2912 = vsel %vm2880, 1, 0
        %v2913 = vsel %vm2881, 1, 0
        %v2914 = vsel %vm2882, 1, 0
        %v2915 = vsel %vm2883, 1, 0
        %v2916 = vsel %vm2884, 1, 0
        %v2917 = vsel %vm2885, 1, 0
        %v2918 = vsel %vm2886, 1, 0
        %v2919 = vsel %vm2887, 1, 0
        %v2920 = vsel %vm2888, 1, 0
        %v2921 = vsel %vm2889, 1, 0
        %v2922 = vsel %vm2890, 1, 0
        %v2923 = vsel %vm2891, 1, 0
        %v2924 = vsel %vm2892, 1, 0
        %v2925 = vsel %vm2893, 1, 0
        %v2926 = vsel %vm2894, 1, 0
        %v2927 = vsel %vm2895, 1, 0
        %v2928 = vsel %vm2896, 1, 0
        %v2929 = vsel %vm2897, 1, 0
        %v2930 = vsel %vm2898, 1, 0
        %v2931 = vcvt.s32.f32 %v2899
        %v2932 = vcvt.s32.f32 %v2900
        %v2933 = vcvt.s32.f32 %v2901
        %v2934 = vcvt.s32.f32 %v2902
        %v2935 = vcvt.s32.f32 %v2903
        %v2936 = vcvt.s32.f32 %v2904
        %v2937 = vcvt.s32.f32 %v2905
        %v2938 = vcvt.s32.f32 %v2906
        %v2939 = vcvt.s32.f32 %v2907
        %v2940 = vcvt.s32.f32 %v2908
        %v2941 = vcvt.s32.f32 %v2909
        %v2942 = vcvt.s32.f32 %v2910
        %v2943 = vcvt.s32.f32 %v2911
        %v2944 = vcvt.s32.f32 %v2912
        %v2945 = vcvt.s32.f32 %v2913
        %v2946 = vcvt.s32.f32 %v2914
        %v2947 = vcvt.s32.f32 %v2915
        %v2948 = vcvt.s32.f32 %v2916
        %v2949 = vcvt.s32.f32 %v2917
        %v2950 = vcvt.s32.f32 %v2918
        %v2951 = vcvt.s32.f32 %v2919
        %v2952 = vcvt.s32.f32 %v2920
        %v2953 = vcvt.s32.f32 %v2921
        %v2954 = vcvt.s32.f32 %v2922
        %v2955 = vcvt.s32.f32 %v2923
        %v2956 = vcvt.s32.f32 %v2924
        %v2957 = vcvt.s32.f32 %v2925
        %v2958 = vcvt.s32.f32 %v2926
        %v2959 = vcvt.s32.f32 %v2927
        %v2960 = vcvt.s32.f32 %v2928
        %v2961 = vcvt.s32.f32 %v2929
        %v2962 = vcvt.s32.f32 %v2930
        %v2963 = vmul.f32 %v2865, %v2931
        %v2964 = vmul.f32 %v2864, %v2932
        %v2965 = vmul.f32 %v2863, %v2933
        %v2966 = vmul.f32 %v2862, %v2934
        %v2967 = vmul.f32 %v2861, %v2935
        %v2968 = vmul.f32 %v2860, %v2936
        %v2969 = vmul.f32 %v2859, %v2937
        %v2970 = vmul.f32 %v2858, %v2938
        %v2971 = vmul.f32 %v2857, %v2939
        %v2972 = vmul.f32 %v2856, %v2940
        %v2973 = vmul.f32 %v2855, %v2941
        %v2974 = vmul.f32 %v2854, %v2942
        %v2975 = vmul.f32 %v2853, %v2943
        %v2976 = vmul.f32 %v2852, %v2944
        %v2977 = vmul.f32 %v2851, %v2945
        %v2978 = vmul.f32 %v2850, %v2946
        %v2979 = vmul.f32 %v2849, %v2947
        %v2980 = vmul.f32 %v2848, %v2948
        %v2981 = vmul.f32 %v2847, %v2949
        %v2982 = vmul.f32 %v2846, %v2950
        %v2983 = vmul.f32 %v2845, %v2951
        %v2984 = vmul.f32 %v2844, %v2952
        %v2985 = vmul.f32 %v2843, %v2953
        %v2986 = vmul.f32 %v2842, %v2954
        %v2987 = vmul.f32 %v2841, %v2955
        %v2988 = vmul.f32 %v2840, %v2956
        %v2989 = vmul.f32 %v2839, %v2957
        %v2990 = vmul.f32 %v2838, %v2958
        %v2991 = vmul.f32 %v2837, %v2959
        %v2992 = vmul.f32 %v2836, %v2960
        %v2993 = vmul.f32 %v2835, %v2961
        %v2994 = vmul.f32 %v2866, %v2962
        %v2995 = vpack.c.bf16 %v2964, %v2963
        %v2996 = vpack.c.bf16 %v2966, %v2965
        %v2997 = vpack.c.bf16 %v2968, %v2967
        %v2998 = vpack.c.bf16 %v2970, %v2969
        %v2999 = vpack.c.bf16 %v2972, %v2971
        %v3000 = vpack.c.bf16 %v2974, %v2973
        %v3001 = vpack.c.bf16 %v2976, %v2975
        %v3002 = vpack.c.bf16 %v2978, %v2977
        %v3003 = vpack.c.bf16 %v2980, %v2979
        %v3004 = vpack.c.bf16 %v2982, %v2981
        %v3005 = vpack.c.bf16 %v2984, %v2983
        %v3006 = vpack.c.bf16 %v2986, %v2985
        %v3007 = vpack.c.bf16 %v2988, %v2987
        %v3008 = vpack.c.bf16 %v2990, %v2989
        %v3009 = vpack.c.bf16 %v2992, %v2991
        %v3010 = vpack.c.bf16 %v2994, %v2993
        %s3011 = scalar_lea.vmem [#allocation7], 32
        %v3012 = vld [vmem:[%s3011] sm:$0xf]
        %v3013 = vld [vmem:[%s3011 + $0x4] sm:$0xf]
        %v3014 = vld [vmem:[%s3011 + $0x8] sm:$0xf]
        %v3015 = vld [vmem:[%s3011 + $0xc] sm:$0xf]
        %v3020 = vunpack.c.l.b16 %v3012
        %v3021 = vunpack.c.l.b16 %v3013
        %v3022 = vunpack.c.l.b16 %v3014
        %v3023 = vunpack.c.l.b16 %v3015
        %v3024 = vpack.c.b16 %v3021, %v3020
        %v3025 = vpack.c.b16 %v3023, %v3022
        %v3029 = vsel %vm2371, %v2995, 0
        %v3032 = vsel %vm2371, %v2996, 0
        %v3035 = vsel %vm2371, %v2997, 0
        %v3038 = vsel %vm2371, %v2998, 0
        %v3041 = vsel %vm2371, %v2999, 0
        %v3044 = vsel %vm2371, %v3000, 0
        %v3047 = vsel %vm2371, %v3001, 0
        %v3050 = vsel %vm2371, %v3002, 0
        %v3053 = vsel %vm2371, %v3003, 0
        %v3056 = vsel %vm2371, %v3004, 0
        %v3059 = vsel %vm2371, %v3005, 0
        %v3062 = vsel %vm2371, %v3006, 0
        %v3065 = vsel %vm2371, %v3007, 0
        %v3068 = vsel %vm2371, %v3008, 0
        %v3071 = vsel %vm2371, %v3009, 0
        %v3074 = vsel %vm2371, %v3010, 0
        %3076 = vmatprep.subr.bf16.mxu0 0
        %3077 = vmatpush1.bf16.msra.mxu0 %v3024
        %3078 = vmatprep.subr.bf16.mxu0 0
        %3079 = vmatpush1.bf16.msra.mxu0 %v3025
        %3080 = vmatprep.subr.bf16.mxu0 0
        %3081 = vmatpush1.bf16.msra.mxu0 0
        %3082 = vmatprep.subr.bf16.mxu0 0
        %3083 = vmatpush1.bf16.msra.mxu0 0
        %3084 = vmatprep.subr.bf16.mxu0 0
        %3085 = vmatpush1.bf16.msra.mxu0 0
        %3086 = vmatprep.subr.bf16.mxu0 0
        %3087 = vmatpush1.bf16.msra.mxu0 0
        %3088 = vmatprep.subr.bf16.mxu0 0
        %3089 = vmatpush1.bf16.msra.mxu0 0
        %3090 = vmatprep.subr.bf16.mxu0 0
        %3091 = vmatpush1.bf16.msra.mxu0 0
        %3092 = vmatprep.subr.bf16.mxu0 0
        %3093 = vmatpush1.bf16.msra.mxu0 0
        %3094 = vmatprep.subr.bf16.mxu0 0
        %3095 = vmatpush1.bf16.msra.mxu0 0
        %3096 = vmatprep.subr.bf16.mxu0 0
        %3097 = vmatpush1.bf16.msra.mxu0 0
        %3098 = vmatprep.subr.bf16.mxu0 0
        %3099 = vmatpush1.bf16.msra.mxu0 0
        %3100 = vmatprep.subr.bf16.mxu0 0
        %3101 = vmatpush1.bf16.msra.mxu0 0
        %3102 = vmatprep.subr.bf16.mxu0 0
        %3103 = vmatpush1.bf16.msra.mxu0 0
        %3104 = vmatprep.subr.bf16.mxu0 0
        %3105 = vmatpush1.bf16.msra.mxu0 0
        %3106 = vmatprep.subr.bf16.mxu0 0
        %3107 = vmatpush1.bf16.msra.mxu0 0
        %3108 = vmatprep.mubr.bf16.mxu0 0
        %3109 = vmatmul.mubr.bf16.gmra.mrb[0].mxu0 %v3029
        %v3110 = vpop.f32.mrb[0].mxu0
        %v3111 = vadd.f32 0.0, %v3110
        %v3112 = vpop.f32.mrb[0].mxu0
        %v3113 = vpop.f32.mrb[0].mxu0
        %v3114 = vadd.f32 0.0, %v3113
        %v3115 = vpop.f32.mrb[0].mxu0
        %3116 = vmatprep.mubr.bf16.mxu0 0
        %3117 = vmatmul.mubr.bf16.gmra.mrb[0].mxu0 %v3032
        %v3118 = vpop.f32.mrb[0].mxu0
        %v3119 = vadd.f32 0.0, %v3118
        %v3120 = vpop.f32.mrb[0].mxu0
        %v3121 = vpop.f32.mrb[0].mxu0
        %v3122 = vadd.f32 0.0, %v3121
        %v3123 = vpop.f32.mrb[0].mxu0
        %3124 = vmatprep.mubr.bf16.mxu0 0
        %3125 = vmatmul.mubr.bf16.gmra.mrb[0].mxu0 %v3035
        %v3126 = vpop.f32.mrb[0].mxu0
        %v3127 = vadd.f32 0.0, %v3126
        %v3128 = vpop.f32.mrb[0].mxu0
        %v3129 = vpop.f32.mrb[0].mxu0
        %v3130 = vadd.f32 0.0, %v3129
        %v3131 = vpop.f32.mrb[0].mxu0
        %3132 = vmatprep.mubr.bf16.mxu0 0
        %3133 = vmatmul.mubr.bf16.gmra.mrb[0].mxu0 %v3038
        %v3134 = vpop.f32.mrb[0].mxu0
        %v3135 = vadd.f32 0.0, %v3134
        %v3136 = vpop.f32.mrb[0].mxu0
        %v3137 = vpop.f32.mrb[0].mxu0
        %v3138 = vadd.f32 0.0, %v3137
        %v3139 = vpop.f32.mrb[0].mxu0
        %3140 = vmatprep.mubr.bf16.mxu0 0
        %3141 = vmatmul.mubr.bf16.gmra.mrb[0].mxu0 %v3041
        %v3142 = vpop.f32.mrb[0].mxu0
        %v3143 = vadd.f32 0.0, %v3142
        %v3144 = vpop.f32.mrb[0].mxu0
        %v3145 = vpop.f32.mrb[0].mxu0
        %v3146 = vadd.f32 0.0, %v3145
        %v3147 = vpop.f32.mrb[0].mxu0
        %3148 = vmatprep.mubr.bf16.mxu0 0
        %3149 = vmatmul.mubr.bf16.gmra.mrb[0].mxu0 %v3044
        %v3150 = vpop.f32.mrb[0].mxu0
        %v3151 = vadd.f32 0.0, %v3150
        %v3152 = vpop.f32.mrb[0].mxu0
        %v3153 = vpop.f32.mrb[0].mxu0
        %v3154 = vadd.f32 0.0, %v3153
        %v3155 = vpop.f32.mrb[0].mxu0
        %3156 = vmatprep.mubr.bf16.mxu0 0
        %3157 = vmatmul.mubr.bf16.gmra.mrb[0].mxu0 %v3047
        %v3158 = vpop.f32.mrb[0].mxu0
        %v3159 = vadd.f32 0.0, %v3158
        %v3160 = vpop.f32.mrb[0].mxu0
        %v3161 = vpop.f32.mrb[0].mxu0
        %v3162 = vadd.f32 0.0, %v3161
        %v3163 = vpop.f32.mrb[0].mxu0
        %3164 = vmatprep.mubr.bf16.mxu0 0
        %3165 = vmatmul.mubr.bf16.gmra.mrb[0].mxu0 %v3050
        %v3166 = vpop.f32.mrb[0].mxu0
        %v3167 = vadd.f32 0.0, %v3166
        %v3168 = vpop.f32.mrb[0].mxu0
        %v3169 = vpop.f32.mrb[0].mxu0
        %v3170 = vadd.f32 0.0, %v3169
        %v3171 = vpop.f32.mrb[0].mxu0
        %3172 = vmatprep.mubr.bf16.mxu0 0
        %3173 = vmatmul.mubr.bf16.gmra.mrb[0].mxu0 %v3053
        %v3174 = vpop.f32.mrb[0].mxu0
        %v3175 = vadd.f32 0.0, %v3174
        %v3176 = vpop.f32.mrb[0].mxu0
        %v3177 = vpop.f32.mrb[0].mxu0
        %v3178 = vadd.f32 0.0, %v3177
        %v3179 = vpop.f32.mrb[0].mxu0
        %3180 = vmatprep.mubr.bf16.mxu0 0
        %3181 = vmatmul.mubr.bf16.gmra.mrb[0].mxu0 %v3056
        %v3182 = vpop.f32.mrb[0].mxu0
        %v3183 = vadd.f32 0.0, %v3182
        %v3184 = vpop.f32.mrb[0].mxu0
        %v3185 = vpop.f32.mrb[0].mxu0
        %v3186 = vadd.f32 0.0, %v3185
        %v3187 = vpop.f32.mrb[0].mxu0
        %3188 = vmatprep.mubr.bf16.mxu0 0
        %3189 = vmatmul.mubr.bf16.gmra.mrb[0].mxu0 %v3059
        %v3190 = vpop.f32.mrb[0].mxu0
        %v3191 = vadd.f32 0.0, %v3190
        %v3192 = vpop.f32.mrb[0].mxu0
        %v3193 = vpop.f32.mrb[0].mxu0
        %v3194 = vadd.f32 0.0, %v3193
        %v3195 = vpop.f32.mrb[0].mxu0
        %3196 = vmatprep.mubr.bf16.mxu0 0
        %3197 = vmatmul.mubr.bf16.gmra.mrb[0].mxu0 %v3062
        %v3198 = vpop.f32.mrb[0].mxu0
        %v3199 = vadd.f32 0.0, %v3198
        %v3200 = vpop.f32.mrb[0].mxu0
        %v3201 = vpop.f32.mrb[0].mxu0
        %v3202 = vadd.f32 0.0, %v3201
        %v3203 = vpop.f32.mrb[0].mxu0
        %3204 = vmatprep.mubr.bf16.mxu0 0
        %3205 = vmatmul.mubr.bf16.gmra.mrb[0].mxu0 %v3065
        %v3206 = vpop.f32.mrb[0].mxu0
        %v3207 = vadd.f32 0.0, %v3206
        %v3208 = vpop.f32.mrb[0].mxu0
        %v3209 = vpop.f32.mrb[0].mxu0
        %v3210 = vadd.f32 0.0, %v3209
        %v3211 = vpop.f32.mrb[0].mxu0
        %3212 = vmatprep.mubr.bf16.mxu0 0
        %3213 = vmatmul.mubr.bf16.gmra.mrb[0].mxu0 %v3068
        %v3214 = vpop.f32.mrb[0].mxu0
        %v3215 = vadd.f32 0.0, %v3214
        %v3216 = vpop.f32.mrb[0].mxu0
        %v3217 = vpop.f32.mrb[0].mxu0
        %v3218 = vadd.f32 0.0, %v3217
        %v3219 = vpop.f32.mrb[0].mxu0
        %3220 = vmatprep.mubr.bf16.mxu0 0
        %3221 = vmatmul.mubr.bf16.gmra.mrb[0].mxu0 %v3071
        %v3222 = vpop.f32.mrb[0].mxu0
        %v3223 = vadd.f32 0.0, %v3222
        %v3224 = vpop.f32.mrb[0].mxu0
        %v3225 = vpop.f32.mrb[0].mxu0
        %v3226 = vadd.f32 0.0, %v3225
        %v3227 = vpop.f32.mrb[0].mxu0
        %3228 = vmatprep.mubr.bf16.mxu0 0
        %3229 = vmatmul.mubr.bf16.gmra.mrb[0].mxu0 %v3074
        %v3230 = vpop.f32.mrb[0].mxu0
        %v3231 = vadd.f32 0.0, %v3230
        %v3232 = vpop.f32.mrb[0].mxu0
        %v3233 = vpop.f32.mrb[0].mxu0
        %v3234 = vadd.f32 0.0, %v3233
        %v3235 = vpop.f32.mrb[0].mxu0
        %3236 = vdwg.mxu0
        %v3237 = vadd.f32 %v2676, %v3111
        %v3238 = vadd.f32 %v2679, %v3114
        %v3239 = vadd.f32 %v2684, %v3119
        %v3240 = vadd.f32 %v2687, %v3122
        %v3241 = vadd.f32 %v2692, %v3127
        %v3242 = vadd.f32 %v2695, %v3130
        %v3243 = vadd.f32 %v2700, %v3135
        %v3244 = vadd.f32 %v2703, %v3138
        %v3245 = vadd.f32 %v2708, %v3143
        %v3246 = vadd.f32 %v2711, %v3146
        %v3247 = vadd.f32 %v2716, %v3151
        %v3248 = vadd.f32 %v2719, %v3154
        %v3249 = vadd.f32 %v2724, %v3159
        %v3250 = vadd.f32 %v2727, %v3162
        %v3251 = vadd.f32 %v2732, %v3167
        %v3252 = vadd.f32 %v2735, %v3170
        %v3253 = vadd.f32 %v2740, %v3175
        %v3254 = vadd.f32 %v2743, %v3178
        %v3255 = vadd.f32 %v2748, %v3183
        %v3256 = vadd.f32 %v2751, %v3186
        %v3257 = vadd.f32 %v2756, %v3191
        %v3258 = vadd.f32 %v2759, %v3194
        %v3259 = vadd.f32 %v2764, %v3199
        %v3260 = vadd.f32 %v2767, %v3202
        %v3261 = vadd.f32 %v2772, %v3207
        %v3262 = vadd.f32 %v2775, %v3210
        %v3263 = vadd.f32 %v2780, %v3215
        %v3264 = vadd.f32 %v2783, %v3218
        %v3265 = vadd.f32 %v2788, %v3223
        %v3266 = vadd.f32 %v2791, %v3226
        %v3267 = vadd.f32 %v2796, %v3231
        %v3268 = vadd.f32 %v2799, %v3234
        %v3269 = vcombine.low %v3237, %v3241
        %v3270 = vcombine.high %v3237, %v3241
        %v3272 = vunpack.c.l.s4 1983009808
        %v3273 = vunpack.c.0.s8 %v3272
        %v3274 = vlaneseq
        %v3275 = vshrl.u32 %v3274, 7
        %v3276 = vsub.s32 %v3273, %v3275
        %v3277 = vrot.slane %v3269, %v3276
        %v3279 = vunpack.c.l.s4 1983009808
        %v3280 = vunpack.c.0.s8 %v3279
        %v3281 = vlaneseq
        %v3282 = vshrl.u32 %v3281, 7
        %v3283 = vsub.s32 %v3280, %v3282
        %v3284 = vrot.slane %v3270, %v3283
        %v3285 = vcombine.low %v3239, %v3243
        %v3286 = vcombine.high %v3239, %v3243
        %v3288 = vunpack.c.l.s4 1983009808
        %v3289 = vunpack.c.0.s8 %v3288
        %v3290 = vlaneseq
        %v3291 = vshrl.u32 %v3290, 7
        %v3292 = vsub.s32 %v3289, %v3291
        %v3293 = vrot.slane %v3285, %v3292
        %v3295 = vunpack.c.l.s4 1983009808
        %v3296 = vunpack.c.0.s8 %v3295
        %v3297 = vlaneseq
        %v3298 = vshrl.u32 %v3297, 7
        %v3299 = vsub.s32 %v3296, %v3298
        %v3300 = vrot.slane %v3286, %v3299
        %v3301 = vcombine.low %v3245, %v3249
        %v3302 = vcombine.high %v3245, %v3249
        %v3304 = vunpack.c.l.s4 1983009808
        %v3305 = vunpack.c.0.s8 %v3304
        %v3306 = vlaneseq
        %v3307 = vshrl.u32 %v3306, 7
        %v3308 = vsub.s32 %v3305, %v3307
        %v3309 = vrot.slane %v3301, %v3308
        %v3311 = vunpack.c.l.s4 1983009808
        %v3312 = vunpack.c.0.s8 %v3311
        %v3313 = vlaneseq
        %v3314 = vshrl.u32 %v3313, 7
        %v3315 = vsub.s32 %v3312, %v3314
        %v3316 = vrot.slane %v3302, %v3315
        %v3317 = vcombine.low %v3247, %v3251
        %v3318 = vcombine.high %v3247, %v3251
        %v3320 = vunpack.c.l.s4 1983009808
        %v3321 = vunpack.c.0.s8 %v3320
        %v3322 = vlaneseq
        %v3323 = vshrl.u32 %v3322, 7
        %v3324 = vsub.s32 %v3321, %v3323
        %v3325 = vrot.slane %v3317, %v3324
        %v3327 = vunpack.c.l.s4 1983009808
        %v3328 = vunpack.c.0.s8 %v3327
        %v3329 = vlaneseq
        %v3330 = vshrl.u32 %v3329, 7
        %v3331 = vsub.s32 %v3328, %v3330
        %v3332 = vrot.slane %v3318, %v3331
        %v3333 = vcombine.low %v3277, %v3293
        %v3334 = vcombine.high %v3277, %v3293
        %v3336 = vunpack.c.l.s4 1934713408
        %v3337 = vunpack.c.0.s8 %v3336
        %v3338 = vlaneseq
        %v3339 = vshrl.u32 %v3338, 7
        %v3340 = vsub.s32 %v3337, %v3339
        %v3341 = vrot.slane %v3333, %v3340
        %v3343 = vunpack.c.l.s4 1934713408
        %v3344 = vunpack.c.0.s8 %v3343
        %v3345 = vlaneseq
        %v3346 = vshrl.u32 %v3345, 7
        %v3347 = vsub.s32 %v3344, %v3346
        %v3348 = vrot.slane %v3334, %v3347
        %v3349 = vcombine.low %v3284, %v3300
        %v3350 = vcombine.high %v3284, %v3300
        %v3352 = vunpack.c.l.s4 1934713408
        %v3353 = vunpack.c.0.s8 %v3352
        %v3354 = vlaneseq
        %v3355 = vshrl.u32 %v3354, 7
        %v3356 = vsub.s32 %v3353, %v3355
        %v3357 = vrot.slane %v3349, %v3356
        %v3359 = vunpack.c.l.s4 1934713408
        %v3360 = vunpack.c.0.s8 %v3359
        %v3361 = vlaneseq
        %v3362 = vshrl.u32 %v3361, 7
        %v3363 = vsub.s32 %v3360, %v3362
        %v3364 = vrot.slane %v3350, %v3363
        %v3365 = vcombine.low %v3309, %v3325
        %v3366 = vcombine.high %v3309, %v3325
        %v3368 = vunpack.c.l.s4 1934713408
        %v3369 = vunpack.c.0.s8 %v3368
        %v3370 = vlaneseq
        %v3371 = vshrl.u32 %v3370, 7
        %v3372 = vsub.s32 %v3369, %v3371
        %v3373 = vrot.slane %v3365, %v3372
        %v3375 = vunpack.c.l.s4 1934713408
        %v3376 = vunpack.c.0.s8 %v3375
        %v3377 = vlaneseq
        %v3378 = vshrl.u32 %v3377, 7
        %v3379 = vsub.s32 %v3376, %v3378
        %v3380 = vrot.slane %v3366, %v3379
        %v3381 = vcombine.low %v3316, %v3332
        %v3382 = vcombine.high %v3316, %v3332
        %v3384 = vunpack.c.l.s4 1934713408
        %v3385 = vunpack.c.0.s8 %v3384
        %v3386 = vlaneseq
        %v3387 = vshrl.u32 %v3386, 7
        %v3388 = vsub.s32 %v3385, %v3387
        %v3389 = vrot.slane %v3381, %v3388
        %v3391 = vunpack.c.l.s4 1934713408
        %v3392 = vunpack.c.0.s8 %v3391
        %v3393 = vlaneseq
        %v3394 = vshrl.u32 %v3393, 7
        %v3395 = vsub.s32 %v3392, %v3394
        %v3396 = vrot.slane %v3382, %v3395
        %v3397 = vcombine.low %v3341, %v3373
        %v3398 = vcombine.high %v3341, %v3373
        %v3399 = vcombine.low %v3348, %v3380
        %v3400 = vcombine.high %v3348, %v3380
        %v3401 = vcombine.low %v3357, %v3389
        %v3402 = vcombine.high %v3357, %v3389
        %v3403 = vcombine.low %v3364, %v3396
        %v3404 = vcombine.high %v3364, %v3396
        %v3405 = vcombine.low %v3253, %v3257
        %v3406 = vcombine.high %v3253, %v3257
        %v3408 = vunpack.c.l.s4 1983009808
        %v3409 = vunpack.c.0.s8 %v3408
        %v3410 = vlaneseq
        %v3411 = vshrl.u32 %v3410, 7
        %v3412 = vsub.s32 %v3409, %v3411
        %v3413 = vrot.slane %v3405, %v3412
        %v3415 = vunpack.c.l.s4 1983009808
        %v3416 = vunpack.c.0.s8 %v3415
        %v3417 = vlaneseq
        %v3418 = vshrl.u32 %v3417, 7
        %v3419 = vsub.s32 %v3416, %v3418
        %v3420 = vrot.slane %v3406, %v3419
        %v3421 = vcombine.low %v3255, %v3259
        %v3422 = vcombine.high %v3255, %v3259
        %v3424 = vunpack.c.l.s4 1983009808
        %v3425 = vunpack.c.0.s8 %v3424
        %v3426 = vlaneseq
        %v3427 = vshrl.u32 %v3426, 7
        %v3428 = vsub.s32 %v3425, %v3427
        %v3429 = vrot.slane %v3421, %v3428
        %v3431 = vunpack.c.l.s4 1983009808
        %v3432 = vunpack.c.0.s8 %v3431
        %v3433 = vlaneseq
        %v3434 = vshrl.u32 %v3433, 7
        %v3435 = vsub.s32 %v3432, %v3434
        %v3436 = vrot.slane %v3422, %v3435
        %v3437 = vcombine.low %v3261, %v3265
        %v3438 = vcombine.high %v3261, %v3265
        %v3440 = vunpack.c.l.s4 1983009808
        %v3441 = vunpack.c.0.s8 %v3440
        %v3442 = vlaneseq
        %v3443 = vshrl.u32 %v3442, 7
        %v3444 = vsub.s32 %v3441, %v3443
        %v3445 = vrot.slane %v3437, %v3444
        %v3447 = vunpack.c.l.s4 1983009808
        %v3448 = vunpack.c.0.s8 %v3447
        %v3449 = vlaneseq
        %v3450 = vshrl.u32 %v3449, 7
        %v3451 = vsub.s32 %v3448, %v3450
        %v3452 = vrot.slane %v3438, %v3451
        %v3453 = vcombine.low %v3263, %v3267
        %v3454 = vcombine.high %v3263, %v3267
        %v3456 = vunpack.c.l.s4 1983009808
        %v3457 = vunpack.c.0.s8 %v3456
        %v3458 = vlaneseq
        %v3459 = vshrl.u32 %v3458, 7
        %v3460 = vsub.s32 %v3457, %v3459
        %v3461 = vrot.slane %v3453, %v3460
        %v3463 = vunpack.c.l.s4 1983009808
        %v3464 = vunpack.c.0.s8 %v3463
        %v3465 = vlaneseq
        %v3466 = vshrl.u32 %v3465, 7
        %v3467 = vsub.s32 %v3464, %v3466
        %v3468 = vrot.slane %v3454, %v3467
        %v3469 = vcombine.low %v3413, %v3429
        %v3470 = vcombine.high %v3413, %v3429
        %v3472 = vunpack.c.l.s4 1934713408
        %v3473 = vunpack.c.0.s8 %v3472
        %v3474 = vlaneseq
        %v3475 = vshrl.u32 %v3474, 7
        %v3476 = vsub.s32 %v3473, %v3475
        %v3477 = vrot.slane %v3469, %v3476
        %v3479 = vunpack.c.l.s4 1934713408
        %v3480 = vunpack.c.0.s8 %v3479
        %v3481 = vlaneseq
        %v3482 = vshrl.u32 %v3481, 7
        %v3483 = vsub.s32 %v3480, %v3482
        %v3484 = vrot.slane %v3470, %v3483
        %v3485 = vcombine.low %v3420, %v3436
        %v3486 = vcombine.high %v3420, %v3436
        %v3488 = vunpack.c.l.s4 1934713408
        %v3489 = vunpack.c.0.s8 %v3488
        %v3490 = vlaneseq
        %v3491 = vshrl.u32 %v3490, 7
        %v3492 = vsub.s32 %v3489, %v3491
        %v3493 = vrot.slane %v3485, %v3492
        %v3495 = vunpack.c.l.s4 1934713408
        %v3496 = vunpack.c.0.s8 %v3495
        %v3497 = vlaneseq
        %v3498 = vshrl.u32 %v3497, 7
        %v3499 = vsub.s32 %v3496, %v3498
        %v3500 = vrot.slane %v3486, %v3499
        %v3501 = vcombine.low %v3445, %v3461
        %v3502 = vcombine.high %v3445, %v3461
        %v3504 = vunpack.c.l.s4 1934713408
        %v3505 = vunpack.c.0.s8 %v3504
        %v3506 = vlaneseq
        %v3507 = vshrl.u32 %v3506, 7
        %v3508 = vsub.s32 %v3505, %v3507
        %v3509 = vrot.slane %v3501, %v3508
        %v3511 = vunpack.c.l.s4 1934713408
        %v3512 = vunpack.c.0.s8 %v3511
        %v3513 = vlaneseq
        %v3514 = vshrl.u32 %v3513, 7
        %v3515 = vsub.s32 %v3512, %v3514
        %v3516 = vrot.slane %v3502, %v3515
        %v3517 = vcombine.low %v3452, %v3468
        %v3518 = vcombine.high %v3452, %v3468
        %v3520 = vunpack.c.l.s4 1934713408
        %v3521 = vunpack.c.0.s8 %v3520
        %v3522 = vlaneseq
        %v3523 = vshrl.u32 %v3522, 7
        %v3524 = vsub.s32 %v3521, %v3523
        %v3525 = vrot.slane %v3517, %v3524
        %v3527 = vunpack.c.l.s4 1934713408
        %v3528 = vunpack.c.0.s8 %v3527
        %v3529 = vlaneseq
        %v3530 = vshrl.u32 %v3529, 7
        %v3531 = vsub.s32 %v3528, %v3530
        %v3532 = vrot.slane %v3518, %v3531
        %v3533 = vcombine.low %v3477, %v3509
        %v3534 = vcombine.high %v3477, %v3509
        %v3535 = vcombine.low %v3484, %v3516
        %v3536 = vcombine.high %v3484, %v3516
        %v3537 = vcombine.low %v3493, %v3525
        %v3538 = vcombine.high %v3493, %v3525
        %v3539 = vcombine.low %v3500, %v3532
        %v3540 = vcombine.high %v3500, %v3532
        %v3541 = vcombine.low %v3238, %v3242
        %v3542 = vcombine.high %v3238, %v3242
        %v3544 = vunpack.c.l.s4 1983009808
        %v3545 = vunpack.c.0.s8 %v3544
        %v3546 = vlaneseq
        %v3547 = vshrl.u32 %v3546, 7
        %v3548 = vsub.s32 %v3545, %v3547
        %v3549 = vrot.slane %v3541, %v3548
        %v3551 = vunpack.c.l.s4 1983009808
        %v3552 = vunpack.c.0.s8 %v3551
        %v3553 = vlaneseq
        %v3554 = vshrl.u32 %v3553, 7
        %v3555 = vsub.s32 %v3552, %v3554
        %v3556 = vrot.slane %v3542, %v3555
        %v3557 = vcombine.low %v3240, %v3244
        %v3558 = vcombine.high %v3240, %v3244
        %v3560 = vunpack.c.l.s4 1983009808
        %v3561 = vunpack.c.0.s8 %v3560
        %v3562 = vlaneseq
        %v3563 = vshrl.u32 %v3562, 7
        %v3564 = vsub.s32 %v3561, %v3563
        %v3565 = vrot.slane %v3557, %v3564
        %v3567 = vunpack.c.l.s4 1983009808
        %v3568 = vunpack.c.0.s8 %v3567
        %v3569 = vlaneseq
        %v3570 = vshrl.u32 %v3569, 7
        %v3571 = vsub.s32 %v3568, %v3570
        %v3572 = vrot.slane %v3558, %v3571
        %v3573 = vcombine.low %v3246, %v3250
        %v3574 = vcombine.high %v3246, %v3250
        %v3576 = vunpack.c.l.s4 1983009808
        %v3577 = vunpack.c.0.s8 %v3576
        %v3578 = vlaneseq
        %v3579 = vshrl.u32 %v3578, 7
        %v3580 = vsub.s32 %v3577, %v3579
        %v3581 = vrot.slane %v3573, %v3580
        %v3583 = vunpack.c.l.s4 1983009808
        %v3584 = vunpack.c.0.s8 %v3583
        %v3585 = vlaneseq
        %v3586 = vshrl.u32 %v3585, 7
        %v3587 = vsub.s32 %v3584, %v3586
        %v3588 = vrot.slane %v3574, %v3587
        %v3589 = vcombine.low %v3248, %v3252
        %v3590 = vcombine.high %v3248, %v3252
        %v3592 = vunpack.c.l.s4 1983009808
        %v3593 = vunpack.c.0.s8 %v3592
        %v3594 = vlaneseq
        %v3595 = vshrl.u32 %v3594, 7
        %v3596 = vsub.s32 %v3593, %v3595
        %v3597 = vrot.slane %v3589, %v3596
        %v3599 = vunpack.c.l.s4 1983009808
        %v3600 = vunpack.c.0.s8 %v3599
        %v3601 = vlaneseq
        %v3602 = vshrl.u32 %v3601, 7
        %v3603 = vsub.s32 %v3600, %v3602
        %v3604 = vrot.slane %v3590, %v3603
        %v3605 = vcombine.low %v3549, %v3565
        %v3606 = vcombine.high %v3549, %v3565
        %v3608 = vunpack.c.l.s4 1934713408
        %v3609 = vunpack.c.0.s8 %v3608
        %v3610 = vlaneseq
        %v3611 = vshrl.u32 %v3610, 7
        %v3612 = vsub.s32 %v3609, %v3611
        %v3613 = vrot.slane %v3605, %v3612
        %v3615 = vunpack.c.l.s4 1934713408
        %v3616 = vunpack.c.0.s8 %v3615
        %v3617 = vlaneseq
        %v3618 = vshrl.u32 %v3617, 7
        %v3619 = vsub.s32 %v3616, %v3618
        %v3620 = vrot.slane %v3606, %v3619
        %v3621 = vcombine.low %v3556, %v3572
        %v3622 = vcombine.high %v3556, %v3572
        %v3624 = vunpack.c.l.s4 1934713408
        %v3625 = vunpack.c.0.s8 %v3624
        %v3626 = vlaneseq
        %v3627 = vshrl.u32 %v3626, 7
        %v3628 = vsub.s32 %v3625, %v3627
        %v3629 = vrot.slane %v3621, %v3628
        %v3631 = vunpack.c.l.s4 1934713408
        %v3632 = vunpack.c.0.s8 %v3631
        %v3633 = vlaneseq
        %v3634 = vshrl.u32 %v3633, 7
        %v3635 = vsub.s32 %v3632, %v3634
        %v3636 = vrot.slane %v3622, %v3635
        %v3637 = vcombine.low %v3581, %v3597
        %v3638 = vcombine.high %v3581, %v3597
        %v3640 = vunpack.c.l.s4 1934713408
        %v3641 = vunpack.c.0.s8 %v3640
        %v3642 = vlaneseq
        %v3643 = vshrl.u32 %v3642, 7
        %v3644 = vsub.s32 %v3641, %v3643
        %v3645 = vrot.slane %v3637, %v3644
        %v3647 = vunpack.c.l.s4 1934713408
        %v3648 = vunpack.c.0.s8 %v3647
        %v3649 = vlaneseq
        %v3650 = vshrl.u32 %v3649, 7
        %v3651 = vsub.s32 %v3648, %v3650
        %v3652 = vrot.slane %v3638, %v3651
        %v3653 = vcombine.low %v3588, %v3604
        %v3654 = vcombine.high %v3588, %v3604
        %v3656 = vunpack.c.l.s4 1934713408
        %v3657 = vunpack.c.0.s8 %v3656
        %v3658 = vlaneseq
        %v3659 = vshrl.u32 %v3658, 7
        %v3660 = vsub.s32 %v3657, %v3659
        %v3661 = vrot.slane %v3653, %v3660
        %v3663 = vunpack.c.l.s4 1934713408
        %v3664 = vunpack.c.0.s8 %v3663
        %v3665 = vlaneseq
        %v3666 = vshrl.u32 %v3665, 7
        %v3667 = vsub.s32 %v3664, %v3666
        %v3668 = vrot.slane %v3654, %v3667
        %v3669 = vcombine.low %v3613, %v3645
        %v3670 = vcombine.high %v3613, %v3645
        %v3671 = vcombine.low %v3620, %v3652
        %v3672 = vcombine.high %v3620, %v3652
        %v3673 = vcombine.low %v3629, %v3661
        %v3674 = vcombine.high %v3629, %v3661
        %v3675 = vcombine.low %v3636, %v3668
        %v3676 = vcombine.high %v3636, %v3668
        %v3677 = vcombine.low %v3254, %v3258
        %v3678 = vcombine.high %v3254, %v3258
        %v3680 = vunpack.c.l.s4 1983009808
        %v3681 = vunpack.c.0.s8 %v3680
        %v3682 = vlaneseq
        %v3683 = vshrl.u32 %v3682, 7
        %v3684 = vsub.s32 %v3681, %v3683
        %v3685 = vrot.slane %v3677, %v3684
        %v3687 = vunpack.c.l.s4 1983009808
        %v3688 = vunpack.c.0.s8 %v3687
        %v3689 = vlaneseq
        %v3690 = vshrl.u32 %v3689, 7
        %v3691 = vsub.s32 %v3688, %v3690
        %v3692 = vrot.slane %v3678, %v3691
        %v3693 = vcombine.low %v3256, %v3260
        %v3694 = vcombine.high %v3256, %v3260
        %v3696 = vunpack.c.l.s4 1983009808
        %v3697 = vunpack.c.0.s8 %v3696
        %v3698 = vlaneseq
        %v3699 = vshrl.u32 %v3698, 7
        %v3700 = vsub.s32 %v3697, %v3699
        %v3701 = vrot.slane %v3693, %v3700
        %v3703 = vunpack.c.l.s4 1983009808
        %v3704 = vunpack.c.0.s8 %v3703
        %v3705 = vlaneseq
        %v3706 = vshrl.u32 %v3705, 7
        %v3707 = vsub.s32 %v3704, %v3706
        %v3708 = vrot.slane %v3694, %v3707
        %v3709 = vcombine.low %v3262, %v3266
        %v3710 = vcombine.high %v3262, %v3266
        %v3712 = vunpack.c.l.s4 1983009808
        %v3713 = vunpack.c.0.s8 %v3712
        %v3714 = vlaneseq
        %v3715 = vshrl.u32 %v3714, 7
        %v3716 = vsub.s32 %v3713, %v3715
        %v3717 = vrot.slane %v3709, %v3716
        %v3719 = vunpack.c.l.s4 1983009808
        %v3720 = vunpack.c.0.s8 %v3719
        %v3721 = vlaneseq
        %v3722 = vshrl.u32 %v3721, 7
        %v3723 = vsub.s32 %v3720, %v3722
        %v3724 = vrot.slane %v3710, %v3723
        %v3725 = vcombine.low %v3264, %v3268
        %v3726 = vcombine.high %v3264, %v3268
        %v3728 = vunpack.c.l.s4 1983009808
        %v3729 = vunpack.c.0.s8 %v3728
        %v3730 = vlaneseq
        %v3731 = vshrl.u32 %v3730, 7
        %v3732 = vsub.s32 %v3729, %v3731
        %v3733 = vrot.slane %v3725, %v3732
        %v3735 = vunpack.c.l.s4 1983009808
        %v3736 = vunpack.c.0.s8 %v3735
        %v3737 = vlaneseq
        %v3738 = vshrl.u32 %v3737, 7
        %v3739 = vsub.s32 %v3736, %v3738
        %v3740 = vrot.slane %v3726, %v3739
        %v3741 = vcombine.low %v3685, %v3701
        %v3742 = vcombine.high %v3685, %v3701
        %v3744 = vunpack.c.l.s4 1934713408
        %v3745 = vunpack.c.0.s8 %v3744
        %v3746 = vlaneseq
        %v3747 = vshrl.u32 %v3746, 7
        %v3748 = vsub.s32 %v3745, %v3747
        %v3749 = vrot.slane %v3741, %v3748
        %v3751 = vunpack.c.l.s4 1934713408
        %v3752 = vunpack.c.0.s8 %v3751
        %v3753 = vlaneseq
        %v3754 = vshrl.u32 %v3753, 7
        %v3755 = vsub.s32 %v3752, %v3754
        %v3756 = vrot.slane %v3742, %v3755
        %v3757 = vcombine.low %v3692, %v3708
        %v3758 = vcombine.high %v3692, %v3708
        %v3760 = vunpack.c.l.s4 1934713408
        %v3761 = vunpack.c.0.s8 %v3760
        %v3762 = vlaneseq
        %v3763 = vshrl.u32 %v3762, 7
        %v3764 = vsub.s32 %v3761, %v3763
        %v3765 = vrot.slane %v3757, %v3764
        %v3767 = vunpack.c.l.s4 1934713408
        %v3768 = vunpack.c.0.s8 %v3767
        %v3769 = vlaneseq
        %v3770 = vshrl.u32 %v3769, 7
        %v3771 = vsub.s32 %v3768, %v3770
        %v3772 = vrot.slane %v3758, %v3771
        %v3773 = vcombine.low %v3717, %v3733
        %v3774 = vcombine.high %v3717, %v3733
        %v3776 = vunpack.c.l.s4 1934713408
        %v3777 = vunpack.c.0.s8 %v3776
        %v3778 = vlaneseq
        %v3779 = vshrl.u32 %v3778, 7
        %v3780 = vsub.s32 %v3777, %v3779
        %v3781 = vrot.slane %v3773, %v3780
        %v3783 = vunpack.c.l.s4 1934713408
        %v3784 = vunpack.c.0.s8 %v3783
        %v3785 = vlaneseq
        %v3786 = vshrl.u32 %v3785, 7
        %v3787 = vsub.s32 %v3784, %v3786
        %v3788 = vrot.slane %v3774, %v3787
        %v3789 = vcombine.low %v3724, %v3740
        %v3790 = vcombine.high %v3724, %v3740
        %v3792 = vunpack.c.l.s4 1934713408
        %v3793 = vunpack.c.0.s8 %v3792
        %v3794 = vlaneseq
        %v3795 = vshrl.u32 %v3794, 7
        %v3796 = vsub.s32 %v3793, %v3795
        %v3797 = vrot.slane %v3789, %v3796
        %v3799 = vunpack.c.l.s4 1934713408
        %v3800 = vunpack.c.0.s8 %v3799
        %v3801 = vlaneseq
        %v3802 = vshrl.u32 %v3801, 7
        %v3803 = vsub.s32 %v3800, %v3802
        %v3804 = vrot.slane %v3790, %v3803
        %v3805 = vcombine.low %v3749, %v3781
        %v3806 = vcombine.high %v3749, %v3781
        %v3807 = vcombine.low %v3756, %v3788
        %v3808 = vcombine.high %v3756, %v3788
        %v3809 = vcombine.low %v3765, %v3797
        %v3810 = vcombine.high %v3765, %v3797
        %v3811 = vcombine.low %v3772, %v3804
        %v3812 = vcombine.high %v3772, %v3804
        %v3813 = vcombine.low %v3397, %v3399
        %v3814 = vcombine.high %v3397, %v3399
        %v3816 = vunpack.c.l.s4 1983009808
        %v3817 = vunpack.c.0.s8 %v3816
        %v3818 = vlaneseq
        %v3819 = vshrl.u32 %v3818, 7
        %v3820 = vsub.s32 %v3817, %v3819
        %v3821 = vrot.slane %v3813, %v3820
        %v3823 = vunpack.c.l.s4 1983009808
        %v3824 = vunpack.c.0.s8 %v3823
        %v3825 = vlaneseq
        %v3826 = vshrl.u32 %v3825, 7
        %v3827 = vsub.s32 %v3824, %v3826
        %v3828 = vrot.slane %v3814, %v3827
        %v3829 = vcombine.low %v3398, %v3400
        %v3830 = vcombine.high %v3398, %v3400
        %v3832 = vunpack.c.l.s4 1983009808
        %v3833 = vunpack.c.0.s8 %v3832
        %v3834 = vlaneseq
        %v3835 = vshrl.u32 %v3834, 7
        %v3836 = vsub.s32 %v3833, %v3835
        %v3837 = vrot.slane %v3829, %v3836
        %v3839 = vunpack.c.l.s4 1983009808
        %v3840 = vunpack.c.0.s8 %v3839
        %v3841 = vlaneseq
        %v3842 = vshrl.u32 %v3841, 7
        %v3843 = vsub.s32 %v3840, %v3842
        %v3844 = vrot.slane %v3830, %v3843
        %v3845 = vcombine.low %v3401, %v3403
        %v3846 = vcombine.high %v3401, %v3403
        %v3848 = vunpack.c.l.s4 1983009808
        %v3849 = vunpack.c.0.s8 %v3848
        %v3850 = vlaneseq
        %v3851 = vshrl.u32 %v3850, 7
        %v3852 = vsub.s32 %v3849, %v3851
        %v3853 = vrot.slane %v3845, %v3852
        %v3855 = vunpack.c.l.s4 1983009808
        %v3856 = vunpack.c.0.s8 %v3855
        %v3857 = vlaneseq
        %v3858 = vshrl.u32 %v3857, 7
        %v3859 = vsub.s32 %v3856, %v3858
        %v3860 = vrot.slane %v3846, %v3859
        %v3861 = vcombine.low %v3402, %v3404
        %v3862 = vcombine.high %v3402, %v3404
        %v3864 = vunpack.c.l.s4 1983009808
        %v3865 = vunpack.c.0.s8 %v3864
        %v3866 = vlaneseq
        %v3867 = vshrl.u32 %v3866, 7
        %v3868 = vsub.s32 %v3865, %v3867
        %v3869 = vrot.slane %v3861, %v3868
        %v3871 = vunpack.c.l.s4 1983009808
        %v3872 = vunpack.c.0.s8 %v3871
        %v3873 = vlaneseq
        %v3874 = vshrl.u32 %v3873, 7
        %v3875 = vsub.s32 %v3872, %v3874
        %v3876 = vrot.slane %v3862, %v3875
        %v3877 = vcombine.low %v3821, %v3837
        %v3878 = vcombine.high %v3821, %v3837
        %v3880 = vunpack.c.l.s4 1934713408
        %v3881 = vunpack.c.0.s8 %v3880
        %v3882 = vlaneseq
        %v3883 = vshrl.u32 %v3882, 7
        %v3884 = vsub.s32 %v3881, %v3883
        %v3885 = vrot.slane %v3877, %v3884
        %v3887 = vunpack.c.l.s4 1934713408
        %v3888 = vunpack.c.0.s8 %v3887
        %v3889 = vlaneseq
        %v3890 = vshrl.u32 %v3889, 7
        %v3891 = vsub.s32 %v3888, %v3890
        %v3892 = vrot.slane %v3878, %v3891
        %v3893 = vcombine.low %v3828, %v3844
        %v3894 = vcombine.high %v3828, %v3844
        %v3896 = vunpack.c.l.s4 1934713408
        %v3897 = vunpack.c.0.s8 %v3896
        %v3898 = vlaneseq
        %v3899 = vshrl.u32 %v3898, 7
        %v3900 = vsub.s32 %v3897, %v3899
        %v3901 = vrot.slane %v3893, %v3900
        %v3903 = vunpack.c.l.s4 1934713408
        %v3904 = vunpack.c.0.s8 %v3903
        %v3905 = vlaneseq
        %v3906 = vshrl.u32 %v3905, 7
        %v3907 = vsub.s32 %v3904, %v3906
        %v3908 = vrot.slane %v3894, %v3907
        %v3909 = vcombine.low %v3853, %v3869
        %v3910 = vcombine.high %v3853, %v3869
        %v3912 = vunpack.c.l.s4 1934713408
        %v3913 = vunpack.c.0.s8 %v3912
        %v3914 = vlaneseq
        %v3915 = vshrl.u32 %v3914, 7
        %v3916 = vsub.s32 %v3913, %v3915
        %v3917 = vrot.slane %v3909, %v3916
        %v3919 = vunpack.c.l.s4 1934713408
        %v3920 = vunpack.c.0.s8 %v3919
        %v3921 = vlaneseq
        %v3922 = vshrl.u32 %v3921, 7
        %v3923 = vsub.s32 %v3920, %v3922
        %v3924 = vrot.slane %v3910, %v3923
        %v3925 = vcombine.low %v3860, %v3876
        %v3926 = vcombine.high %v3860, %v3876
        %v3928 = vunpack.c.l.s4 1934713408
        %v3929 = vunpack.c.0.s8 %v3928
        %v3930 = vlaneseq
        %v3931 = vshrl.u32 %v3930, 7
        %v3932 = vsub.s32 %v3929, %v3931
        %v3933 = vrot.slane %v3925, %v3932
        %v3935 = vunpack.c.l.s4 1934713408
        %v3936 = vunpack.c.0.s8 %v3935
        %v3937 = vlaneseq
        %v3938 = vshrl.u32 %v3937, 7
        %v3939 = vsub.s32 %v3936, %v3938
        %v3940 = vrot.slane %v3926, %v3939
        %v3941 = vcombine.low %v3885, %v3917
        %v3942 = vcombine.high %v3885, %v3917
        %v3943 = vcombine.low %v3892, %v3924
        %v3944 = vcombine.high %v3892, %v3924
        %v3945 = vcombine.low %v3901, %v3933
        %v3946 = vcombine.high %v3901, %v3933
        %v3947 = vcombine.low %v3908, %v3940
        %v3948 = vcombine.high %v3908, %v3940
        %v3949 = vcombine.low %v3669, %v3671
        %v3950 = vcombine.high %v3669, %v3671
        %v3952 = vunpack.c.l.s4 1983009808
        %v3953 = vunpack.c.0.s8 %v3952
        %v3954 = vlaneseq
        %v3955 = vshrl.u32 %v3954, 7
        %v3956 = vsub.s32 %v3953, %v3955
        %v3957 = vrot.slane %v3949, %v3956
        %v3959 = vunpack.c.l.s4 1983009808
        %v3960 = vunpack.c.0.s8 %v3959
        %v3961 = vlaneseq
        %v3962 = vshrl.u32 %v3961, 7
        %v3963 = vsub.s32 %v3960, %v3962
        %v3964 = vrot.slane %v3950, %v3963
        %v3965 = vcombine.low %v3670, %v3672
        %v3966 = vcombine.high %v3670, %v3672
        %v3968 = vunpack.c.l.s4 1983009808
        %v3969 = vunpack.c.0.s8 %v3968
        %v3970 = vlaneseq
        %v3971 = vshrl.u32 %v3970, 7
        %v3972 = vsub.s32 %v3969, %v3971
        %v3973 = vrot.slane %v3965, %v3972
        %v3975 = vunpack.c.l.s4 1983009808
        %v3976 = vunpack.c.0.s8 %v3975
        %v3977 = vlaneseq
        %v3978 = vshrl.u32 %v3977, 7
        %v3979 = vsub.s32 %v3976, %v3978
        %v3980 = vrot.slane %v3966, %v3979
        %v3981 = vcombine.low %v3673, %v3675
        %v3982 = vcombine.high %v3673, %v3675
        %v3984 = vunpack.c.l.s4 1983009808
        %v3985 = vunpack.c.0.s8 %v3984
        %v3986 = vlaneseq
        %v3987 = vshrl.u32 %v3986, 7
        %v3988 = vsub.s32 %v3985, %v3987
        %v3989 = vrot.slane %v3981, %v3988
        %v3991 = vunpack.c.l.s4 1983009808
        %v3992 = vunpack.c.0.s8 %v3991
        %v3993 = vlaneseq
        %v3994 = vshrl.u32 %v3993, 7
        %v3995 = vsub.s32 %v3992, %v3994
        %v3996 = vrot.slane %v3982, %v3995
        %v3997 = vcombine.low %v3674, %v3676
        %v3998 = vcombine.high %v3674, %v3676
        %v4000 = vunpack.c.l.s4 1983009808
        %v4001 = vunpack.c.0.s8 %v4000
        %v4002 = vlaneseq
        %v4003 = vshrl.u32 %v4002, 7
        %v4004 = vsub.s32 %v4001, %v4003
        %v4005 = vrot.slane %v3997, %v4004
        %v4007 = vunpack.c.l.s4 1983009808
        %v4008 = vunpack.c.0.s8 %v4007
        %v4009 = vlaneseq
        %v4010 = vshrl.u32 %v4009, 7
        %v4011 = vsub.s32 %v4008, %v4010
        %v4012 = vrot.slane %v3998, %v4011
        %v4013 = vcombine.low %v3957, %v3973
        %v4014 = vcombine.high %v3957, %v3973
        %v4016 = vunpack.c.l.s4 1934713408
        %v4017 = vunpack.c.0.s8 %v4016
        %v4018 = vlaneseq
        %v4019 = vshrl.u32 %v4018, 7
        %v4020 = vsub.s32 %v4017, %v4019
        %v4021 = vrot.slane %v4013, %v4020
        %v4023 = vunpack.c.l.s4 1934713408
        %v4024 = vunpack.c.0.s8 %v4023
        %v4025 = vlaneseq
        %v4026 = vshrl.u32 %v4025, 7
        %v4027 = vsub.s32 %v4024, %v4026
        %v4028 = vrot.slane %v4014, %v4027
        %v4029 = vcombine.low %v3964, %v3980
        %v4030 = vcombine.high %v3964, %v3980
        %v4032 = vunpack.c.l.s4 1934713408
        %v4033 = vunpack.c.0.s8 %v4032
        %v4034 = vlaneseq
        %v4035 = vshrl.u32 %v4034, 7
        %v4036 = vsub.s32 %v4033, %v4035
        %v4037 = vrot.slane %v4029, %v4036
        %v4039 = vunpack.c.l.s4 1934713408
        %v4040 = vunpack.c.0.s8 %v4039
        %v4041 = vlaneseq
        %v4042 = vshrl.u32 %v4041, 7
        %v4043 = vsub.s32 %v4040, %v4042
        %v4044 = vrot.slane %v4030, %v4043
        %v4045 = vcombine.low %v3989, %v4005
        %v4046 = vcombine.high %v3989, %v4005
        %v4048 = vunpack.c.l.s4 1934713408
        %v4049 = vunpack.c.0.s8 %v4048
        %v4050 = vlaneseq
        %v4051 = vshrl.u32 %v4050, 7
        %v4052 = vsub.s32 %v4049, %v4051
        %v4053 = vrot.slane %v4045, %v4052
        %v4055 = vunpack.c.l.s4 1934713408
        %v4056 = vunpack.c.0.s8 %v4055
        %v4057 = vlaneseq
        %v4058 = vshrl.u32 %v4057, 7
        %v4059 = vsub.s32 %v4056, %v4058
        %v4060 = vrot.slane %v4046, %v4059
        %v4061 = vcombine.low %v3996, %v4012
        %v4062 = vcombine.high %v3996, %v4012
        %v4064 = vunpack.c.l.s4 1934713408
        %v4065 = vunpack.c.0.s8 %v4064
        %v4066 = vlaneseq
        %v4067 = vshrl.u32 %v4066, 7
        %v4068 = vsub.s32 %v4065, %v4067
        %v4069 = vrot.slane %v4061, %v4068
        %v4071 = vunpack.c.l.s4 1934713408
        %v4072 = vunpack.c.0.s8 %v4071
        %v4073 = vlaneseq
        %v4074 = vshrl.u32 %v4073, 7
        %v4075 = vsub.s32 %v4072, %v4074
        %v4076 = vrot.slane %v4062, %v4075
        %v4077 = vcombine.low %v4021, %v4053
        %v4078 = vcombine.high %v4021, %v4053
        %v4079 = vcombine.low %v4028, %v4060
        %v4080 = vcombine.high %v4028, %v4060
        %v4081 = vcombine.low %v4037, %v4069
        %v4082 = vcombine.high %v4037, %v4069
        %v4083 = vcombine.low %v4044, %v4076
        %v4084 = vcombine.high %v4044, %v4076
        %v4085 = vcombine.low %v3533, %v3535
        %v4086 = vcombine.high %v3533, %v3535
        %v4088 = vunpack.c.l.s4 1983009808
        %v4089 = vunpack.c.0.s8 %v4088
        %v4090 = vlaneseq
        %v4091 = vshrl.u32 %v4090, 7
        %v4092 = vsub.s32 %v4089, %v4091
        %v4093 = vrot.slane %v4085, %v4092
        %v4095 = vunpack.c.l.s4 1983009808
        %v4096 = vunpack.c.0.s8 %v4095
        %v4097 = vlaneseq
        %v4098 = vshrl.u32 %v4097, 7
        %v4099 = vsub.s32 %v4096, %v4098
        %v4100 = vrot.slane %v4086, %v4099
        %v4101 = vcombine.low %v3534, %v3536
        %v4102 = vcombine.high %v3534, %v3536
        %v4104 = vunpack.c.l.s4 1983009808
        %v4105 = vunpack.c.0.s8 %v4104
        %v4106 = vlaneseq
        %v4107 = vshrl.u32 %v4106, 7
        %v4108 = vsub.s32 %v4105, %v4107
        %v4109 = vrot.slane %v4101, %v4108
        %v4111 = vunpack.c.l.s4 1983009808
        %v4112 = vunpack.c.0.s8 %v4111
        %v4113 = vlaneseq
        %v4114 = vshrl.u32 %v4113, 7
        %v4115 = vsub.s32 %v4112, %v4114
        %v4116 = vrot.slane %v4102, %v4115
        %v4117 = vcombine.low %v3537, %v3539
        %v4118 = vcombine.high %v3537, %v3539
        %v4120 = vunpack.c.l.s4 1983009808
        %v4121 = vunpack.c.0.s8 %v4120
        %v4122 = vlaneseq
        %v4123 = vshrl.u32 %v4122, 7
        %v4124 = vsub.s32 %v4121, %v4123
        %v4125 = vrot.slane %v4117, %v4124
        %v4127 = vunpack.c.l.s4 1983009808
        %v4128 = vunpack.c.0.s8 %v4127
        %v4129 = vlaneseq
        %v4130 = vshrl.u32 %v4129, 7
        %v4131 = vsub.s32 %v4128, %v4130
        %v4132 = vrot.slane %v4118, %v4131
        %v4133 = vcombine.low %v3538, %v3540
        %v4134 = vcombine.high %v3538, %v3540
        %v4136 = vunpack.c.l.s4 1983009808
        %v4137 = vunpack.c.0.s8 %v4136
        %v4138 = vlaneseq
        %v4139 = vshrl.u32 %v4138, 7
        %v4140 = vsub.s32 %v4137, %v4139
        %v4141 = vrot.slane %v4133, %v4140
        %v4143 = vunpack.c.l.s4 1983009808
        %v4144 = vunpack.c.0.s8 %v4143
        %v4145 = vlaneseq
        %v4146 = vshrl.u32 %v4145, 7
        %v4147 = vsub.s32 %v4144, %v4146
        %v4148 = vrot.slane %v4134, %v4147
        %v4149 = vcombine.low %v4093, %v4109
        %v4150 = vcombine.high %v4093, %v4109
        %v4152 = vunpack.c.l.s4 1934713408
        %v4153 = vunpack.c.0.s8 %v4152
        %v4154 = vlaneseq
        %v4155 = vshrl.u32 %v4154, 7
        %v4156 = vsub.s32 %v4153, %v4155
        %v4157 = vrot.slane %v4149, %v4156
        %v4159 = vunpack.c.l.s4 1934713408
        %v4160 = vunpack.c.0.s8 %v4159
        %v4161 = vlaneseq
        %v4162 = vshrl.u32 %v4161, 7
        %v4163 = vsub.s32 %v4160, %v4162
        %v4164 = vrot.slane %v4150, %v4163
        %v4165 = vcombine.low %v4100, %v4116
        %v4166 = vcombine.high %v4100, %v4116
        %v4168 = vunpack.c.l.s4 1934713408
        %v4169 = vunpack.c.0.s8 %v4168
        %v4170 = vlaneseq
        %v4171 = vshrl.u32 %v4170, 7
        %v4172 = vsub.s32 %v4169, %v4171
        %v4173 = vrot.slane %v4165, %v4172
        %v4175 = vunpack.c.l.s4 1934713408
        %v4176 = vunpack.c.0.s8 %v4175
        %v4177 = vlaneseq
        %v4178 = vshrl.u32 %v4177, 7
        %v4179 = vsub.s32 %v4176, %v4178
        %v4180 = vrot.slane %v4166, %v4179
        %v4181 = vcombine.low %v4125, %v4141
        %v4182 = vcombine.high %v4125, %v4141
        %v4184 = vunpack.c.l.s4 1934713408
        %v4185 = vunpack.c.0.s8 %v4184
        %v4186 = vlaneseq
        %v4187 = vshrl.u32 %v4186, 7
        %v4188 = vsub.s32 %v4185, %v4187
        %v4189 = vrot.slane %v4181, %v4188
        %v4191 = vunpack.c.l.s4 1934713408
        %v4192 = vunpack.c.0.s8 %v4191
        %v4193 = vlaneseq
        %v4194 = vshrl.u32 %v4193, 7
        %v4195 = vsub.s32 %v4192, %v4194
        %v4196 = vrot.slane %v4182, %v4195
        %v4197 = vcombine.low %v4132, %v4148
        %v4198 = vcombine.high %v4132, %v4148
        %v4200 = vunpack.c.l.s4 1934713408
        %v4201 = vunpack.c.0.s8 %v4200
        %v4202 = vlaneseq
        %v4203 = vshrl.u32 %v4202, 7
        %v4204 = vsub.s32 %v4201, %v4203
        %v4205 = vrot.slane %v4197, %v4204
        %v4207 = vunpack.c.l.s4 1934713408
        %v4208 = vunpack.c.0.s8 %v4207
        %v4209 = vlaneseq
        %v4210 = vshrl.u32 %v4209, 7
        %v4211 = vsub.s32 %v4208, %v4210
        %v4212 = vrot.slane %v4198, %v4211
        %v4213 = vcombine.low %v4157, %v4189
        %v4214 = vcombine.high %v4157, %v4189
        %v4215 = vcombine.low %v4164, %v4196
        %v4216 = vcombine.high %v4164, %v4196
        %v4217 = vcombine.low %v4173, %v4205
        %v4218 = vcombine.high %v4173, %v4205
        %v4219 = vcombine.low %v4180, %v4212
        %v4220 = vcombine.high %v4180, %v4212
        %v4221 = vcombine.low %v3805, %v3807
        %v4222 = vcombine.high %v3805, %v3807
        %v4224 = vunpack.c.l.s4 1983009808
        %v4225 = vunpack.c.0.s8 %v4224
        %v4226 = vlaneseq
        %v4227 = vshrl.u32 %v4226, 7
        %v4228 = vsub.s32 %v4225, %v4227
        %v4229 = vrot.slane %v4221, %v4228
        %v4231 = vunpack.c.l.s4 1983009808
        %v4232 = vunpack.c.0.s8 %v4231
        %v4233 = vlaneseq
        %v4234 = vshrl.u32 %v4233, 7
        %v4235 = vsub.s32 %v4232, %v4234
        %v4236 = vrot.slane %v4222, %v4235
        %v4237 = vcombine.low %v3806, %v3808
        %v4238 = vcombine.high %v3806, %v3808
        %v4240 = vunpack.c.l.s4 1983009808
        %v4241 = vunpack.c.0.s8 %v4240
        %v4242 = vlaneseq
        %v4243 = vshrl.u32 %v4242, 7
        %v4244 = vsub.s32 %v4241, %v4243
        %v4245 = vrot.slane %v4237, %v4244
        %v4247 = vunpack.c.l.s4 1983009808
        %v4248 = vunpack.c.0.s8 %v4247
        %v4249 = vlaneseq
        %v4250 = vshrl.u32 %v4249, 7
        %v4251 = vsub.s32 %v4248, %v4250
        %v4252 = vrot.slane %v4238, %v4251
        %v4253 = vcombine.low %v3809, %v3811
        %v4254 = vcombine.high %v3809, %v3811
        %v4256 = vunpack.c.l.s4 1983009808
        %v4257 = vunpack.c.0.s8 %v4256
        %v4258 = vlaneseq
        %v4259 = vshrl.u32 %v4258, 7
        %v4260 = vsub.s32 %v4257, %v4259
        %v4261 = vrot.slane %v4253, %v4260
        %v4263 = vunpack.c.l.s4 1983009808
        %v4264 = vunpack.c.0.s8 %v4263
        %v4265 = vlaneseq
        %v4266 = vshrl.u32 %v4265, 7
        %v4267 = vsub.s32 %v4264, %v4266
        %v4268 = vrot.slane %v4254, %v4267
        %v4269 = vcombine.low %v3810, %v3812
        %v4270 = vcombine.high %v3810, %v3812
        %v4272 = vunpack.c.l.s4 1983009808
        %v4273 = vunpack.c.0.s8 %v4272
        %v4274 = vlaneseq
        %v4275 = vshrl.u32 %v4274, 7
        %v4276 = vsub.s32 %v4273, %v4275
        %v4277 = vrot.slane %v4269, %v4276
        %v4279 = vunpack.c.l.s4 1983009808
        %v4280 = vunpack.c.0.s8 %v4279
        %v4281 = vlaneseq
        %v4282 = vshrl.u32 %v4281, 7
        %v4283 = vsub.s32 %v4280, %v4282
        %v4284 = vrot.slane %v4270, %v4283
        %v4285 = vcombine.low %v4229, %v4245
        %v4286 = vcombine.high %v4229, %v4245
        %v4288 = vunpack.c.l.s4 1934713408
        %v4289 = vunpack.c.0.s8 %v4288
        %v4290 = vlaneseq
        %v4291 = vshrl.u32 %v4290, 7
        %v4292 = vsub.s32 %v4289, %v4291
        %v4293 = vrot.slane %v4285, %v4292
        %v4295 = vunpack.c.l.s4 1934713408
        %v4296 = vunpack.c.0.s8 %v4295
        %v4297 = vlaneseq
        %v4298 = vshrl.u32 %v4297, 7
        %v4299 = vsub.s32 %v4296, %v4298
        %v4300 = vrot.slane %v4286, %v4299
        %v4301 = vcombine.low %v4236, %v4252
        %v4302 = vcombine.high %v4236, %v4252
        %v4304 = vunpack.c.l.s4 1934713408
        %v4305 = vunpack.c.0.s8 %v4304
        %v4306 = vlaneseq
        %v4307 = vshrl.u32 %v4306, 7
        %v4308 = vsub.s32 %v4305, %v4307
        %v4309 = vrot.slane %v4301, %v4308
        %v4311 = vunpack.c.l.s4 1934713408
        %v4312 = vunpack.c.0.s8 %v4311
        %v4313 = vlaneseq
        %v4314 = vshrl.u32 %v4313, 7
        %v4315 = vsub.s32 %v4312, %v4314
        %v4316 = vrot.slane %v4302, %v4315
        %v4317 = vcombine.low %v4261, %v4277
        %v4318 = vcombine.high %v4261, %v4277
        %v4320 = vunpack.c.l.s4 1934713408
        %v4321 = vunpack.c.0.s8 %v4320
        %v4322 = vlaneseq
        %v4323 = vshrl.u32 %v4322, 7
        %v4324 = vsub.s32 %v4321, %v4323
        %v4325 = vrot.slane %v4317, %v4324
        %v4327 = vunpack.c.l.s4 1934713408
        %v4328 = vunpack.c.0.s8 %v4327
        %v4329 = vlaneseq
        %v4330 = vshrl.u32 %v4329, 7
        %v4331 = vsub.s32 %v4328, %v4330
        %v4332 = vrot.slane %v4318, %v4331
        %v4333 = vcombine.low %v4268, %v4284
        %v4334 = vcombine.high %v4268, %v4284
        %v4336 = vunpack.c.l.s4 1934713408
        %v4337 = vunpack.c.0.s8 %v4336
        %v4338 = vlaneseq
        %v4339 = vshrl.u32 %v4338, 7
        %v4340 = vsub.s32 %v4337, %v4339
        %v4341 = vrot.slane %v4333, %v4340
        %v4343 = vunpack.c.l.s4 1934713408
        %v4344 = vunpack.c.0.s8 %v4343
        %v4345 = vlaneseq
        %v4346 = vshrl.u32 %v4345, 7
        %v4347 = vsub.s32 %v4344, %v4346
        %v4348 = vrot.slane %v4334, %v4347
        %v4349 = vcombine.low %v4293, %v4325
        %v4350 = vcombine.high %v4293, %v4325
        %v4351 = vcombine.low %v4300, %v4332
        %v4352 = vcombine.high %v4300, %v4332
        %v4353 = vcombine.low %v4309, %v4341
        %v4354 = vcombine.high %v4309, %v4341
        %v4355 = vcombine.low %v4316, %v4348
        %v4356 = vcombine.high %v4316, %v4348
        %4359 = vrot.lane.b32.xlu0 %v3942, 32
        %v4360 = vpop.permute.xlu0 %4359
        %4361 = vrot.lane.b32.xlu0 %v4078, 32
        %v4362 = vpop.permute.xlu0 %4361
        %4367 = vrot.lane.b32.xlu0 %v3943, 64
        %v4368 = vpop.permute.xlu0 %4367
        %4369 = vrot.lane.b32.xlu0 %v4079, 64
        %v4370 = vpop.permute.xlu0 %4369
        %4375 = vrot.lane.b32.xlu0 %v3944, 96
        %v4376 = vpop.permute.xlu0 %4375
        %4377 = vrot.lane.b32.xlu0 %v4080, 96
        %v4378 = vpop.permute.xlu0 %4377
        %4383 = vrot.lane.b32.xlu0 %v3946, 32
        %v4384 = vpop.permute.xlu0 %4383
        %4385 = vrot.lane.b32.xlu0 %v4082, 32
        %v4386 = vpop.permute.xlu0 %4385
        %4391 = vrot.lane.b32.xlu0 %v3947, 64
        %v4392 = vpop.permute.xlu0 %4391
        %4393 = vrot.lane.b32.xlu0 %v4083, 64
        %v4394 = vpop.permute.xlu0 %4393
        %4399 = vrot.lane.b32.xlu0 %v3948, 96
        %v4400 = vpop.permute.xlu0 %4399
        %4401 = vrot.lane.b32.xlu0 %v4084, 96
        %v4402 = vpop.permute.xlu0 %4401
        %4407 = vrot.lane.b32.xlu0 %v4214, 32
        %v4408 = vpop.permute.xlu0 %4407
        %4409 = vrot.lane.b32.xlu0 %v4350, 32
        %v4410 = vpop.permute.xlu0 %4409
        %4415 = vrot.lane.b32.xlu0 %v4215, 64
        %v4416 = vpop.permute.xlu0 %4415
        %4417 = vrot.lane.b32.xlu0 %v4351, 64
        %v4418 = vpop.permute.xlu0 %4417
        %4423 = vrot.lane.b32.xlu0 %v4216, 96
        %v4424 = vpop.permute.xlu0 %4423
        %4425 = vrot.lane.b32.xlu0 %v4352, 96
        %v4426 = vpop.permute.xlu0 %4425
        %4431 = vrot.lane.b32.xlu0 %v4218, 32
        %v4432 = vpop.permute.xlu0 %4431
        %4433 = vrot.lane.b32.xlu0 %v4354, 32
        %v4434 = vpop.permute.xlu0 %4433
        %4439 = vrot.lane.b32.xlu0 %v4219, 64
        %v4440 = vpop.permute.xlu0 %4439
        %4441 = vrot.lane.b32.xlu0 %v4355, 64
        %v4442 = vpop.permute.xlu0 %4441
        %4447 = vrot.lane.b32.xlu0 %v4220, 96
        %v4448 = vpop.permute.xlu0 %4447
        %4449 = vrot.lane.b32.xlu0 %v4356, 96
        %v4450 = vpop.permute.xlu0 %4449
        %v4453 = vsel %vm2371, %v3941, %v4360
        %v4454 = vsel %vm2371, %v4077, %v4362
        %v4455 = vsel %vm442, %v4453, %v4368
        %v4456 = vsel %vm442, %v4454, %v4370
        %vm4457 = vcmask 785408
        %v4458 = vsel %vm4457, %v4455, %v4376
        %v4459 = vsel %vm4457, %v4456, %v4378
        %v4460 = vsel %vm2371, %v3945, %v4384
        %v4461 = vsel %vm2371, %v4081, %v4386
        %v4462 = vsel %vm442, %v4460, %v4392
        %v4463 = vsel %vm442, %v4461, %v4394
        %v4464 = vsel %vm4457, %v4462, %v4400
        %v4465 = vsel %vm4457, %v4463, %v4402
        %v4466 = vsel %vm2371, %v4213, %v4408
        %v4467 = vsel %vm2371, %v4349, %v4410
        %v4468 = vsel %vm442, %v4466, %v4416
        %v4469 = vsel %vm442, %v4467, %v4418
        %v4470 = vsel %vm4457, %v4468, %v4424
        %v4471 = vsel %vm4457, %v4469, %v4426
        %v4472 = vsel %vm2371, %v4217, %v4432
        %v4473 = vsel %vm2371, %v4353, %v4434
        %v4474 = vsel %vm442, %v4472, %v4440
        %v4475 = vsel %vm442, %v4473, %v4442
        %v4476 = vsel %vm4457, %v4474, %v4448
        %v4477 = vsel %vm4457, %v4475, %v4450
        %v4478 = vld [vmem:[#allocation8] sm:$0xff]
        %v4479 = vld [vmem:[#allocation8 + $0x8] sm:$0xff]
        %v4480 = vld [vmem:[#allocation8 + $0x10] sm:$0xff]
        %v4481 = vld [vmem:[#allocation8 + $0x18] sm:$0xff]
        %v4482 = vld [vmem:[#allocation8 + $0x20] sm:$0xff]
        %v4483 = vld [vmem:[#allocation8 + $0x28] sm:$0xff]
        %v4484 = vld [vmem:[#allocation8 + $0x30] sm:$0xff]
        %v4485 = vld [vmem:[#allocation8 + $0x38] sm:$0xff]
        %v4486 = vld [vmem:[#allocation8 + $0x40] sm:$0xff]
        %v4487 = vld [vmem:[#allocation8 + $0x48] sm:$0xff]
        %v4488 = vld [vmem:[#allocation8 + $0x50] sm:$0xff]
        %v4489 = vld [vmem:[#allocation8 + $0x58] sm:$0xff]
        %v4490 = vld [vmem:[#allocation8 + $0x60] sm:$0xff]
        %v4491 = vld [vmem:[#allocation8 + $0x68] sm:$0xff]
        %v4492 = vld [vmem:[#allocation8 + $0x70] sm:$0xff]
        %v4493 = vld [vmem:[#allocation8 + $0x78] sm:$0xff]
        %v4510 = vunpack.c.l.b16 %v4478
        %v4511 = vunpack.c.h.b16 %v4478
        %v4512 = vunpack.c.l.b16 %v4479
        %v4513 = vunpack.c.h.b16 %v4479
        %v4514 = vunpack.c.l.b16 %v4480
        %v4515 = vunpack.c.h.b16 %v4480
        %v4516 = vunpack.c.l.b16 %v4481
        %v4517 = vunpack.c.h.b16 %v4481
        %v4518 = vunpack.c.l.b16 %v4482
        %v4519 = vunpack.c.h.b16 %v4482
        %v4520 = vunpack.c.l.b16 %v4483
        %v4521 = vunpack.c.h.b16 %v4483
        %v4522 = vunpack.c.l.b16 %v4484
        %v4523 = vunpack.c.h.b16 %v4484
        %v4524 = vunpack.c.l.b16 %v4485
        %v4525 = vunpack.c.h.b16 %v4485
        %v4526 = vunpack.c.l.b16 %v4486
        %v4527 = vunpack.c.h.b16 %v4486
        %v4528 = vunpack.c.l.b16 %v4487
        %v4529 = vunpack.c.h.b16 %v4487
        %v4530 = vunpack.c.l.b16 %v4488
        %v4531 = vunpack.c.h.b16 %v4488
        %v4532 = vunpack.c.l.b16 %v4489
        %v4533 = vunpack.c.h.b16 %v4489
        %v4534 = vunpack.c.l.b16 %v4490
        %v4535 = vunpack.c.h.b16 %v4490
        %v4536 = vunpack.c.l.b16 %v4491
        %v4537 = vunpack.c.h.b16 %v4491
        %v4538 = vunpack.c.l.b16 %v4492
        %v4539 = vunpack.c.h.b16 %v4492
        %v4540 = vunpack.c.l.b16 %v4493
        %v4541 = vunpack.c.h.b16 %v4493
        %v4542 = vpack.c.b16 %v4514, %v4510
        %v4543 = vpack.c.b16 %v4515, %v4511
        %v4544 = vpack.c.b16 %v4516, %v4512
        %v4545 = vpack.c.b16 %v4517, %v4513
        %v4546 = vpack.c.b16 %v4522, %v4518
        %v4547 = vpack.c.b16 %v4523, %v4519
        %v4548 = vpack.c.b16 %v4524, %v4520
        %v4549 = vpack.c.b16 %v4525, %v4521
        %v4550 = vpack.c.b16 %v4530, %v4526
        %v4551 = vpack.c.b16 %v4531, %v4527
        %v4552 = vpack.c.b16 %v4532, %v4528
        %v4553 = vpack.c.b16 %v4533, %v4529
        %v4554 = vpack.c.b16 %v4538, %v4534
        %v4555 = vpack.c.b16 %v4539, %v4535
        %v4556 = vpack.c.b16 %v4540, %v4536
        %v4557 = vpack.c.b16 %v4541, %v4537
        %4574 = vmatprep.subr.bf16.mxu0 %v4543
        %4575 = vmatpush1.bf16.msra.mxu0 %v4542
        %4576 = vmatprep.subr.bf16.mxu0 %v4547
        %4577 = vmatpush1.bf16.msra.mxu0 %v4546
        %4578 = vmatprep.subr.bf16.mxu0 %v4551
        %4579 = vmatpush1.bf16.msra.mxu0 %v4550
        %4580 = vmatprep.subr.bf16.mxu0 %v4555
        %4581 = vmatpush1.bf16.msra.mxu0 %v4554
        %4582 = vmatprep.subr.bf16.mxu0 0
        %4583 = vmatpush1.bf16.msra.mxu0 0
        %4584 = vmatprep.subr.bf16.mxu0 0
        %4585 = vmatpush1.bf16.msra.mxu0 0
        %4586 = vmatprep.subr.bf16.mxu0 0
        %4587 = vmatpush1.bf16.msra.mxu0 0
        %4588 = vmatprep.subr.bf16.mxu0 0
        %4589 = vmatpush1.bf16.msra.mxu0 0
        %4590 = vmatprep.subr.bf16.mxu0 0
        %4591 = vmatpush1.bf16.msra.mxu0 0
        %4592 = vmatprep.subr.bf16.mxu0 0
        %4593 = vmatpush1.bf16.msra.mxu0 0
        %4594 = vmatprep.subr.bf16.mxu0 0
        %4595 = vmatpush1.bf16.msra.mxu0 0
        %4596 = vmatprep.subr.bf16.mxu0 0
        %4597 = vmatpush1.bf16.msra.mxu0 0
        %4598 = vmatprep.subr.bf16.mxu0 0
        %4599 = vmatpush1.bf16.msra.mxu0 0
        %4600 = vmatprep.subr.bf16.mxu0 0
        %4601 = vmatpush1.bf16.msra.mxu0 0
        %4602 = vmatprep.subr.bf16.mxu0 0
        %4603 = vmatpush1.bf16.msra.mxu0 0
        %4604 = vmatprep.subr.bf16.mxu0 0
        %4605 = vmatpush1.bf16.msra.mxu0 0
        %4606 = vmatprep.mubr.bf16.mxu0 0
        %4607 = vmatmul.mubr.bf16.gmra.mrb[0].mxu0 %v444
        %v4608 = vpop.f32.mrb[0].mxu0
        %v4609 = vadd.f32 0.0, %v4608
        %v4610 = vpop.f32.mrb[0].mxu0
        %v4611 = vadd.f32 0.0, %v4610
        %v4612 = vpop.f32.mrb[0].mxu0
        %v4613 = vadd.f32 0.0, %v4612
        %v4614 = vpop.f32.mrb[0].mxu0
        %v4615 = vadd.f32 0.0, %v4614
        %4616 = vdwg.mxu0
        %4617 = vmatprep.subr.bf16.mxu0 %v4545
        %4618 = vmatpush1.bf16.msra.mxu0 %v4544
        %4619 = vmatprep.subr.bf16.mxu0 %v4549
        %4620 = vmatpush1.bf16.msra.mxu0 %v4548
        %4621 = vmatprep.subr.bf16.mxu0 %v4553
        %4622 = vmatpush1.bf16.msra.mxu0 %v4552
        %4623 = vmatprep.subr.bf16.mxu0 %v4557
        %4624 = vmatpush1.bf16.msra.mxu0 %v4556
        %4625 = vmatprep.subr.bf16.mxu0 0
        %4626 = vmatpush1.bf16.msra.mxu0 0
        %4627 = vmatprep.subr.bf16.mxu0 0
        %4628 = vmatpush1.bf16.msra.mxu0 0
        %4629 = vmatprep.subr.bf16.mxu0 0
        %4630 = vmatpush1.bf16.msra.mxu0 0
        %4631 = vmatprep.subr.bf16.mxu0 0
        %4632 = vmatpush1.bf16.msra.mxu0 0
        %4633 = vmatprep.subr.bf16.mxu0 0
        %4634 = vmatpush1.bf16.msra.mxu0 0
        %4635 = vmatprep.subr.bf16.mxu0 0
        %4636 = vmatpush1.bf16.msra.mxu0 0
        %4637 = vmatprep.subr.bf16.mxu0 0
        %4638 = vmatpush1.bf16.msra.mxu0 0
        %4639 = vmatprep.subr.bf16.mxu0 0
        %4640 = vmatpush1.bf16.msra.mxu0 0
        %4641 = vmatprep.subr.bf16.mxu0 0
        %4642 = vmatpush1.bf16.msra.mxu0 0
        %4643 = vmatprep.subr.bf16.mxu0 0
        %4644 = vmatpush1.bf16.msra.mxu0 0
        %4645 = vmatprep.subr.bf16.mxu0 0
        %4646 = vmatpush1.bf16.msra.mxu0 0
        %4647 = vmatprep.subr.bf16.mxu0 0
        %4648 = vmatpush1.bf16.msra.mxu0 0
        %4649 = vmatprep.mubr.bf16.mxu0 0
        %4650 = vmatmul.mubr.bf16.gmra.mrb[0].mxu0 %v444
        %v4651 = vpop.f32.mrb[0].mxu0
        %v4652 = vadd.f32 0.0, %v4651
        %v4653 = vpop.f32.mrb[0].mxu0
        %v4654 = vadd.f32 0.0, %v4653
        %v4655 = vpop.f32.mrb[0].mxu0
        %v4656 = vadd.f32 0.0, %v4655
        %v4657 = vpop.f32.mrb[0].mxu0
        %v4658 = vadd.f32 0.0, %v4657
        %4659 = vdwg.mxu0
        %v4660 = vadd.f32 %v4458, %v4609
        %v4661 = vadd.f32 %v4464, %v4611
        %v4662 = vadd.f32 %v4470, %v4652
        %v4663 = vadd.f32 %v4476, %v4654
        %v4664 = vadd.f32 %v4459, %v4613
        %v4665 = vadd.f32 %v4465, %v4615
        %v4666 = vadd.f32 %v4471, %v4656
        %v4667 = vadd.f32 %v4477, %v4658
        %v4668 = vld [vmem:[%s5] sm:$0xf]
        %v4670 = vlaneseq
        %v4671 = vshrl.u32 %v4670, 7
        %v4672 = vsub.s32 0, %v4671
        %v4673 = vrot.slane %v4668, %v4672
        %v4674 = vlaneseq
        %v4675 = vshrl.u32 %v4674, 7
        %v4676 = vsub.s32 1, %v4675
        %v4677 = vrot.slane %v4668, %v4676
        %v4678 = vlaneseq
        %v4679 = vshrl.u32 %v4678, 7
        %v4680 = vsub.s32 2, %v4679
        %v4681 = vrot.slane %v4668, %v4680
        %v4682 = vlaneseq
        %v4683 = vshrl.u32 %v4682, 7
        %v4684 = vsub.s32 3, %v4683
        %v4685 = vrot.slane %v4668, %v4684
        %v4690 = vadd.f32 %v4660, %v4673
        %v4691 = vadd.f32 %v4661, %v4677
        %v4692 = vadd.f32 %v4662, %v4681
        %v4693 = vadd.f32 %v4663, %v4685
        %v4694 = vadd.f32 %v4664, %v4673
        %v4695 = vadd.f32 %v4665, %v4677
        %v4696 = vadd.f32 %v4666, %v4681
        %v4697 = vadd.f32 %v4667, %v4685
        %v4698 = vmax.f32 %v4690, 0.0
        %v4699 = vmax.f32 %v4691, 0.0
        %v4700 = vmax.f32 %v4692, 0.0
        %v4701 = vmax.f32 %v4693, 0.0
        %v4702 = vmax.f32 %v4694, 0.0
        %v4703 = vmax.f32 %v4695, 0.0
        %v4704 = vmax.f32 %v4696, 0.0
        %v4705 = vmax.f32 %v4697, 0.0
        %4706 = vst [vmem:[%s313] sm:$0xff] %v4698
        %4707 = vst [vmem:[%s313 + $0x8] sm:$0xff] %v4699
        %4708 = vst [vmem:[%s313 + $0x10] sm:$0xff] %v4700
        %4709 = vst [vmem:[%s313 + $0x18] sm:$0xff] %v4701
        %4710 = vst [vmem:[%s313 + $0x20] sm:$0xff] %v4702
        %4711 = vst [vmem:[%s313 + $0x28] sm:$0xff] %v4703
        %4712 = vst [vmem:[%s313 + $0x30] sm:$0xff] %v4704
        %4713 = vst [vmem:[%s313 + $0x38] sm:$0xff] %v4705
        %s4714 = sand.u32 %s164, 1
        %s4715 = scalar_lea.sflag [#allocation4], %s4714
        %s4716 = sand.u32 %s164, 1
        %s4717 = smul.addr %s4716, 64
        %s4718 = scalar_lea.vmem [#allocation10], %s4717
        // Predicated region
        $region61: #{tpu_custom_call.1} parent=43 // pred_check
          %p4719 = pneg %p174
        $region62: #{tpu_custom_call.1} parent=43 // pred_check_branch
          %4721 = sbr.rel (%p4719) target = $region64
        $region63: #{tpu_custom_call.1} parent=43 // pred_region
          %s4722 = smul.u32 2, %s25
          %s4724 = ssub.s32 1024, 1024
          %4725 = vsyncadd %s4715, %s4724
          %s4726 = smul.addr %s4722, 4
          %s4727 = smul.addr %s4726, 128
          %s4728 = scalar_lea.hbm %s6, %s4727
          %s4729 = sshll.u32 %s4718, 4
          %s4730 = int_to_ptr.vmem [resolvable:$true] %s4729
          %4735 = dma.vmem_to_hbm [thread:$0]  %s4730, 1024, %s4728, %s4715, 512, 512, 32
        $region64: #{tpu_custom_call.1} parent=43 // pred_fallthru
          _
      $region44: #{tpu_custom_call.1} parent=5 // pred_fallthru
        _
      %p4736 = scmp.le.s32.totalorder 2, %s20
      // Predicated region
      $region65: #{tpu_custom_call.1} parent=5 // pred_check
        %p4737 = pneg %p4736
      $region66: #{tpu_custom_call.1} parent=5 // pred_check_branch
        %4739 = sbr.rel (%p4737) target = $region68
      $region67: #{tpu_custom_call.1} parent=5 // pred_region
        %s4740 = ssub.s32 %s20, 2
        // Predicated region
        $region69: #{tpu_custom_call.1} parent=67 // pred_check
          %p4741 = pneg %p180
        $region70: #{tpu_custom_call.1} parent=67 // pred_check_branch
          %4743 = sbr.rel (%p4741) target = $region72
        $region71: #{tpu_custom_call.1} parent=67 // pred_region
          %s4744 = sand.u32 %s165, 1
          %s4745 = scalar_lea.sflag [#allocation4], %s4744
          %s4746 = sand.u32 %s165, 1
          %s4747 = smul.addr %s4746, 64
          %s4748 = scalar_lea.vmem [#allocation10], %s4747
          %4749 = dma.done %s4745, 1024
        $region72: #{tpu_custom_call.1} parent=67 // pred_fallthru
          _
      $region68: #{tpu_custom_call.1} parent=5 // pred_fallthru
        _
    $region6: #{tpu_custom_call.1} parent=1 // loop_footer
      %s24 = sadd.s32 1, %s20
    $region7: #{tpu_custom_call.1} parent=1 // loop_footer_branch
      %19 = sbr.rel target = $region3
    $region8: #{tpu_custom_call.1} parent=1 // loop_exit
      _
    %4750 = vsyncpa [#allocation3], 1
    %s4751 = scalar_lea.sflag [#allocation3], 1
    %4752 = vsyncpa %s4751, 1
    %4753 = vsyncpa [#allocation6], 1
    %4754 = vsyncpa [#allocation9], 1
    %4755 = vsyncpa [#allocation4], 1
    %s4756 = scalar_lea.sflag [#allocation4], 1
    %4757 = vsyncpa %s4756, 1

</llo_original>
